<compile_context>
chip_gen: v6e
topology: v6e:2x2x1
jax: 0.10.0
libtpu: 0.0.40
codegen_flags: <defaults>
</compile_context>

<pallas_src>
import jax
import jax.numpy as jnp
from jax import lax
from jax.experimental import pallas as pl
from jax.experimental.pallas import tpu as pltpu


def mlp_kernel(x_ref, w1_ref, b1_ref, w2_ref, b2_ref,
               w3_ref, b3_ref, w4_ref, b4_ref, ot_ref):
    """Activations are kept feature-major [features, tb] (batch on lanes)."""
    # Layer 1: contract Din of both operands on the MXU:
    #   W1[1024, Din] x X[tb, Din] -> [1024, tb], f32 accumulation.
    h = lax.dot_general(w1_ref[...], x_ref[...],
                        dimension_numbers=(((1,), (1,)), ((), ())),
                        preferred_element_type=jnp.float32)
    # Bias-add + ReLU with the bf16 downcast fused in (halves spill traffic).
    h = jnp.maximum(h + b1_ref[...], 0.0).astype(jnp.bfloat16)
    # (dropout1: identity in eval mode)

    # Layer 2: [512, 1024] @ [1024, tb]
    h = jnp.dot(w2_ref[...], h, preferred_element_type=jnp.float32)
    h = jnp.maximum(h + b2_ref[...], 0.0).astype(jnp.bfloat16)
    # (dropout2: identity in eval mode)

    # Layer 3: [256, 512] @ [512, tb]
    h = jnp.dot(w3_ref[...], h, preferred_element_type=jnp.float32)
    h = jnp.maximum(h + b3_ref[...], 0.0)          # keep f32 for the reduce
    # (dropout3: identity in eval mode)

    # Layer 4 (256 -> 1): w4 is a [256, 1] column; VPU multiply + sublane
    # (XLU) reduce instead of an N=1 MXU pass. Result is a lane-dense [1, tb]
    # slab -> unmasked store.
    out = jnp.sum(h * w4_ref[...].astype(jnp.float32), axis=0, keepdims=True)
    ot_ref[...] = (out + b4_ref[...]).astype(ot_ref.dtype)


def _resident_spec(a):
    """Grid-invariant block: constant index_map + single buffering (the
    pipeline never re-fetches it, so double-buffering only wastes VMEM)."""
    return pl.BlockSpec(a.shape, lambda i: (0, 0), pipeline_mode=pl.Buffered(1))


def _estimate_vmem_bytes(din, tb):
    """Rough resident-VMEM estimate (lane/sublane padding included)."""
    w_bytes = 2 * (1024 * din + 1024 * 512 + 512 * 256 + 256)        # bf16, 1 buf
    b_bytes = 4 * 128 * (1024 + 512 + 256 + 8)                        # f32 cols, lane-padded
    x_bytes = 2 * 2 * tb * max(din, 128)                              # bf16 x tile, 2 bufs
    o_bytes = 2 * 4 * 8 * tb                                          # f32 out tile, 2 bufs
    act_bytes = tb * (1024 * (4 + 2) + 512 * (4 + 2) + 256 * 8)       # intermediates
    return w_bytes + b_bytes + x_bytes + o_bytes + act_bytes


def net1_forward(x, params, *, tb=None):
    """x: [B, D_in] f32; params in PyTorch layout (W: [out, in], b: [out]).

    Returns [B] float32 (PyTorch `.squeeze()` of the [B, 1] result)."""
    w1, b1, w2, b2, w3, b3, w4, b4 = params
    B, Din = x.shape

    # Lane-dense batch tile. 128 is a good default on v5e/v7x (and correct on
    # v6e); pass tb=256 on v6e to fill its 256-wide MXU N dimension.
    if tb is None:
        tb = 128
    tb = max(128, (tb // 128) * 128)

    # Pad batch to a multiple of tb (handles B < 128 and ragged batches);
    # padded rows are zeros and are sliced off below.
    Bp = ((B + tb - 1) // tb) * tb
    x_p = jnp.pad(x, ((0, Bp - B), (0, 0))) if Bp != B else x
    x_p = x_p.astype(jnp.bfloat16)            # bf16 in, f32 MXU accumulation

    # Weights in bf16, PyTorch [out, in] layout; w4 as a [256, 1] column for
    # the layer-4 sublane reduce. Biases as f32 [out, 1] columns (tiny; kept
    # single-buffered instead of lane-major to stay simple).
    w1b = w1.astype(jnp.bfloat16)
    w2b = w2.astype(jnp.bfloat16)
    w3b = w3.astype(jnp.bfloat16)
    w4c = w4.T.astype(jnp.bfloat16)                     # [256, 1]
    b1c = b1.reshape(-1, 1).astype(jnp.float32)         # [1024, 1]
    b2c = b2.reshape(-1, 1).astype(jnp.float32)         # [512, 1]
    b3c = b3.reshape(-1, 1).astype(jnp.float32)         # [256, 1]
    b4c = b4.reshape(-1, 1).astype(jnp.float32)         # [1, 1]

    # Raise the scoped VMEM limit only when large Din would exceed the
    # smallest default (16 MiB on v5e); cap at v7x's 64 MiB physical VMEM.
    est = _estimate_vmem_bytes(Din, tb)
    vmem_limit = None
    if est > (16 << 20):
        vmem_limit = int(min(64 << 20, est + est // 2))

    flops = 2 * Bp * (Din * 1024 + 1024 * 512 + 512 * 256 + 256)
    bytes_accessed = (2 * (w1b.size + w2b.size + w3b.size + w4c.size)
                      + 4 * (b1c.size + b2c.size + b3c.size + b4c.size)
                      + 2 * x_p.size + 4 * Bp)

    out_t = pl.pallas_call(
        mlp_kernel,
        out_shape=jax.ShapeDtypeStruct((1, Bp), jnp.float32),
        grid_spec=pltpu.PrefetchScalarGridSpec(
            num_scalar_prefetch=0,
            grid=(Bp // tb,),
            in_specs=[
                pl.BlockSpec((tb, Din), lambda i: (i, 0)),   # x batch tile
                _resident_spec(w1b), _resident_spec(b1c),
                _resident_spec(w2b), _resident_spec(b2c),
                _resident_spec(w3b), _resident_spec(b3c),
                _resident_spec(w4c), _resident_spec(b4c),
            ],
            out_specs=pl.BlockSpec((1, tb), lambda i: (0, i)),  # lane-dense
        ),
        compiler_params=pltpu.CompilerParams(
            # batch tiles are independent -> megacore split on v7x.
            dimension_semantics=("parallel",),
            vmem_limit_bytes=vmem_limit),
        cost_estimate=pl.CostEstimate(flops=flops, transcendentals=0,
                                      bytes_accessed=int(bytes_accessed)),
    )(x_p, w1b, b1c, w2b, b2c, w3b, b3c, w4c, b4c)

    return jnp.squeeze(out_t, axis=0)[:B]


def init_params(key, x_shape):
    """nn.Linear-style init: U(-1/sqrt(fan_in), 1/sqrt(fan_in)), W: [out, in]."""
    dims = [(x_shape, 1024), (1024, 512), (512, 256), (256, 1)]
    params = []
    for fan_in, fan_out in dims:
        key, kw, kb = jax.random.split(key, 3)
        bound = 1.0 / jnp.sqrt(fan_in)
        w = jax.random.uniform(kw, (fan_out, fan_in), jnp.float32,
                               minval=-bound, maxval=bound)
        b = jax.random.uniform(kb, (fan_out,), jnp.float32,
                               minval=-bound, maxval=bound)
        params += [w, b]
    return tuple(params)


def reference_forward(x, params):
    """Pure-JAX f32 reference with PyTorch Net_1 eval() semantics."""
    w1, b1, w2, b2, w3, b3, w4, b4 = params
    h = jnp.maximum(x @ w1.T + b1, 0.0)
    h = jnp.maximum(h @ w2.T + b2, 0.0)
    h = jnp.maximum(h @ w3.T + b3, 0.0)
    return jnp.squeeze(h @ w4.T + b4, axis=-1)


if __name__ == "__main__":
    key = jax.random.PRNGKey(0)
    B, D_IN = 16, 32  # small shapes consistent with Net_1(x_shape=32)

    key, kx = jax.random.split(key)
    x = jax.random.normal(kx, (B, D_IN), jnp.float32)
    params = init_params(key, D_IN)

    out = jax.block_until_ready(net1_forward(x, params))
    ref = reference_forward(x, params)

    assert out.shape == (B,), out.shape
    # bf16 weights/activations with f32 accumulation -> loosened tolerance.
    max_err = float(jnp.max(jnp.abs(out - ref)))
    assert jnp.allclose(out, ref, atol=2e-2, rtol=2e-2), max_err

    print("KERNEL_OK")
</pallas_src>

<mosaic_0001>
module attributes {stable_mosaic.version = 11 : i64} {
  func.func @mlp_kernel(%arg0: i32, %arg1: memref<128x32xbf16, #tpu.memory_space<vmem>>, %arg2: memref<1024x32xbf16, #tpu.memory_space<vmem>>, %arg3: memref<1024x1xf32, #tpu.memory_space<vmem>>, %arg4: memref<512x1024xbf16, #tpu.memory_space<vmem>>, %arg5: memref<512x1xf32, #tpu.memory_space<vmem>>, %arg6: memref<256x512xbf16, #tpu.memory_space<vmem>>, %arg7: memref<256x1xf32, #tpu.memory_space<vmem>>, %arg8: memref<256x1xbf16, #tpu.memory_space<vmem>>, %arg9: memref<1x1xf32, #tpu.memory_space<vmem>>, %arg10: memref<1x128xf32, #tpu.memory_space<vmem>>) attributes {dimension_semantics = [#tpu.dimension_semantics<parallel>], iteration_bounds = array<i64: 1>, scalar_prefetch = 0 : i64, scratch_operands = 0 : i64, tpu.core_type = #tpu.core_type<tc>, window_params = [{transform_indices = @transform_0, window_bounds = array<i64: 128, 32>}, {pipeline_mode = #tpu.pipeline_mode<synchronous>, transform_indices = @transform_1, window_bounds = array<i64: 1024, 32>}, {pipeline_mode = #tpu.pipeline_mode<synchronous>, transform_indices = @transform_2, window_bounds = array<i64: 1024, 1>}, {pipeline_mode = #tpu.pipeline_mode<synchronous>, transform_indices = @transform_3, window_bounds = array<i64: 512, 1024>}, {pipeline_mode = #tpu.pipeline_mode<synchronous>, transform_indices = @transform_4, window_bounds = array<i64: 512, 1>}, {pipeline_mode = #tpu.pipeline_mode<synchronous>, transform_indices = @transform_5, window_bounds = array<i64: 256, 512>}, {pipeline_mode = #tpu.pipeline_mode<synchronous>, transform_indices = @transform_6, window_bounds = array<i64: 256, 1>}, {pipeline_mode = #tpu.pipeline_mode<synchronous>, transform_indices = @transform_7, window_bounds = array<i64: 256, 1>}, {pipeline_mode = #tpu.pipeline_mode<synchronous>, transform_indices = @transform_8, window_bounds = array<i64: 1, 1>}, {transform_indices = @transform_9, window_bounds = array<i64: 1, 128>}]} {
    %c0 = arith.constant 0 : index
    %c0_0 = arith.constant 0 : index
    %0 = vector.load %arg2[%c0, %c0_0] : memref<1024x32xbf16, #tpu.memory_space<vmem>>, vector<1024x32xbf16>
    %c0_1 = arith.constant 0 : index
    %c0_2 = arith.constant 0 : index
    %1 = vector.load %arg1[%c0_1, %c0_2] : memref<128x32xbf16, #tpu.memory_space<vmem>>, vector<128x32xbf16>
    %cst = arith.constant dense<0.000000e+00> : vector<1024x128xf32>
    %2 = tpu.matmul %0, %1, %cst {dimension_numbers = #tpu.dot_dimension_numbers<[1], [1], [0], [0], [0, 0, 1, 0], [], []>} : vector<1024x32xbf16>, vector<128x32xbf16>, vector<1024x128xf32> -> vector<1024x128xf32>
    %c0_3 = arith.constant 0 : index
    %c0_4 = arith.constant 0 : index
    %3 = vector.load %arg3[%c0_3, %c0_4] : memref<1024x1xf32, #tpu.memory_space<vmem>>, vector<1024x1xf32>
    %4 = vector.broadcast %3 : vector<1024x1xf32> to vector<1024x128xf32>
    %5 = arith.addf %2, %4 : vector<1024x128xf32>
    %cst_5 = arith.constant 0.000000e+00 : f32
    %6 = vector.broadcast %cst_5 : f32 to vector<1024x128xf32>
    %7 = arith.maximumf %5, %6 : vector<1024x128xf32>
    %8 = arith.truncf %7 : vector<1024x128xf32> to vector<1024x128xbf16>
    %c0_6 = arith.constant 0 : index
    %c0_7 = arith.constant 0 : index
    %9 = vector.load %arg4[%c0_6, %c0_7] : memref<512x1024xbf16, #tpu.memory_space<vmem>>, vector<512x1024xbf16>
    %cst_8 = arith.constant dense<0.000000e+00> : vector<512x128xf32>
    %10 = tpu.matmul %9, %8, %cst_8 {dimension_numbers = #tpu.dot_dimension_numbers<[1], [0], [0], [1], [0, 0, 1, 1], [], []>} : vector<512x1024xbf16>, vector<1024x128xbf16>, vector<512x128xf32> -> vector<512x128xf32>
    %c0_9 = arith.constant 0 : index
    %c0_10 = arith.constant 0 : index
    %11 = vector.load %arg5[%c0_9, %c0_10] : memref<512x1xf32, #tpu.memory_space<vmem>>, vector<512x1xf32>
    %12 = vector.broadcast %11 : vector<512x1xf32> to vector<512x128xf32>
    %13 = arith.addf %10, %12 : vector<512x128xf32>
    %cst_11 = arith.constant 0.000000e+00 : f32
    %14 = vector.broadcast %cst_11 : f32 to vector<512x128xf32>
    %15 = arith.maximumf %13, %14 : vector<512x128xf32>
    %16 = arith.truncf %15 : vector<512x128xf32> to vector<512x128xbf16>
    %c0_12 = arith.constant 0 : index
    %c0_13 = arith.constant 0 : index
    %17 = vector.load %arg6[%c0_12, %c0_13] : memref<256x512xbf16, #tpu.memory_space<vmem>>, vector<256x512xbf16>
    %cst_14 = arith.constant dense<0.000000e+00> : vector<256x128xf32>
    %18 = tpu.matmul %17, %16, %cst_14 {dimension_numbers = #tpu.dot_dimension_numbers<[1], [0], [0], [1], [0, 0, 1, 1], [], []>} : vector<256x512xbf16>, vector<512x128xbf16>, vector<256x128xf32> -> vector<256x128xf32>
    %c0_15 = arith.constant 0 : index
    %c0_16 = arith.constant 0 : index
    %19 = vector.load %arg7[%c0_15, %c0_16] : memref<256x1xf32, #tpu.memory_space<vmem>>, vector<256x1xf32>
    %20 = vector.broadcast %19 : vector<256x1xf32> to vector<256x128xf32>
    %21 = arith.addf %18, %20 : vector<256x128xf32>
    %cst_17 = arith.constant 0.000000e+00 : f32
    %22 = vector.broadcast %cst_17 : f32 to vector<256x128xf32>
    %23 = arith.maximumf %21, %22 : vector<256x128xf32>
    %c0_18 = arith.constant 0 : index
    %c0_19 = arith.constant 0 : index
    %24 = vector.load %arg8[%c0_18, %c0_19] : memref<256x1xbf16, #tpu.memory_space<vmem>>, vector<256x1xbf16>
    %25 = arith.extf %24 : vector<256x1xbf16> to vector<256x1xf32>
    %26 = vector.broadcast %25 : vector<256x1xf32> to vector<256x128xf32>
    %27 = arith.mulf %23, %26 : vector<256x128xf32>
    %cst_20 = arith.constant dense<0.000000e+00> : vector<128xf32>
    %28 = vector.multi_reduction <add>, %27, %cst_20 [0] : vector<256x128xf32> to vector<128xf32>
    %29 = vector.shape_cast %28 : vector<128xf32> to vector<1x128xf32>
    %c0_21 = arith.constant 0 : index
    %c0_22 = arith.constant 0 : index
    %30 = vector.load %arg9[%c0_21, %c0_22] : memref<1x1xf32, #tpu.memory_space<vmem>>, vector<1x1xf32>
    %31 = vector.broadcast %30 : vector<1x1xf32> to vector<1x128xf32>
    %32 = arith.addf %29, %31 : vector<1x128xf32>
    %c0_23 = arith.constant 0 : index
    %c0_24 = arith.constant 0 : index
    %33 = vector.load %arg10[%c0_23, %c0_24] : memref<1x128xf32, #tpu.memory_space<vmem>>, vector<1x128xf32>
    tpu.vector_store %arg10[%c0_23, %c0_24], %32 {strides = array<i32>} : memref<1x128xf32, #tpu.memory_space<vmem>>, vector<1x128xf32>,
    return
  }
  func.func @transform_0(%arg0: i32) -> (i32, i32) {
    %c0_i32 = arith.constant 0 : i32
    %c0_i32_0 = arith.constant 0 : i32
    return %arg0, %c0_i32 : i32, i32
  }
  func.func @transform_1(%arg0: i32) -> (i32, i32) {
    %c0_i32 = arith.constant 0 : i32
    %c0_i32_0 = arith.constant 0 : i32
    %c0_i32_1 = arith.constant 0 : i32
    return %c0_i32, %c0_i32_0 : i32, i32
  }
  func.func @transform_2(%arg0: i32) -> (i32, i32) {
    %c0_i32 = arith.constant 0 : i32
    %c0_i32_0 = arith.constant 0 : i32
    %c0_i32_1 = arith.constant 0 : i32
    return %c0_i32, %c0_i32_0 : i32, i32
  }
  func.func @transform_3(%arg0: i32) -> (i32, i32) {
    %c0_i32 = arith.constant 0 : i32
    %c0_i32_0 = arith.constant 0 : i32
    %c0_i32_1 = arith.constant 0 : i32
    return %c0_i32, %c0_i32_0 : i32, i32
  }
  func.func @transform_4(%arg0: i32) -> (i32, i32) {
    %c0_i32 = arith.constant 0 : i32
    %c0_i32_0 = arith.constant 0 : i32
    %c0_i32_1 = arith.constant 0 : i32
    return %c0_i32, %c0_i32_0 : i32, i32
  }
  func.func @transform_5(%arg0: i32) -> (i32, i32) {
    %c0_i32 = arith.constant 0 : i32
    %c0_i32_0 = arith.constant 0 : i32
    %c0_i32_1 = arith.constant 0 : i32
    return %c0_i32, %c0_i32_0 : i32, i32
  }
  func.func @transform_6(%arg0: i32) -> (i32, i32) {
    %c0_i32 = arith.constant 0 : i32
    %c0_i32_0 = arith.constant 0 : i32
    %c0_i32_1 = arith.constant 0 : i32
    return %c0_i32, %c0_i32_0 : i32, i32
  }
  func.func @transform_7(%arg0: i32) -> (i32, i32) {
    %c0_i32 = arith.constant 0 : i32
    %c0_i32_0 = arith.constant 0 : i32
    %c0_i32_1 = arith.constant 0 : i32
    return %c0_i32, %c0_i32_0 : i32, i32
  }
  func.func @transform_8(%arg0: i32) -> (i32, i32) {
    %c0_i32 = arith.constant 0 : i32
    %c0_i32_0 = arith.constant 0 : i32
    %c0_i32_1 = arith.constant 0 : i32
    return %c0_i32, %c0_i32_0 : i32, i32
  }
  func.func @transform_9(%arg0: i32) -> (i32, i32) {
    %c0_i32 = arith.constant 0 : i32
    %c0_i32_0 = arith.constant 0 : i32
    return %c0_i32, %arg0 : i32, i32
  }
}

</mosaic_0001>

<llo_original>
// kernel: tpu_custom_call.1
$region0: #{tpu_custom_call.1}
  #allocation0 [shape = 'u32[]', space=smem, size = 0x4, offset = 0x4, fixed_abs, tag = 'smem constant byte address 0x4 - core index']
  #allocation1 [shape = 'u32[144,128]{1,0:T(1,128)}', space=vmem, size = 0x12000, scoped, tag = 'internal scratch']
  #allocation2 [shape = 'f32[1,1]{1,0:T(1,128)S(1)}', space=vmem, size = 0x200, scoped, tag = 'scoped memory for tpu_custom_call.1']
  %s0 = inlined_call_operand.vmem [shape: bf16[128,32], index: 0, kind: input, shape index: {}]
  %s1 = inlined_call_operand.vmem [shape: bf16[1024,32], index: 1, kind: input, shape index: {}]
  %s2 = inlined_call_operand.vmem [shape: f32[1024,1], index: 2, kind: input, shape index: {}]
  %s3 = inlined_call_operand.vmem [shape: bf16[512,1024], index: 3, kind: input, shape index: {}]
  %s4 = inlined_call_operand.vmem [shape: f32[512,1], index: 4, kind: input, shape index: {}]
  %s5 = inlined_call_operand.vmem [shape: bf16[256,512], index: 5, kind: input, shape index: {}]
  %s6 = inlined_call_operand.vmem [shape: f32[256,1], index: 6, kind: input, shape index: {}]
  %s7 = inlined_call_operand.vmem [shape: bf16[256,1], index: 7, kind: input, shape index: {}]
  %s8 = inlined_call_operand.<no memory space> [shape: f32[1,1], index: 8, kind: input, shape index: {}]
  %s9 = inlined_call_operand.hbm [shape: f32[1,128], index: 9, kind: output, shape index: {}]
  %s10 = sld [smem:[#allocation0]]
  $region46: #{tpu_custom_call.1} parent=0
    _
  %s12 = ssub.s32 1, %s10
  %s13 = scalar_select 0, %s12, %s10
  %v14 = vstv %s8
  %15 = vst [vmem:[#allocation2] sm:$0x1] %v14
  $region1: #{tpu_custom_call.1} parent=0
    #allocation3 [shape = 'u8[512]{0}', space=vmem, size = 0x400, scoped, tag = 'output window, operand 0, single buffered']
    #allocation4 [shape = 's32[1]{0}', space=sflag, size = 0x4, scoped, tag = 'scoped memory for tpu_custom_call.1']
    %16 = vsyncpa [#allocation4], 0
    // Predicated region
    $region2: #{tpu_custom_call.1} parent=1 // pred_check
      _
    $region3: #{tpu_custom_call.1} parent=1 // pred_check_branch
      %18 = sbr.rel (0) target = $region5
    $region4: #{tpu_custom_call.1} parent=1 // pred_region
      _
    $region5: #{tpu_custom_call.1} parent=1 // pred_fallthru
      _
    // Predicated region
    $region6: #{tpu_custom_call.1} parent=1 // pred_check
      _
    $region7: #{tpu_custom_call.1} parent=1 // pred_check_branch
      %20 = sbr.rel (0) target = $region9
    $region8: #{tpu_custom_call.1} parent=1 // pred_region
      _
    $region9: #{tpu_custom_call.1} parent=1 // pred_fallthru
      _
    // Predicated region
    $region10: #{tpu_custom_call.1} parent=1 // pred_check
      _
    $region11: #{tpu_custom_call.1} parent=1 // pred_check_branch
      %22 = sbr.rel (0) target = $region13
    $region12: #{tpu_custom_call.1} parent=1 // pred_region
      _
    $region13: #{tpu_custom_call.1} parent=1 // pred_fallthru
      _
    // Predicated region
    $region14: #{tpu_custom_call.1} parent=1 // pred_check
      _
    $region15: #{tpu_custom_call.1} parent=1 // pred_check_branch
      %24 = sbr.rel (0) target = $region17
    $region16: #{tpu_custom_call.1} parent=1 // pred_region
      _
    $region17: #{tpu_custom_call.1} parent=1 // pred_fallthru
      _
    // Predicated region
    $region18: #{tpu_custom_call.1} parent=1 // pred_check
      _
    $region19: #{tpu_custom_call.1} parent=1 // pred_check_branch
      %26 = sbr.rel (0) target = $region21
    $region20: #{tpu_custom_call.1} parent=1 // pred_region
      _
    $region21: #{tpu_custom_call.1} parent=1 // pred_fallthru
      _
    // Predicated region
    $region22: #{tpu_custom_call.1} parent=1 // pred_check
      _
    $region23: #{tpu_custom_call.1} parent=1 // pred_check_branch
      %28 = sbr.rel (0) target = $region25
    $region24: #{tpu_custom_call.1} parent=1 // pred_region
      _
    $region25: #{tpu_custom_call.1} parent=1 // pred_fallthru
      _
    // Predicated region
    $region26: #{tpu_custom_call.1} parent=1 // pred_check
      _
    $region27: #{tpu_custom_call.1} parent=1 // pred_check_branch
      %30 = sbr.rel (0) target = $region29
    $region28: #{tpu_custom_call.1} parent=1 // pred_region
      _
    $region29: #{tpu_custom_call.1} parent=1 // pred_fallthru
      _
    // Predicated region
    $region30: #{tpu_custom_call.1} parent=1 // pred_check
      _
    $region31: #{tpu_custom_call.1} parent=1 // pred_check_branch
      %32 = sbr.rel (0) target = $region33
    $region32: #{tpu_custom_call.1} parent=1 // pred_region
      _
    $region33: #{tpu_custom_call.1} parent=1 // pred_fallthru
      _
    // Predicated region
    $region34: #{tpu_custom_call.1} parent=1 // pred_check
      _
    $region35: #{tpu_custom_call.1} parent=1 // pred_check_branch
      %34 = sbr.rel (0) target = $region37
    $region36: #{tpu_custom_call.1} parent=1 // pred_region
      _
    $region37: #{tpu_custom_call.1} parent=1 // pred_fallthru
      _
    %v36 = vld [vmem:[%s1] sm:$0xf]
    %v37 = vld [vmem:[%s1 + $0x4] sm:$0xf]
    %v38 = vld [vmem:[%s1 + $0x8] sm:$0xf]
    %v39 = vld [vmem:[%s1 + $0xc] sm:$0xf]
    %v40 = vld [vmem:[%s1 + $0x10] sm:$0xf]
    %v41 = vld [vmem:[%s1 + $0x14] sm:$0xf]
    %v42 = vld [vmem:[%s1 + $0x18] sm:$0xf]
    %v43 = vld [vmem:[%s1 + $0x1c] sm:$0xf]
    %v44 = vld [vmem:[%s1 + $0x20] sm:$0xf]
    %v45 = vld [vmem:[%s1 + $0x24] sm:$0xf]
    %v46 = vld [vmem:[%s1 + $0x28] sm:$0xf]
    %v47 = vld [vmem:[%s1 + $0x2c] sm:$0xf]
    %v48 = vld [vmem:[%s1 + $0x30] sm:$0xf]
    %v49 = vld [vmem:[%s1 + $0x34] sm:$0xf]
    %v50 = vld [vmem:[%s1 + $0x38] sm:$0xf]
    %v51 = vld [vmem:[%s1 + $0x3c] sm:$0xf]
    %v52 = vld [vmem:[%s1 + $0x40] sm:$0xf]
    %v53 = vld [vmem:[%s1 + $0x44] sm:$0xf]
    %v54 = vld [vmem:[%s1 + $0x48] sm:$0xf]
    %v55 = vld [vmem:[%s1 + $0x4c] sm:$0xf]
    %v56 = vld [vmem:[%s1 + $0x50] sm:$0xf]
    %v57 = vld [vmem:[%s1 + $0x54] sm:$0xf]
    %v58 = vld [vmem:[%s1 + $0x58] sm:$0xf]
    %v59 = vld [vmem:[%s1 + $0x5c] sm:$0xf]
    %v60 = vld [vmem:[%s1 + $0x60] sm:$0xf]
    %v61 = vld [vmem:[%s1 + $0x64] sm:$0xf]
    %v62 = vld [vmem:[%s1 + $0x68] sm:$0xf]
    %v63 = vld [vmem:[%s1 + $0x6c] sm:$0xf]
    %v64 = vld [vmem:[%s1 + $0x70] sm:$0xf]
    %v65 = vld [vmem:[%s1 + $0x74] sm:$0xf]
    %v66 = vld [vmem:[%s1 + $0x78] sm:$0xf]
    %v67 = vld [vmem:[%s1 + $0x7c] sm:$0xf]
    %v68 = vld [vmem:[%s1 + $0x80] sm:$0xf]
    %v69 = vld [vmem:[%s1 + $0x84] sm:$0xf]
    %v70 = vld [vmem:[%s1 + $0x88] sm:$0xf]
    %v71 = vld [vmem:[%s1 + $0x8c] sm:$0xf]
    %v72 = vld [vmem:[%s1 + $0x90] sm:$0xf]
    %v73 = vld [vmem:[%s1 + $0x94] sm:$0xf]
    %v74 = vld [vmem:[%s1 + $0x98] sm:$0xf]
    %v75 = vld [vmem:[%s1 + $0x9c] sm:$0xf]
    %v76 = vld [vmem:[%s1 + $0xa0] sm:$0xf]
    %v77 = vld [vmem:[%s1 + $0xa4] sm:$0xf]
    %v78 = vld [vmem:[%s1 + $0xa8] sm:$0xf]
    %v79 = vld [vmem:[%s1 + $0xac] sm:$0xf]
    %v80 = vld [vmem:[%s1 + $0xb0] sm:$0xf]
    %v81 = vld [vmem:[%s1 + $0xb4] sm:$0xf]
    %v82 = vld [vmem:[%s1 + $0xb8] sm:$0xf]
    %v83 = vld [vmem:[%s1 + $0xbc] sm:$0xf]
    %v84 = vld [vmem:[%s1 + $0xc0] sm:$0xf]
    %v85 = vld [vmem:[%s1 + $0xc4] sm:$0xf]
    %v86 = vld [vmem:[%s1 + $0xc8] sm:$0xf]
    %v87 = vld [vmem:[%s1 + $0xcc] sm:$0xf]
    %v88 = vld [vmem:[%s1 + $0xd0] sm:$0xf]
    %v89 = vld [vmem:[%s1 + $0xd4] sm:$0xf]
    %v90 = vld [vmem:[%s1 + $0xd8] sm:$0xf]
    %v91 = vld [vmem:[%s1 + $0xdc] sm:$0xf]
    %v92 = vld [vmem:[%s1 + $0xe0] sm:$0xf]
    %v93 = vld [vmem:[%s1 + $0xe4] sm:$0xf]
    %v94 = vld [vmem:[%s1 + $0xe8] sm:$0xf]
    %v95 = vld [vmem:[%s1 + $0xec] sm:$0xf]
    %v96 = vld [vmem:[%s1 + $0xf0] sm:$0xf]
    %v97 = vld [vmem:[%s1 + $0xf4] sm:$0xf]
    %v98 = vld [vmem:[%s1 + $0xf8] sm:$0xf]
    %v99 = vld [vmem:[%s1 + $0xfc] sm:$0xf]
    %v100 = vld [vmem:[%s1 + $0x100] sm:$0xf]
    %v101 = vld [vmem:[%s1 + $0x104] sm:$0xf]
    %v102 = vld [vmem:[%s1 + $0x108] sm:$0xf]
    %v103 = vld [vmem:[%s1 + $0x10c] sm:$0xf]
    %v104 = vld [vmem:[%s1 + $0x110] sm:$0xf]
    %v105 = vld [vmem:[%s1 + $0x114] sm:$0xf]
    %v106 = vld [vmem:[%s1 + $0x118] sm:$0xf]
    %v107 = vld [vmem:[%s1 + $0x11c] sm:$0xf]
    %v108 = vld [vmem:[%s1 + $0x120] sm:$0xf]
    %v109 = vld [vmem:[%s1 + $0x124] sm:$0xf]
    %v110 = vld [vmem:[%s1 + $0x128] sm:$0xf]
    %v111 = vld [vmem:[%s1 + $0x12c] sm:$0xf]
    %v112 = vld [vmem:[%s1 + $0x130] sm:$0xf]
    %v113 = vld [vmem:[%s1 + $0x134] sm:$0xf]
    %v114 = vld [vmem:[%s1 + $0x138] sm:$0xf]
    %v115 = vld [vmem:[%s1 + $0x13c] sm:$0xf]
    %v116 = vld [vmem:[%s1 + $0x140] sm:$0xf]
    %v117 = vld [vmem:[%s1 + $0x144] sm:$0xf]
    %v118 = vld [vmem:[%s1 + $0x148] sm:$0xf]
    %v119 = vld [vmem:[%s1 + $0x14c] sm:$0xf]
    %v120 = vld [vmem:[%s1 + $0x150] sm:$0xf]
    %v121 = vld [vmem:[%s1 + $0x154] sm:$0xf]
    %v122 = vld [vmem:[%s1 + $0x158] sm:$0xf]
    %v123 = vld [vmem:[%s1 + $0x15c] sm:$0xf]
    %v124 = vld [vmem:[%s1 + $0x160] sm:$0xf]
    %v125 = vld [vmem:[%s1 + $0x164] sm:$0xf]
    %v126 = vld [vmem:[%s1 + $0x168] sm:$0xf]
    %v127 = vld [vmem:[%s1 + $0x16c] sm:$0xf]
    %v128 = vld [vmem:[%s1 + $0x170] sm:$0xf]
    %v129 = vld [vmem:[%s1 + $0x174] sm:$0xf]
    %v130 = vld [vmem:[%s1 + $0x178] sm:$0xf]
    %v131 = vld [vmem:[%s1 + $0x17c] sm:$0xf]
    %v132 = vld [vmem:[%s1 + $0x180] sm:$0xf]
    %v133 = vld [vmem:[%s1 + $0x184] sm:$0xf]
    %v134 = vld [vmem:[%s1 + $0x188] sm:$0xf]
    %v135 = vld [vmem:[%s1 + $0x18c] sm:$0xf]
    %v136 = vld [vmem:[%s1 + $0x190] sm:$0xf]
    %v137 = vld [vmem:[%s1 + $0x194] sm:$0xf]
    %v138 = vld [vmem:[%s1 + $0x198] sm:$0xf]
    %v139 = vld [vmem:[%s1 + $0x19c] sm:$0xf]
    %v140 = vld [vmem:[%s1 + $0x1a0] sm:$0xf]
    %v141 = vld [vmem:[%s1 + $0x1a4] sm:$0xf]
    %v142 = vld [vmem:[%s1 + $0x1a8] sm:$0xf]
    %v143 = vld [vmem:[%s1 + $0x1ac] sm:$0xf]
    %v144 = vld [vmem:[%s1 + $0x1b0] sm:$0xf]
    %v145 = vld [vmem:[%s1 + $0x1b4] sm:$0xf]
    %v146 = vld [vmem:[%s1 + $0x1b8] sm:$0xf]
    %v147 = vld [vmem:[%s1 + $0x1bc] sm:$0xf]
    %v148 = vld [vmem:[%s1 + $0x1c0] sm:$0xf]
    %v149 = vld [vmem:[%s1 + $0x1c4] sm:$0xf]
    %v150 = vld [vmem:[%s1 + $0x1c8] sm:$0xf]
    %v151 = vld [vmem:[%s1 + $0x1cc] sm:$0xf]
    %v152 = vld [vmem:[%s1 + $0x1d0] sm:$0xf]
    %v153 = vld [vmem:[%s1 + $0x1d4] sm:$0xf]
    %v154 = vld [vmem:[%s1 + $0x1d8] sm:$0xf]
    %v155 = vld [vmem:[%s1 + $0x1dc] sm:$0xf]
    %v156 = vld [vmem:[%s1 + $0x1e0] sm:$0xf]
    %v157 = vld [vmem:[%s1 + $0x1e4] sm:$0xf]
    %v158 = vld [vmem:[%s1 + $0x1e8] sm:$0xf]
    %v159 = vld [vmem:[%s1 + $0x1ec] sm:$0xf]
    %v160 = vld [vmem:[%s1 + $0x1f0] sm:$0xf]
    %v161 = vld [vmem:[%s1 + $0x1f4] sm:$0xf]
    %v162 = vld [vmem:[%s1 + $0x1f8] sm:$0xf]
    %v163 = vld [vmem:[%s1 + $0x1fc] sm:$0xf]
    %v164 = vld [vmem:[%s0] sm:$0xf]
    %v165 = vld [vmem:[%s0 + $0x4] sm:$0xf]
    %v166 = vld [vmem:[%s0 + $0x8] sm:$0xf]
    %v167 = vld [vmem:[%s0 + $0xc] sm:$0xf]
    %v168 = vld [vmem:[%s0 + $0x10] sm:$0xf]
    %v169 = vld [vmem:[%s0 + $0x14] sm:$0xf]
    %v170 = vld [vmem:[%s0 + $0x18] sm:$0xf]
    %v171 = vld [vmem:[%s0 + $0x1c] sm:$0xf]
    %v172 = vld [vmem:[%s0 + $0x20] sm:$0xf]
    %v173 = vld [vmem:[%s0 + $0x24] sm:$0xf]
    %v174 = vld [vmem:[%s0 + $0x28] sm:$0xf]
    %v175 = vld [vmem:[%s0 + $0x2c] sm:$0xf]
    %v176 = vld [vmem:[%s0 + $0x30] sm:$0xf]
    %v177 = vld [vmem:[%s0 + $0x34] sm:$0xf]
    %v178 = vld [vmem:[%s0 + $0x38] sm:$0xf]
    %v179 = vld [vmem:[%s0 + $0x3c] sm:$0xf]
    %v180 = vld [vmem:[%s2] sm:$0xff]
    %v181 = vld [vmem:[%s2 + $0x8] sm:$0xff]
    %v182 = vld [vmem:[%s2 + $0x10] sm:$0xff]
    %v183 = vld [vmem:[%s2 + $0x18] sm:$0xff]
    %v184 = vld [vmem:[%s2 + $0x20] sm:$0xff]
    %v185 = vld [vmem:[%s2 + $0x28] sm:$0xff]
    %v186 = vld [vmem:[%s2 + $0x30] sm:$0xff]
    %v187 = vld [vmem:[%s2 + $0x38] sm:$0xff]
    %v188 = vld [vmem:[%s2 + $0x40] sm:$0xff]
    %v189 = vld [vmem:[%s2 + $0x48] sm:$0xff]
    %v190 = vld [vmem:[%s2 + $0x50] sm:$0xff]
    %v191 = vld [vmem:[%s2 + $0x58] sm:$0xff]
    %v192 = vld [vmem:[%s2 + $0x60] sm:$0xff]
    %v193 = vld [vmem:[%s2 + $0x68] sm:$0xff]
    %v194 = vld [vmem:[%s2 + $0x70] sm:$0xff]
    %v195 = vld [vmem:[%s2 + $0x78] sm:$0xff]
    %v196 = vld [vmem:[%s2 + $0x80] sm:$0xff]
    %v197 = vld [vmem:[%s2 + $0x88] sm:$0xff]
    %v198 = vld [vmem:[%s2 + $0x90] sm:$0xff]
    %v199 = vld [vmem:[%s2 + $0x98] sm:$0xff]
    %v200 = vld [vmem:[%s2 + $0xa0] sm:$0xff]
    %v201 = vld [vmem:[%s2 + $0xa8] sm:$0xff]
    %v202 = vld [vmem:[%s2 + $0xb0] sm:$0xff]
    %v203 = vld [vmem:[%s2 + $0xb8] sm:$0xff]
    %v204 = vld [vmem:[%s2 + $0xc0] sm:$0xff]
    %v205 = vld [vmem:[%s2 + $0xc8] sm:$0xff]
    %v206 = vld [vmem:[%s2 + $0xd0] sm:$0xff]
    %v207 = vld [vmem:[%s2 + $0xd8] sm:$0xff]
    %v208 = vld [vmem:[%s2 + $0xe0] sm:$0xff]
    %v209 = vld [vmem:[%s2 + $0xe8] sm:$0xff]
    %v210 = vld [vmem:[%s2 + $0xf0] sm:$0xff]
    %v211 = vld [vmem:[%s2 + $0xf8] sm:$0xff]
    %v212 = vld [vmem:[%s2 + $0x100] sm:$0xff]
    %v213 = vld [vmem:[%s2 + $0x108] sm:$0xff]
    %v214 = vld [vmem:[%s2 + $0x110] sm:$0xff]
    %v215 = vld [vmem:[%s2 + $0x118] sm:$0xff]
    %v216 = vld [vmem:[%s2 + $0x120] sm:$0xff]
    %v217 = vld [vmem:[%s2 + $0x128] sm:$0xff]
    %v218 = vld [vmem:[%s2 + $0x130] sm:$0xff]
    %v219 = vld [vmem:[%s2 + $0x138] sm:$0xff]
    %v220 = vld [vmem:[%s2 + $0x140] sm:$0xff]
    %v221 = vld [vmem:[%s2 + $0x148] sm:$0xff]
    %v222 = vld [vmem:[%s2 + $0x150] sm:$0xff]
    %v223 = vld [vmem:[%s2 + $0x158] sm:$0xff]
    %v224 = vld [vmem:[%s2 + $0x160] sm:$0xff]
    %v225 = vld [vmem:[%s2 + $0x168] sm:$0xff]
    %v226 = vld [vmem:[%s2 + $0x170] sm:$0xff]
    %v227 = vld [vmem:[%s2 + $0x178] sm:$0xff]
    %v228 = vld [vmem:[%s2 + $0x180] sm:$0xff]
    %v229 = vld [vmem:[%s2 + $0x188] sm:$0xff]
    %v230 = vld [vmem:[%s2 + $0x190] sm:$0xff]
    %v231 = vld [vmem:[%s2 + $0x198] sm:$0xff]
    %v232 = vld [vmem:[%s2 + $0x1a0] sm:$0xff]
    %v233 = vld [vmem:[%s2 + $0x1a8] sm:$0xff]
    %v234 = vld [vmem:[%s2 + $0x1b0] sm:$0xff]
    %v235 = vld [vmem:[%s2 + $0x1b8] sm:$0xff]
    %v236 = vld [vmem:[%s2 + $0x1c0] sm:$0xff]
    %v237 = vld [vmem:[%s2 + $0x1c8] sm:$0xff]
    %v238 = vld [vmem:[%s2 + $0x1d0] sm:$0xff]
    %v239 = vld [vmem:[%s2 + $0x1d8] sm:$0xff]
    %v240 = vld [vmem:[%s2 + $0x1e0] sm:$0xff]
    %v241 = vld [vmem:[%s2 + $0x1e8] sm:$0xff]
    %v242 = vld [vmem:[%s2 + $0x1f0] sm:$0xff]
    %v243 = vld [vmem:[%s2 + $0x1f8] sm:$0xff]
    %v244 = vld [vmem:[%s2 + $0x200] sm:$0xff]
    %v245 = vld [vmem:[%s2 + $0x208] sm:$0xff]
    %v246 = vld [vmem:[%s2 + $0x210] sm:$0xff]
    %v247 = vld [vmem:[%s2 + $0x218] sm:$0xff]
    %v248 = vld [vmem:[%s2 + $0x220] sm:$0xff]
    %v249 = vld [vmem:[%s2 + $0x228] sm:$0xff]
    %v250 = vld [vmem:[%s2 + $0x230] sm:$0xff]
    %v251 = vld [vmem:[%s2 + $0x238] sm:$0xff]
    %v252 = vld [vmem:[%s2 + $0x240] sm:$0xff]
    %v253 = vld [vmem:[%s2 + $0x248] sm:$0xff]
    %v254 = vld [vmem:[%s2 + $0x250] sm:$0xff]
    %v255 = vld [vmem:[%s2 + $0x258] sm:$0xff]
    %v256 = vld [vmem:[%s2 + $0x260] sm:$0xff]
    %v257 = vld [vmem:[%s2 + $0x268] sm:$0xff]
    %v258 = vld [vmem:[%s2 + $0x270] sm:$0xff]
    %v259 = vld [vmem:[%s2 + $0x278] sm:$0xff]
    %v260 = vld [vmem:[%s2 + $0x280] sm:$0xff]
    %v261 = vld [vmem:[%s2 + $0x288] sm:$0xff]
    %v262 = vld [vmem:[%s2 + $0x290] sm:$0xff]
    %v263 = vld [vmem:[%s2 + $0x298] sm:$0xff]
    %v264 = vld [vmem:[%s2 + $0x2a0] sm:$0xff]
    %v265 = vld [vmem:[%s2 + $0x2a8] sm:$0xff]
    %v266 = vld [vmem:[%s2 + $0x2b0] sm:$0xff]
    %v267 = vld [vmem:[%s2 + $0x2b8] sm:$0xff]
    %v268 = vld [vmem:[%s2 + $0x2c0] sm:$0xff]
    %v269 = vld [vmem:[%s2 + $0x2c8] sm:$0xff]
    %v270 = vld [vmem:[%s2 + $0x2d0] sm:$0xff]
    %v271 = vld [vmem:[%s2 + $0x2d8] sm:$0xff]
    %v272 = vld [vmem:[%s2 + $0x2e0] sm:$0xff]
    %v273 = vld [vmem:[%s2 + $0x2e8] sm:$0xff]
    %v274 = vld [vmem:[%s2 + $0x2f0] sm:$0xff]
    %v275 = vld [vmem:[%s2 + $0x2f8] sm:$0xff]
    %v276 = vld [vmem:[%s2 + $0x300] sm:$0xff]
    %v277 = vld [vmem:[%s2 + $0x308] sm:$0xff]
    %v278 = vld [vmem:[%s2 + $0x310] sm:$0xff]
    %v279 = vld [vmem:[%s2 + $0x318] sm:$0xff]
    %v280 = vld [vmem:[%s2 + $0x320] sm:$0xff]
    %v281 = vld [vmem:[%s2 + $0x328] sm:$0xff]
    %v282 = vld [vmem:[%s2 + $0x330] sm:$0xff]
    %v283 = vld [vmem:[%s2 + $0x338] sm:$0xff]
    %v284 = vld [vmem:[%s2 + $0x340] sm:$0xff]
    %v285 = vld [vmem:[%s2 + $0x348] sm:$0xff]
    %v286 = vld [vmem:[%s2 + $0x350] sm:$0xff]
    %v287 = vld [vmem:[%s2 + $0x358] sm:$0xff]
    %v288 = vld [vmem:[%s2 + $0x360] sm:$0xff]
    %v289 = vld [vmem:[%s2 + $0x368] sm:$0xff]
    %v290 = vld [vmem:[%s2 + $0x370] sm:$0xff]
    %v291 = vld [vmem:[%s2 + $0x378] sm:$0xff]
    %v292 = vld [vmem:[%s2 + $0x380] sm:$0xff]
    %v293 = vld [vmem:[%s2 + $0x388] sm:$0xff]
    %v294 = vld [vmem:[%s2 + $0x390] sm:$0xff]
    %v295 = vld [vmem:[%s2 + $0x398] sm:$0xff]
    %v296 = vld [vmem:[%s2 + $0x3a0] sm:$0xff]
    %v297 = vld [vmem:[%s2 + $0x3a8] sm:$0xff]
    %v298 = vld [vmem:[%s2 + $0x3b0] sm:$0xff]
    %v299 = vld [vmem:[%s2 + $0x3b8] sm:$0xff]
    %v300 = vld [vmem:[%s2 + $0x3c0] sm:$0xff]
    %v301 = vld [vmem:[%s2 + $0x3c8] sm:$0xff]
    %v302 = vld [vmem:[%s2 + $0x3d0] sm:$0xff]
    %v303 = vld [vmem:[%s2 + $0x3d8] sm:$0xff]
    %v304 = vld [vmem:[%s2 + $0x3e0] sm:$0xff]
    %v305 = vld [vmem:[%s2 + $0x3e8] sm:$0xff]
    %v306 = vld [vmem:[%s2 + $0x3f0] sm:$0xff]
    %v307 = vld [vmem:[%s2 + $0x3f8] sm:$0xff]
    %309 = vset.pattern.permute.xlu0 0
    %310 = vperm.xlu0 %309, %v180
    %v311 = vpop.permute.xlu0 %310
    %314 = vset.pattern.permute.xlu0 0
    %315 = vperm.xlu0 %314, %v181
    %v316 = vpop.permute.xlu0 %315
    %319 = vset.pattern.permute.xlu0 0
    %320 = vperm.xlu0 %319, %v182
    %v321 = vpop.permute.xlu0 %320
    %324 = vset.pattern.permute.xlu0 0
    %325 = vperm.xlu0 %324, %v183
    %v326 = vpop.permute.xlu0 %325
    %329 = vset.pattern.permute.xlu0 0
    %330 = vperm.xlu0 %329, %v184
    %v331 = vpop.permute.xlu0 %330
    %334 = vset.pattern.permute.xlu0 0
    %335 = vperm.xlu0 %334, %v185
    %v336 = vpop.permute.xlu0 %335
    %339 = vset.pattern.permute.xlu0 0
    %340 = vperm.xlu0 %339, %v186
    %v341 = vpop.permute.xlu0 %340
    %344 = vset.pattern.permute.xlu0 0
    %345 = vperm.xlu0 %344, %v187
    %v346 = vpop.permute.xlu0 %345
    %349 = vset.pattern.permute.xlu0 0
    %350 = vperm.xlu0 %349, %v188
    %v351 = vpop.permute.xlu0 %350
    %354 = vset.pattern.permute.xlu0 0
    %355 = vperm.xlu0 %354, %v189
    %v356 = vpop.permute.xlu0 %355
    %359 = vset.pattern.permute.xlu0 0
    %360 = vperm.xlu0 %359, %v190
    %v361 = vpop.permute.xlu0 %360
    %364 = vset.pattern.permute.xlu0 0
    %365 = vperm.xlu0 %364, %v191
    %v366 = vpop.permute.xlu0 %365
    %369 = vset.pattern.permute.xlu0 0
    %370 = vperm.xlu0 %369, %v192
    %v371 = vpop.permute.xlu0 %370
    %374 = vset.pattern.permute.xlu0 0
    %375 = vperm.xlu0 %374, %v193
    %v376 = vpop.permute.xlu0 %375
    %379 = vset.pattern.permute.xlu0 0
    %380 = vperm.xlu0 %379, %v194
    %v381 = vpop.permute.xlu0 %380
    %384 = vset.pattern.permute.xlu0 0
    %385 = vperm.xlu0 %384, %v195
    %v386 = vpop.permute.xlu0 %385
    %389 = vset.pattern.permute.xlu0 0
    %390 = vperm.xlu0 %389, %v196
    %v391 = vpop.permute.xlu0 %390
    %394 = vset.pattern.permute.xlu0 0
    %395 = vperm.xlu0 %394, %v197
    %v396 = vpop.permute.xlu0 %395
    %399 = vset.pattern.permute.xlu0 0
    %400 = vperm.xlu0 %399, %v198
    %v401 = vpop.permute.xlu0 %400
    %404 = vset.pattern.permute.xlu0 0
    %405 = vperm.xlu0 %404, %v199
    %v406 = vpop.permute.xlu0 %405
    %409 = vset.pattern.permute.xlu0 0
    %410 = vperm.xlu0 %409, %v200
    %v411 = vpop.permute.xlu0 %410
    %414 = vset.pattern.permute.xlu0 0
    %415 = vperm.xlu0 %414, %v201
    %v416 = vpop.permute.xlu0 %415
    %419 = vset.pattern.permute.xlu0 0
    %420 = vperm.xlu0 %419, %v202
    %v421 = vpop.permute.xlu0 %420
    %424 = vset.pattern.permute.xlu0 0
    %425 = vperm.xlu0 %424, %v203
    %v426 = vpop.permute.xlu0 %425
    %429 = vset.pattern.permute.xlu0 0
    %430 = vperm.xlu0 %429, %v204
    %v431 = vpop.permute.xlu0 %430
    %434 = vset.pattern.permute.xlu0 0
    %435 = vperm.xlu0 %434, %v205
    %v436 = vpop.permute.xlu0 %435
    %439 = vset.pattern.permute.xlu0 0
    %440 = vperm.xlu0 %439, %v206
    %v441 = vpop.permute.xlu0 %440
    %444 = vset.pattern.permute.xlu0 0
    %445 = vperm.xlu0 %444, %v207
    %v446 = vpop.permute.xlu0 %445
    %449 = vset.pattern.permute.xlu0 0
    %450 = vperm.xlu0 %449, %v208
    %v451 = vpop.permute.xlu0 %450
    %454 = vset.pattern.permute.xlu0 0
    %455 = vperm.xlu0 %454, %v209
    %v456 = vpop.permute.xlu0 %455
    %459 = vset.pattern.permute.xlu0 0
    %460 = vperm.xlu0 %459, %v210
    %v461 = vpop.permute.xlu0 %460
    %464 = vset.pattern.permute.xlu0 0
    %465 = vperm.xlu0 %464, %v211
    %v466 = vpop.permute.xlu0 %465
    %469 = vset.pattern.permute.xlu0 0
    %470 = vperm.xlu0 %469, %v212
    %v471 = vpop.permute.xlu0 %470
    %474 = vset.pattern.permute.xlu0 0
    %475 = vperm.xlu0 %474, %v213
    %v476 = vpop.permute.xlu0 %475
    %479 = vset.pattern.permute.xlu0 0
    %480 = vperm.xlu0 %479, %v214
    %v481 = vpop.permute.xlu0 %480
    %484 = vset.pattern.permute.xlu0 0
    %485 = vperm.xlu0 %484, %v215
    %v486 = vpop.permute.xlu0 %485
    %489 = vset.pattern.permute.xlu0 0
    %490 = vperm.xlu0 %489, %v216
    %v491 = vpop.permute.xlu0 %490
    %494 = vset.pattern.permute.xlu0 0
    %495 = vperm.xlu0 %494, %v217
    %v496 = vpop.permute.xlu0 %495
    %499 = vset.pattern.permute.xlu0 0
    %500 = vperm.xlu0 %499, %v218
    %v501 = vpop.permute.xlu0 %500
    %504 = vset.pattern.permute.xlu0 0
    %505 = vperm.xlu0 %504, %v219
    %v506 = vpop.permute.xlu0 %505
    %509 = vset.pattern.permute.xlu0 0
    %510 = vperm.xlu0 %509, %v220
    %v511 = vpop.permute.xlu0 %510
    %514 = vset.pattern.permute.xlu0 0
    %515 = vperm.xlu0 %514, %v221
    %v516 = vpop.permute.xlu0 %515
    %519 = vset.pattern.permute.xlu0 0
    %520 = vperm.xlu0 %519, %v222
    %v521 = vpop.permute.xlu0 %520
    %524 = vset.pattern.permute.xlu0 0
    %525 = vperm.xlu0 %524, %v223
    %v526 = vpop.permute.xlu0 %525
    %529 = vset.pattern.permute.xlu0 0
    %530 = vperm.xlu0 %529, %v224
    %v531 = vpop.permute.xlu0 %530
    %534 = vset.pattern.permute.xlu0 0
    %535 = vperm.xlu0 %534, %v225
    %v536 = vpop.permute.xlu0 %535
    %539 = vset.pattern.permute.xlu0 0
    %540 = vperm.xlu0 %539, %v226
    %v541 = vpop.permute.xlu0 %540
    %544 = vset.pattern.permute.xlu0 0
    %545 = vperm.xlu0 %544, %v227
    %v546 = vpop.permute.xlu0 %545
    %549 = vset.pattern.permute.xlu0 0
    %550 = vperm.xlu0 %549, %v228
    %v551 = vpop.permute.xlu0 %550
    %554 = vset.pattern.permute.xlu0 0
    %555 = vperm.xlu0 %554, %v229
    %v556 = vpop.permute.xlu0 %555
    %559 = vset.pattern.permute.xlu0 0
    %560 = vperm.xlu0 %559, %v230
    %v561 = vpop.permute.xlu0 %560
    %564 = vset.pattern.permute.xlu0 0
    %565 = vperm.xlu0 %564, %v231
    %v566 = vpop.permute.xlu0 %565
    %569 = vset.pattern.permute.xlu0 0
    %570 = vperm.xlu0 %569, %v232
    %v571 = vpop.permute.xlu0 %570
    %574 = vset.pattern.permute.xlu0 0
    %575 = vperm.xlu0 %574, %v233
    %v576 = vpop.permute.xlu0 %575
    %579 = vset.pattern.permute.xlu0 0
    %580 = vperm.xlu0 %579, %v234
    %v581 = vpop.permute.xlu0 %580
    %584 = vset.pattern.permute.xlu0 0
    %585 = vperm.xlu0 %584, %v235
    %v586 = vpop.permute.xlu0 %585
    %589 = vset.pattern.permute.xlu0 0
    %590 = vperm.xlu0 %589, %v236
    %v591 = vpop.permute.xlu0 %590
    %594 = vset.pattern.permute.xlu0 0
    %595 = vperm.xlu0 %594, %v237
    %v596 = vpop.permute.xlu0 %595
    %599 = vset.pattern.permute.xlu0 0
    %600 = vperm.xlu0 %599, %v238
    %v601 = vpop.permute.xlu0 %600
    %604 = vset.pattern.permute.xlu0 0
    %605 = vperm.xlu0 %604, %v239
    %v606 = vpop.permute.xlu0 %605
    %609 = vset.pattern.permute.xlu0 0
    %610 = vperm.xlu0 %609, %v240
    %v611 = vpop.permute.xlu0 %610
    %614 = vset.pattern.permute.xlu0 0
    %615 = vperm.xlu0 %614, %v241
    %v616 = vpop.permute.xlu0 %615
    %619 = vset.pattern.permute.xlu0 0
    %620 = vperm.xlu0 %619, %v242
    %v621 = vpop.permute.xlu0 %620
    %624 = vset.pattern.permute.xlu0 0
    %625 = vperm.xlu0 %624, %v243
    %v626 = vpop.permute.xlu0 %625
    %629 = vset.pattern.permute.xlu0 0
    %630 = vperm.xlu0 %629, %v244
    %v631 = vpop.permute.xlu0 %630
    %634 = vset.pattern.permute.xlu0 0
    %635 = vperm.xlu0 %634, %v245
    %v636 = vpop.permute.xlu0 %635
    %639 = vset.pattern.permute.xlu0 0
    %640 = vperm.xlu0 %639, %v246
    %v641 = vpop.permute.xlu0 %640
    %644 = vset.pattern.permute.xlu0 0
    %645 = vperm.xlu0 %644, %v247
    %v646 = vpop.permute.xlu0 %645
    %649 = vset.pattern.permute.xlu0 0
    %650 = vperm.xlu0 %649, %v248
    %v651 = vpop.permute.xlu0 %650
    %654 = vset.pattern.permute.xlu0 0
    %655 = vperm.xlu0 %654, %v249
    %v656 = vpop.permute.xlu0 %655
    %659 = vset.pattern.permute.xlu0 0
    %660 = vperm.xlu0 %659, %v250
    %v661 = vpop.permute.xlu0 %660
    %664 = vset.pattern.permute.xlu0 0
    %665 = vperm.xlu0 %664, %v251
    %v666 = vpop.permute.xlu0 %665
    %669 = vset.pattern.permute.xlu0 0
    %670 = vperm.xlu0 %669, %v252
    %v671 = vpop.permute.xlu0 %670
    %674 = vset.pattern.permute.xlu0 0
    %675 = vperm.xlu0 %674, %v253
    %v676 = vpop.permute.xlu0 %675
    %679 = vset.pattern.permute.xlu0 0
    %680 = vperm.xlu0 %679, %v254
    %v681 = vpop.permute.xlu0 %680
    %684 = vset.pattern.permute.xlu0 0
    %685 = vperm.xlu0 %684, %v255
    %v686 = vpop.permute.xlu0 %685
    %689 = vset.pattern.permute.xlu0 0
    %690 = vperm.xlu0 %689, %v256
    %v691 = vpop.permute.xlu0 %690
    %694 = vset.pattern.permute.xlu0 0
    %695 = vperm.xlu0 %694, %v257
    %v696 = vpop.permute.xlu0 %695
    %699 = vset.pattern.permute.xlu0 0
    %700 = vperm.xlu0 %699, %v258
    %v701 = vpop.permute.xlu0 %700
    %704 = vset.pattern.permute.xlu0 0
    %705 = vperm.xlu0 %704, %v259
    %v706 = vpop.permute.xlu0 %705
    %709 = vset.pattern.permute.xlu0 0
    %710 = vperm.xlu0 %709, %v260
    %v711 = vpop.permute.xlu0 %710
    %714 = vset.pattern.permute.xlu0 0
    %715 = vperm.xlu0 %714, %v261
    %v716 = vpop.permute.xlu0 %715
    %719 = vset.pattern.permute.xlu0 0
    %720 = vperm.xlu0 %719, %v262
    %v721 = vpop.permute.xlu0 %720
    %724 = vset.pattern.permute.xlu0 0
    %725 = vperm.xlu0 %724, %v263
    %v726 = vpop.permute.xlu0 %725
    %729 = vset.pattern.permute.xlu0 0
    %730 = vperm.xlu0 %729, %v264
    %v731 = vpop.permute.xlu0 %730
    %734 = vset.pattern.permute.xlu0 0
    %735 = vperm.xlu0 %734, %v265
    %v736 = vpop.permute.xlu0 %735
    %739 = vset.pattern.permute.xlu0 0
    %740 = vperm.xlu0 %739, %v266
    %v741 = vpop.permute.xlu0 %740
    %744 = vset.pattern.permute.xlu0 0
    %745 = vperm.xlu0 %744, %v267
    %v746 = vpop.permute.xlu0 %745
    %749 = vset.pattern.permute.xlu0 0
    %750 = vperm.xlu0 %749, %v268
    %v751 = vpop.permute.xlu0 %750
    %754 = vset.pattern.permute.xlu0 0
    %755 = vperm.xlu0 %754, %v269
    %v756 = vpop.permute.xlu0 %755
    %759 = vset.pattern.permute.xlu0 0
    %760 = vperm.xlu0 %759, %v270
    %v761 = vpop.permute.xlu0 %760
    %764 = vset.pattern.permute.xlu0 0
    %765 = vperm.xlu0 %764, %v271
    %v766 = vpop.permute.xlu0 %765
    %769 = vset.pattern.permute.xlu0 0
    %770 = vperm.xlu0 %769, %v272
    %v771 = vpop.permute.xlu0 %770
    %774 = vset.pattern.permute.xlu0 0
    %775 = vperm.xlu0 %774, %v273
    %v776 = vpop.permute.xlu0 %775
    %779 = vset.pattern.permute.xlu0 0
    %780 = vperm.xlu0 %779, %v274
    %v781 = vpop.permute.xlu0 %780
    %784 = vset.pattern.permute.xlu0 0
    %785 = vperm.xlu0 %784, %v275
    %v786 = vpop.permute.xlu0 %785
    %789 = vset.pattern.permute.xlu0 0
    %790 = vperm.xlu0 %789, %v276
    %v791 = vpop.permute.xlu0 %790
    %794 = vset.pattern.permute.xlu0 0
    %795 = vperm.xlu0 %794, %v277
    %v796 = vpop.permute.xlu0 %795
    %799 = vset.pattern.permute.xlu0 0
    %800 = vperm.xlu0 %799, %v278
    %v801 = vpop.permute.xlu0 %800
    %804 = vset.pattern.permute.xlu0 0
    %805 = vperm.xlu0 %804, %v279
    %v806 = vpop.permute.xlu0 %805
    %809 = vset.pattern.permute.xlu0 0
    %810 = vperm.xlu0 %809, %v280
    %v811 = vpop.permute.xlu0 %810
    %814 = vset.pattern.permute.xlu0 0
    %815 = vperm.xlu0 %814, %v281
    %v816 = vpop.permute.xlu0 %815
    %819 = vset.pattern.permute.xlu0 0
    %820 = vperm.xlu0 %819, %v282
    %v821 = vpop.permute.xlu0 %820
    %824 = vset.pattern.permute.xlu0 0
    %825 = vperm.xlu0 %824, %v283
    %v826 = vpop.permute.xlu0 %825
    %829 = vset.pattern.permute.xlu0 0
    %830 = vperm.xlu0 %829, %v284
    %v831 = vpop.permute.xlu0 %830
    %834 = vset.pattern.permute.xlu0 0
    %835 = vperm.xlu0 %834, %v285
    %v836 = vpop.permute.xlu0 %835
    %839 = vset.pattern.permute.xlu0 0
    %840 = vperm.xlu0 %839, %v286
    %v841 = vpop.permute.xlu0 %840
    %844 = vset.pattern.permute.xlu0 0
    %845 = vperm.xlu0 %844, %v287
    %v846 = vpop.permute.xlu0 %845
    %849 = vset.pattern.permute.xlu0 0
    %850 = vperm.xlu0 %849, %v288
    %v851 = vpop.permute.xlu0 %850
    %854 = vset.pattern.permute.xlu0 0
    %855 = vperm.xlu0 %854, %v289
    %v856 = vpop.permute.xlu0 %855
    %859 = vset.pattern.permute.xlu0 0
    %860 = vperm.xlu0 %859, %v290
    %v861 = vpop.permute.xlu0 %860
    %864 = vset.pattern.permute.xlu0 0
    %865 = vperm.xlu0 %864, %v291
    %v866 = vpop.permute.xlu0 %865
    %869 = vset.pattern.permute.xlu0 0
    %870 = vperm.xlu0 %869, %v292
    %v871 = vpop.permute.xlu0 %870
    %874 = vset.pattern.permute.xlu0 0
    %875 = vperm.xlu0 %874, %v293
    %v876 = vpop.permute.xlu0 %875
    %879 = vset.pattern.permute.xlu0 0
    %880 = vperm.xlu0 %879, %v294
    %v881 = vpop.permute.xlu0 %880
    %884 = vset.pattern.permute.xlu0 0
    %885 = vperm.xlu0 %884, %v295
    %v886 = vpop.permute.xlu0 %885
    %889 = vset.pattern.permute.xlu0 0
    %890 = vperm.xlu0 %889, %v296
    %v891 = vpop.permute.xlu0 %890
    %894 = vset.pattern.permute.xlu0 0
    %895 = vperm.xlu0 %894, %v297
    %v896 = vpop.permute.xlu0 %895
    %899 = vset.pattern.permute.xlu0 0
    %900 = vperm.xlu0 %899, %v298
    %v901 = vpop.permute.xlu0 %900
    %904 = vset.pattern.permute.xlu0 0
    %905 = vperm.xlu0 %904, %v299
    %v906 = vpop.permute.xlu0 %905
    %909 = vset.pattern.permute.xlu0 0
    %910 = vperm.xlu0 %909, %v300
    %v911 = vpop.permute.xlu0 %910
    %914 = vset.pattern.permute.xlu0 0
    %915 = vperm.xlu0 %914, %v301
    %v916 = vpop.permute.xlu0 %915
    %919 = vset.pattern.permute.xlu0 0
    %920 = vperm.xlu0 %919, %v302
    %v921 = vpop.permute.xlu0 %920
    %924 = vset.pattern.permute.xlu0 0
    %925 = vperm.xlu0 %924, %v303
    %v926 = vpop.permute.xlu0 %925
    %929 = vset.pattern.permute.xlu0 0
    %930 = vperm.xlu0 %929, %v304
    %v931 = vpop.permute.xlu0 %930
    %934 = vset.pattern.permute.xlu0 0
    %935 = vperm.xlu0 %934, %v305
    %v936 = vpop.permute.xlu0 %935
    %939 = vset.pattern.permute.xlu0 0
    %940 = vperm.xlu0 %939, %v306
    %v941 = vpop.permute.xlu0 %940
    %944 = vset.pattern.permute.xlu0 0
    %945 = vperm.xlu0 %944, %v307
    %v946 = vpop.permute.xlu0 %945
    %v1076 = vunpack.c.l.b16 %v36
    %v1077 = vunpack.c.l.b16 %v37
    %v1078 = vunpack.c.l.b16 %v38
    %v1079 = vunpack.c.l.b16 %v39
    %v1080 = vunpack.c.l.b16 %v40
    %v1081 = vunpack.c.l.b16 %v41
    %v1082 = vunpack.c.l.b16 %v42
    %v1083 = vunpack.c.l.b16 %v43
    %v1084 = vunpack.c.l.b16 %v44
    %v1085 = vunpack.c.l.b16 %v45
    %v1086 = vunpack.c.l.b16 %v46
    %v1087 = vunpack.c.l.b16 %v47
    %v1088 = vunpack.c.l.b16 %v48
    %v1089 = vunpack.c.l.b16 %v49
    %v1090 = vunpack.c.l.b16 %v50
    %v1091 = vunpack.c.l.b16 %v51
    %v1092 = vunpack.c.l.b16 %v52
    %v1093 = vunpack.c.l.b16 %v53
    %v1094 = vunpack.c.l.b16 %v54
    %v1095 = vunpack.c.l.b16 %v55
    %v1096 = vunpack.c.l.b16 %v56
    %v1097 = vunpack.c.l.b16 %v57
    %v1098 = vunpack.c.l.b16 %v58
    %v1099 = vunpack.c.l.b16 %v59
    %v1100 = vunpack.c.l.b16 %v60
    %v1101 = vunpack.c.l.b16 %v61
    %v1102 = vunpack.c.l.b16 %v62
    %v1103 = vunpack.c.l.b16 %v63
    %v1104 = vunpack.c.l.b16 %v64
    %v1105 = vunpack.c.l.b16 %v65
    %v1106 = vunpack.c.l.b16 %v66
    %v1107 = vunpack.c.l.b16 %v67
    %v1108 = vunpack.c.l.b16 %v68
    %v1109 = vunpack.c.l.b16 %v69
    %v1110 = vunpack.c.l.b16 %v70
    %v1111 = vunpack.c.l.b16 %v71
    %v1112 = vunpack.c.l.b16 %v72
    %v1113 = vunpack.c.l.b16 %v73
    %v1114 = vunpack.c.l.b16 %v74
    %v1115 = vunpack.c.l.b16 %v75
    %v1116 = vunpack.c.l.b16 %v76
    %v1117 = vunpack.c.l.b16 %v77
    %v1118 = vunpack.c.l.b16 %v78
    %v1119 = vunpack.c.l.b16 %v79
    %v1120 = vunpack.c.l.b16 %v80
    %v1121 = vunpack.c.l.b16 %v81
    %v1122 = vunpack.c.l.b16 %v82
    %v1123 = vunpack.c.l.b16 %v83
    %v1124 = vunpack.c.l.b16 %v84
    %v1125 = vunpack.c.l.b16 %v85
    %v1126 = vunpack.c.l.b16 %v86
    %v1127 = vunpack.c.l.b16 %v87
    %v1128 = vunpack.c.l.b16 %v88
    %v1129 = vunpack.c.l.b16 %v89
    %v1130 = vunpack.c.l.b16 %v90
    %v1131 = vunpack.c.l.b16 %v91
    %v1132 = vunpack.c.l.b16 %v92
    %v1133 = vunpack.c.l.b16 %v93
    %v1134 = vunpack.c.l.b16 %v94
    %v1135 = vunpack.c.l.b16 %v95
    %v1136 = vunpack.c.l.b16 %v96
    %v1137 = vunpack.c.l.b16 %v97
    %v1138 = vunpack.c.l.b16 %v98
    %v1139 = vunpack.c.l.b16 %v99
    %v1140 = vunpack.c.l.b16 %v100
    %v1141 = vunpack.c.l.b16 %v101
    %v1142 = vunpack.c.l.b16 %v102
    %v1143 = vunpack.c.l.b16 %v103
    %v1144 = vunpack.c.l.b16 %v104
    %v1145 = vunpack.c.l.b16 %v105
    %v1146 = vunpack.c.l.b16 %v106
    %v1147 = vunpack.c.l.b16 %v107
    %v1148 = vunpack.c.l.b16 %v108
    %v1149 = vunpack.c.l.b16 %v109
    %v1150 = vunpack.c.l.b16 %v110
    %v1151 = vunpack.c.l.b16 %v111
    %v1152 = vunpack.c.l.b16 %v112
    %v1153 = vunpack.c.l.b16 %v113
    %v1154 = vunpack.c.l.b16 %v114
    %v1155 = vunpack.c.l.b16 %v115
    %v1156 = vunpack.c.l.b16 %v116
    %v1157 = vunpack.c.l.b16 %v117
    %v1158 = vunpack.c.l.b16 %v118
    %v1159 = vunpack.c.l.b16 %v119
    %v1160 = vunpack.c.l.b16 %v120
    %v1161 = vunpack.c.l.b16 %v121
    %v1162 = vunpack.c.l.b16 %v122
    %v1163 = vunpack.c.l.b16 %v123
    %v1164 = vunpack.c.l.b16 %v124
    %v1165 = vunpack.c.l.b16 %v125
    %v1166 = vunpack.c.l.b16 %v126
    %v1167 = vunpack.c.l.b16 %v127
    %v1168 = vunpack.c.l.b16 %v128
    %v1169 = vunpack.c.l.b16 %v129
    %v1170 = vunpack.c.l.b16 %v130
    %v1171 = vunpack.c.l.b16 %v131
    %v1172 = vunpack.c.l.b16 %v132
    %v1173 = vunpack.c.l.b16 %v133
    %v1174 = vunpack.c.l.b16 %v134
    %v1175 = vunpack.c.l.b16 %v135
    %v1176 = vunpack.c.l.b16 %v136
    %v1177 = vunpack.c.l.b16 %v137
    %v1178 = vunpack.c.l.b16 %v138
    %v1179 = vunpack.c.l.b16 %v139
    %v1180 = vunpack.c.l.b16 %v140
    %v1181 = vunpack.c.l.b16 %v141
    %v1182 = vunpack.c.l.b16 %v142
    %v1183 = vunpack.c.l.b16 %v143
    %v1184 = vunpack.c.l.b16 %v144
    %v1185 = vunpack.c.l.b16 %v145
    %v1186 = vunpack.c.l.b16 %v146
    %v1187 = vunpack.c.l.b16 %v147
    %v1188 = vunpack.c.l.b16 %v148
    %v1189 = vunpack.c.l.b16 %v149
    %v1190 = vunpack.c.l.b16 %v150
    %v1191 = vunpack.c.l.b16 %v151
    %v1192 = vunpack.c.l.b16 %v152
    %v1193 = vunpack.c.l.b16 %v153
    %v1194 = vunpack.c.l.b16 %v154
    %v1195 = vunpack.c.l.b16 %v155
    %v1196 = vunpack.c.l.b16 %v156
    %v1197 = vunpack.c.l.b16 %v157
    %v1198 = vunpack.c.l.b16 %v158
    %v1199 = vunpack.c.l.b16 %v159
    %v1200 = vunpack.c.l.b16 %v160
    %v1201 = vunpack.c.l.b16 %v161
    %v1202 = vunpack.c.l.b16 %v162
    %v1203 = vunpack.c.l.b16 %v163
    %v1204 = vpack.c.b16 %v1077, %v1076
    %v1205 = vpack.c.b16 %v1079, %v1078
    %v1206 = vpack.c.b16 %v1081, %v1080
    %v1207 = vpack.c.b16 %v1083, %v1082
    %v1208 = vpack.c.b16 %v1085, %v1084
    %v1209 = vpack.c.b16 %v1087, %v1086
    %v1210 = vpack.c.b16 %v1089, %v1088
    %v1211 = vpack.c.b16 %v1091, %v1090
    %v1212 = vpack.c.b16 %v1093, %v1092
    %v1213 = vpack.c.b16 %v1095, %v1094
    %v1214 = vpack.c.b16 %v1097, %v1096
    %v1215 = vpack.c.b16 %v1099, %v1098
    %v1216 = vpack.c.b16 %v1101, %v1100
    %v1217 = vpack.c.b16 %v1103, %v1102
    %v1218 = vpack.c.b16 %v1105, %v1104
    %v1219 = vpack.c.b16 %v1107, %v1106
    %v1220 = vpack.c.b16 %v1109, %v1108
    %v1221 = vpack.c.b16 %v1111, %v1110
    %v1222 = vpack.c.b16 %v1113, %v1112
    %v1223 = vpack.c.b16 %v1115, %v1114
    %v1224 = vpack.c.b16 %v1117, %v1116
    %v1225 = vpack.c.b16 %v1119, %v1118
    %v1226 = vpack.c.b16 %v1121, %v1120
    %v1227 = vpack.c.b16 %v1123, %v1122
    %v1228 = vpack.c.b16 %v1125, %v1124
    %v1229 = vpack.c.b16 %v1127, %v1126
    %v1230 = vpack.c.b16 %v1129, %v1128
    %v1231 = vpack.c.b16 %v1131, %v1130
    %v1232 = vpack.c.b16 %v1133, %v1132
    %v1233 = vpack.c.b16 %v1135, %v1134
    %v1234 = vpack.c.b16 %v1137, %v1136
    %v1235 = vpack.c.b16 %v1139, %v1138
    %v1236 = vpack.c.b16 %v1141, %v1140
    %v1237 = vpack.c.b16 %v1143, %v1142
    %v1238 = vpack.c.b16 %v1145, %v1144
    %v1239 = vpack.c.b16 %v1147, %v1146
    %v1240 = vpack.c.b16 %v1149, %v1148
    %v1241 = vpack.c.b16 %v1151, %v1150
    %v1242 = vpack.c.b16 %v1153, %v1152
    %v1243 = vpack.c.b16 %v1155, %v1154
    %v1244 = vpack.c.b16 %v1157, %v1156
    %v1245 = vpack.c.b16 %v1159, %v1158
    %v1246 = vpack.c.b16 %v1161, %v1160
    %v1247 = vpack.c.b16 %v1163, %v1162
    %v1248 = vpack.c.b16 %v1165, %v1164
    %v1249 = vpack.c.b16 %v1167, %v1166
    %v1250 = vpack.c.b16 %v1169, %v1168
    %v1251 = vpack.c.b16 %v1171, %v1170
    %v1252 = vpack.c.b16 %v1173, %v1172
    %v1253 = vpack.c.b16 %v1175, %v1174
    %v1254 = vpack.c.b16 %v1177, %v1176
    %v1255 = vpack.c.b16 %v1179, %v1178
    %v1256 = vpack.c.b16 %v1181, %v1180
    %v1257 = vpack.c.b16 %v1183, %v1182
    %v1258 = vpack.c.b16 %v1185, %v1184
    %v1259 = vpack.c.b16 %v1187, %v1186
    %v1260 = vpack.c.b16 %v1189, %v1188
    %v1261 = vpack.c.b16 %v1191, %v1190
    %v1262 = vpack.c.b16 %v1193, %v1192
    %v1263 = vpack.c.b16 %v1195, %v1194
    %v1264 = vpack.c.b16 %v1197, %v1196
    %v1265 = vpack.c.b16 %v1199, %v1198
    %v1266 = vpack.c.b16 %v1201, %v1200
    %v1267 = vpack.c.b16 %v1203, %v1202
    %v1284 = vunpack.c.l.b16 %v164
    %v1285 = vunpack.c.l.b16 %v165
    %v1286 = vunpack.c.l.b16 %v166
    %v1287 = vunpack.c.l.b16 %v167
    %v1288 = vunpack.c.l.b16 %v168
    %v1289 = vunpack.c.l.b16 %v169
    %v1290 = vunpack.c.l.b16 %v170
    %v1291 = vunpack.c.l.b16 %v171
    %v1292 = vunpack.c.l.b16 %v172
    %v1293 = vunpack.c.l.b16 %v173
    %v1294 = vunpack.c.l.b16 %v174
    %v1295 = vunpack.c.l.b16 %v175
    %v1296 = vunpack.c.l.b16 %v176
    %v1297 = vunpack.c.l.b16 %v177
    %v1298 = vunpack.c.l.b16 %v178
    %v1299 = vunpack.c.l.b16 %v179
    %v1300 = vpack.c.b16 %v1285, %v1284
    %v1301 = vpack.c.b16 %v1287, %v1286
    %v1302 = vpack.c.b16 %v1289, %v1288
    %v1303 = vpack.c.b16 %v1291, %v1290
    %v1304 = vpack.c.b16 %v1293, %v1292
    %v1305 = vpack.c.b16 %v1295, %v1294
    %v1306 = vpack.c.b16 %v1297, %v1296
    %v1307 = vpack.c.b16 %v1299, %v1298
    %vm1308 = vcmask 261120
    %v1310 = vsel %vm1308, %v1204, 0
    %v1313 = vsel %vm1308, %v1205, 0
    %v1316 = vsel %vm1308, %v1206, 0
    %v1319 = vsel %vm1308, %v1207, 0
    %v1322 = vsel %vm1308, %v1208, 0
    %v1325 = vsel %vm1308, %v1209, 0
    %v1328 = vsel %vm1308, %v1210, 0
    %v1331 = vsel %vm1308, %v1211, 0
    %v1334 = vsel %vm1308, %v1212, 0
    %v1337 = vsel %vm1308, %v1213, 0
    %v1340 = vsel %vm1308, %v1214, 0
    %v1343 = vsel %vm1308, %v1215, 0
    %v1346 = vsel %vm1308, %v1216, 0
    %v1349 = vsel %vm1308, %v1217, 0
    %v1352 = vsel %vm1308, %v1218, 0
    %v1355 = vsel %vm1308, %v1219, 0
    %v1358 = vsel %vm1308, %v1220, 0
    %v1361 = vsel %vm1308, %v1221, 0
    %v1364 = vsel %vm1308, %v1222, 0
    %v1367 = vsel %vm1308, %v1223, 0
    %v1370 = vsel %vm1308, %v1224, 0
    %v1373 = vsel %vm1308, %v1225, 0
    %v1376 = vsel %vm1308, %v1226, 0
    %v1379 = vsel %vm1308, %v1227, 0
    %v1382 = vsel %vm1308, %v1228, 0
    %v1385 = vsel %vm1308, %v1229, 0
    %v1388 = vsel %vm1308, %v1230, 0
    %v1391 = vsel %vm1308, %v1231, 0
    %v1394 = vsel %vm1308, %v1232, 0
    %v1397 = vsel %vm1308, %v1233, 0
    %v1400 = vsel %vm1308, %v1234, 0
    %v1403 = vsel %vm1308, %v1235, 0
    %v1406 = vsel %vm1308, %v1236, 0
    %v1409 = vsel %vm1308, %v1237, 0
    %v1412 = vsel %vm1308, %v1238, 0
    %v1415 = vsel %vm1308, %v1239, 0
    %v1418 = vsel %vm1308, %v1240, 0
    %v1421 = vsel %vm1308, %v1241, 0
    %v1424 = vsel %vm1308, %v1242, 0
    %v1427 = vsel %vm1308, %v1243, 0
    %v1430 = vsel %vm1308, %v1244, 0
    %v1433 = vsel %vm1308, %v1245, 0
    %v1436 = vsel %vm1308, %v1246, 0
    %v1439 = vsel %vm1308, %v1247, 0
    %v1442 = vsel %vm1308, %v1248, 0
    %v1445 = vsel %vm1308, %v1249, 0
    %v1448 = vsel %vm1308, %v1250, 0
    %v1451 = vsel %vm1308, %v1251, 0
    %v1454 = vsel %vm1308, %v1252, 0
    %v1457 = vsel %vm1308, %v1253, 0
    %v1460 = vsel %vm1308, %v1254, 0
    %v1463 = vsel %vm1308, %v1255, 0
    %v1466 = vsel %vm1308, %v1256, 0
    %v1469 = vsel %vm1308, %v1257, 0
    %v1472 = vsel %vm1308, %v1258, 0
    %v1475 = vsel %vm1308, %v1259, 0
    %v1478 = vsel %vm1308, %v1260, 0
    %v1481 = vsel %vm1308, %v1261, 0
    %v1484 = vsel %vm1308, %v1262, 0
    %v1487 = vsel %vm1308, %v1263, 0
    %v1490 = vsel %vm1308, %v1264, 0
    %v1493 = vsel %vm1308, %v1265, 0
    %v1496 = vsel %vm1308, %v1266, 0
    %v1499 = vsel %vm1308, %v1267, 0
    %v1502 = vsel %vm1308, %v1300, 0
    %v1505 = vsel %vm1308, %v1301, 0
    %v1508 = vsel %vm1308, %v1302, 0
    %v1511 = vsel %vm1308, %v1303, 0
    %v1514 = vsel %vm1308, %v1304, 0
    %v1517 = vsel %vm1308, %v1305, 0
    %v1520 = vsel %vm1308, %v1306, 0
    %v1523 = vsel %vm1308, %v1307, 0
    %1525 = vmatprep.subr.bf16.mxu0 0
    %1526 = vmatpush1.bf16.xpose.msra.mxu0 %v1523
    %1527 = vmatprep.subr.bf16.mxu0 0
    %1528 = vmatpush1.bf16.xpose.msra.mxu0 %v1520
    %1529 = vmatprep.subr.bf16.mxu0 0
    %1530 = vmatpush1.bf16.xpose.msra.mxu0 %v1517
    %1531 = vmatprep.subr.bf16.mxu0 0
    %1532 = vmatpush1.bf16.xpose.msra.mxu0 %v1514
    %1533 = vmatprep.subr.bf16.mxu0 0
    %1534 = vmatpush1.bf16.xpose.msra.mxu0 %v1511
    %1535 = vmatprep.subr.bf16.mxu0 0
    %1536 = vmatpush1.bf16.xpose.msra.mxu0 %v1508
    %1537 = vmatprep.subr.bf16.mxu0 0
    %1538 = vmatpush1.bf16.xpose.msra.mxu0 %v1505
    %1539 = vmatprep.subr.bf16.mxu0 0
    %1540 = vmatpush1.bf16.xpose.msra.mxu0 %v1502
    %1541 = vmatprep.subr.bf16.mxu0 0
    %1542 = vmatpush2.bf16.xpose.msra.mxu0 0
    %1543 = vmatprep.subr.bf16.mxu0 0
    %1544 = vmatpush2.bf16.xpose.msra.mxu0 0
    %1545 = vmatprep.subr.bf16.mxu0 0
    %1546 = vmatpush2.bf16.xpose.msra.mxu0 0
    %1547 = vmatprep.subr.bf16.mxu0 0
    %1548 = vmatpush2.bf16.xpose.msra.mxu0 0
    %1549 = vmatprep.subr.bf16.mxu0 0
    %1550 = vmatpush2.bf16.xpose.msra.mxu0 0
    %1551 = vmatprep.subr.bf16.mxu0 0
    %1552 = vmatpush2.bf16.xpose.msra.mxu0 0
    %1553 = vmatprep.subr.bf16.mxu0 0
    %1554 = vmatpush2.bf16.xpose.msra.mxu0 0
    %1555 = vmatprep.subr.bf16.mxu0 0
    %1556 = vmatpush2.bf16.xpose.msra.mxu0 0
    %1557 = vmatprep.mubr.bf16.mxu0 0
    %1558 = vmatmul.mubr.bf16.gmra.mxu0 %v1310
    %v1559 = vpop.f32.mrf.mxu0
    %v1560 = vadd.f32 %v311, %v1559
    %v1561 = vpop.f32.mrf.mxu0
    %v1562 = vpop.f32.mrf.mxu0
    %v1563 = vadd.f32 %v316, %v1562
    %v1564 = vpop.f32.mrf.mxu0
    %1565 = vmatprep.mubr.bf16.mxu0 0
    %1566 = vmatmul.mubr.bf16.gmra.mxu0 %v1313
    %v1567 = vpop.f32.mrf.mxu0
    %v1568 = vadd.f32 %v321, %v1567
    %v1569 = vpop.f32.mrf.mxu0
    %v1570 = vpop.f32.mrf.mxu0
    %v1571 = vadd.f32 %v326, %v1570
    %v1572 = vpop.f32.mrf.mxu0
    %1573 = vmatprep.mubr.bf16.mxu0 0
    %1574 = vmatmul.mubr.bf16.gmra.mxu0 %v1316
    %v1575 = vpop.f32.mrf.mxu0
    %v1576 = vadd.f32 %v331, %v1575
    %v1577 = vpop.f32.mrf.mxu0
    %v1578 = vpop.f32.mrf.mxu0
    %v1579 = vadd.f32 %v336, %v1578
    %v1580 = vpop.f32.mrf.mxu0
    %1581 = vmatprep.mubr.bf16.mxu0 0
    %1582 = vmatmul.mubr.bf16.gmra.mxu0 %v1319
    %v1583 = vpop.f32.mrf.mxu0
    %v1584 = vadd.f32 %v341, %v1583
    %v1585 = vpop.f32.mrf.mxu0
    %v1586 = vpop.f32.mrf.mxu0
    %v1587 = vadd.f32 %v346, %v1586
    %v1588 = vpop.f32.mrf.mxu0
    %1589 = vmatprep.mubr.bf16.mxu0 0
    %1590 = vmatmul.mubr.bf16.gmra.mxu0 %v1322
    %v1591 = vpop.f32.mrf.mxu0
    %v1592 = vadd.f32 %v351, %v1591
    %v1593 = vpop.f32.mrf.mxu0
    %v1594 = vpop.f32.mrf.mxu0
    %v1595 = vadd.f32 %v356, %v1594
    %v1596 = vpop.f32.mrf.mxu0
    %1597 = vmatprep.mubr.bf16.mxu0 0
    %1598 = vmatmul.mubr.bf16.gmra.mxu0 %v1325
    %v1599 = vpop.f32.mrf.mxu0
    %v1600 = vadd.f32 %v361, %v1599
    %v1601 = vpop.f32.mrf.mxu0
    %v1602 = vpop.f32.mrf.mxu0
    %v1603 = vadd.f32 %v366, %v1602
    %v1604 = vpop.f32.mrf.mxu0
    %1605 = vmatprep.mubr.bf16.mxu0 0
    %1606 = vmatmul.mubr.bf16.gmra.mxu0 %v1328
    %v1607 = vpop.f32.mrf.mxu0
    %v1608 = vadd.f32 %v371, %v1607
    %v1609 = vpop.f32.mrf.mxu0
    %v1610 = vpop.f32.mrf.mxu0
    %v1611 = vadd.f32 %v376, %v1610
    %v1612 = vpop.f32.mrf.mxu0
    %1613 = vmatprep.mubr.bf16.mxu0 0
    %1614 = vmatmul.mubr.bf16.gmra.mxu0 %v1331
    %v1615 = vpop.f32.mrf.mxu0
    %v1616 = vadd.f32 %v381, %v1615
    %v1617 = vpop.f32.mrf.mxu0
    %v1618 = vpop.f32.mrf.mxu0
    %v1619 = vadd.f32 %v386, %v1618
    %v1620 = vpop.f32.mrf.mxu0
    %1621 = vmatprep.mubr.bf16.mxu0 0
    %1622 = vmatmul.mubr.bf16.gmra.mxu0 %v1334
    %v1623 = vpop.f32.mrf.mxu0
    %v1624 = vadd.f32 %v391, %v1623
    %v1625 = vpop.f32.mrf.mxu0
    %v1626 = vpop.f32.mrf.mxu0
    %v1627 = vadd.f32 %v396, %v1626
    %v1628 = vpop.f32.mrf.mxu0
    %1629 = vmatprep.mubr.bf16.mxu0 0
    %1630 = vmatmul.mubr.bf16.gmra.mxu0 %v1337
    %v1631 = vpop.f32.mrf.mxu0
    %v1632 = vadd.f32 %v401, %v1631
    %v1633 = vpop.f32.mrf.mxu0
    %v1634 = vpop.f32.mrf.mxu0
    %v1635 = vadd.f32 %v406, %v1634
    %v1636 = vpop.f32.mrf.mxu0
    %1637 = vmatprep.mubr.bf16.mxu0 0
    %1638 = vmatmul.mubr.bf16.gmra.mxu0 %v1340
    %v1639 = vpop.f32.mrf.mxu0
    %v1640 = vadd.f32 %v411, %v1639
    %v1641 = vpop.f32.mrf.mxu0
    %v1642 = vpop.f32.mrf.mxu0
    %v1643 = vadd.f32 %v416, %v1642
    %v1644 = vpop.f32.mrf.mxu0
    %1645 = vmatprep.mubr.bf16.mxu0 0
    %1646 = vmatmul.mubr.bf16.gmra.mxu0 %v1343
    %v1647 = vpop.f32.mrf.mxu0
    %v1648 = vadd.f32 %v421, %v1647
    %v1649 = vpop.f32.mrf.mxu0
    %v1650 = vpop.f32.mrf.mxu0
    %v1651 = vadd.f32 %v426, %v1650
    %v1652 = vpop.f32.mrf.mxu0
    %1653 = vmatprep.mubr.bf16.mxu0 0
    %1654 = vmatmul.mubr.bf16.gmra.mxu0 %v1346
    %v1655 = vpop.f32.mrf.mxu0
    %v1656 = vadd.f32 %v431, %v1655
    %v1657 = vpop.f32.mrf.mxu0
    %v1658 = vpop.f32.mrf.mxu0
    %v1659 = vadd.f32 %v436, %v1658
    %v1660 = vpop.f32.mrf.mxu0
    %1661 = vmatprep.mubr.bf16.mxu0 0
    %1662 = vmatmul.mubr.bf16.gmra.mxu0 %v1349
    %v1663 = vpop.f32.mrf.mxu0
    %v1664 = vadd.f32 %v441, %v1663
    %v1665 = vpop.f32.mrf.mxu0
    %v1666 = vpop.f32.mrf.mxu0
    %v1667 = vadd.f32 %v446, %v1666
    %v1668 = vpop.f32.mrf.mxu0
    %1669 = vmatprep.mubr.bf16.mxu0 0
    %1670 = vmatmul.mubr.bf16.gmra.mxu0 %v1352
    %v1671 = vpop.f32.mrf.mxu0
    %v1672 = vadd.f32 %v451, %v1671
    %v1673 = vpop.f32.mrf.mxu0
    %v1674 = vpop.f32.mrf.mxu0
    %v1675 = vadd.f32 %v456, %v1674
    %v1676 = vpop.f32.mrf.mxu0
    %1677 = vmatprep.mubr.bf16.mxu0 0
    %1678 = vmatmul.mubr.bf16.gmra.mxu0 %v1355
    %v1679 = vpop.f32.mrf.mxu0
    %v1680 = vadd.f32 %v461, %v1679
    %v1681 = vpop.f32.mrf.mxu0
    %v1682 = vpop.f32.mrf.mxu0
    %v1683 = vadd.f32 %v466, %v1682
    %v1684 = vpop.f32.mrf.mxu0
    %1685 = vmatprep.mubr.bf16.mxu0 0
    %1686 = vmatmul.mubr.bf16.gmra.mxu0 %v1358
    %v1687 = vpop.f32.mrf.mxu0
    %v1688 = vadd.f32 %v471, %v1687
    %v1689 = vpop.f32.mrf.mxu0
    %v1690 = vpop.f32.mrf.mxu0
    %v1691 = vadd.f32 %v476, %v1690
    %v1692 = vpop.f32.mrf.mxu0
    %1693 = vmatprep.mubr.bf16.mxu0 0
    %1694 = vmatmul.mubr.bf16.gmra.mxu0 %v1361
    %v1695 = vpop.f32.mrf.mxu0
    %v1696 = vadd.f32 %v481, %v1695
    %v1697 = vpop.f32.mrf.mxu0
    %v1698 = vpop.f32.mrf.mxu0
    %v1699 = vadd.f32 %v486, %v1698
    %v1700 = vpop.f32.mrf.mxu0
    %1701 = vmatprep.mubr.bf16.mxu0 0
    %1702 = vmatmul.mubr.bf16.gmra.mxu0 %v1364
    %v1703 = vpop.f32.mrf.mxu0
    %v1704 = vadd.f32 %v491, %v1703
    %v1705 = vpop.f32.mrf.mxu0
    %v1706 = vpop.f32.mrf.mxu0
    %v1707 = vadd.f32 %v496, %v1706
    %v1708 = vpop.f32.mrf.mxu0
    %1709 = vmatprep.mubr.bf16.mxu0 0
    %1710 = vmatmul.mubr.bf16.gmra.mxu0 %v1367
    %v1711 = vpop.f32.mrf.mxu0
    %v1712 = vadd.f32 %v501, %v1711
    %v1713 = vpop.f32.mrf.mxu0
    %v1714 = vpop.f32.mrf.mxu0
    %v1715 = vadd.f32 %v506, %v1714
    %v1716 = vpop.f32.mrf.mxu0
    %1717 = vmatprep.mubr.bf16.mxu0 0
    %1718 = vmatmul.mubr.bf16.gmra.mxu0 %v1370
    %v1719 = vpop.f32.mrf.mxu0
    %v1720 = vadd.f32 %v511, %v1719
    %v1721 = vpop.f32.mrf.mxu0
    %v1722 = vpop.f32.mrf.mxu0
    %v1723 = vadd.f32 %v516, %v1722
    %v1724 = vpop.f32.mrf.mxu0
    %1725 = vmatprep.mubr.bf16.mxu0 0
    %1726 = vmatmul.mubr.bf16.gmra.mxu0 %v1373
    %v1727 = vpop.f32.mrf.mxu0
    %v1728 = vadd.f32 %v521, %v1727
    %v1729 = vpop.f32.mrf.mxu0
    %v1730 = vpop.f32.mrf.mxu0
    %v1731 = vadd.f32 %v526, %v1730
    %v1732 = vpop.f32.mrf.mxu0
    %1733 = vmatprep.mubr.bf16.mxu0 0
    %1734 = vmatmul.mubr.bf16.gmra.mxu0 %v1376
    %v1735 = vpop.f32.mrf.mxu0
    %v1736 = vadd.f32 %v531, %v1735
    %v1737 = vpop.f32.mrf.mxu0
    %v1738 = vpop.f32.mrf.mxu0
    %v1739 = vadd.f32 %v536, %v1738
    %v1740 = vpop.f32.mrf.mxu0
    %1741 = vmatprep.mubr.bf16.mxu0 0
    %1742 = vmatmul.mubr.bf16.gmra.mxu0 %v1379
    %v1743 = vpop.f32.mrf.mxu0
    %v1744 = vadd.f32 %v541, %v1743
    %v1745 = vpop.f32.mrf.mxu0
    %v1746 = vpop.f32.mrf.mxu0
    %v1747 = vadd.f32 %v546, %v1746
    %v1748 = vpop.f32.mrf.mxu0
    %1749 = vmatprep.mubr.bf16.mxu0 0
    %1750 = vmatmul.mubr.bf16.gmra.mxu0 %v1382
    %v1751 = vpop.f32.mrf.mxu0
    %v1752 = vadd.f32 %v551, %v1751
    %v1753 = vpop.f32.mrf.mxu0
    %v1754 = vpop.f32.mrf.mxu0
    %v1755 = vadd.f32 %v556, %v1754
    %v1756 = vpop.f32.mrf.mxu0
    %1757 = vmatprep.mubr.bf16.mxu0 0
    %1758 = vmatmul.mubr.bf16.gmra.mxu0 %v1385
    %v1759 = vpop.f32.mrf.mxu0
    %v1760 = vadd.f32 %v561, %v1759
    %v1761 = vpop.f32.mrf.mxu0
    %v1762 = vpop.f32.mrf.mxu0
    %v1763 = vadd.f32 %v566, %v1762
    %v1764 = vpop.f32.mrf.mxu0
    %1765 = vmatprep.mubr.bf16.mxu0 0
    %1766 = vmatmul.mubr.bf16.gmra.mxu0 %v1388
    %v1767 = vpop.f32.mrf.mxu0
    %v1768 = vadd.f32 %v571, %v1767
    %v1769 = vpop.f32.mrf.mxu0
    %v1770 = vpop.f32.mrf.mxu0
    %v1771 = vadd.f32 %v576, %v1770
    %v1772 = vpop.f32.mrf.mxu0
    %1773 = vmatprep.mubr.bf16.mxu0 0
    %1774 = vmatmul.mubr.bf16.gmra.mxu0 %v1391
    %v1775 = vpop.f32.mrf.mxu0
    %v1776 = vadd.f32 %v581, %v1775
    %v1777 = vpop.f32.mrf.mxu0
    %v1778 = vpop.f32.mrf.mxu0
    %v1779 = vadd.f32 %v586, %v1778
    %v1780 = vpop.f32.mrf.mxu0
    %1781 = vmatprep.mubr.bf16.mxu0 0
    %1782 = vmatmul.mubr.bf16.gmra.mxu0 %v1394
    %v1783 = vpop.f32.mrf.mxu0
    %v1784 = vadd.f32 %v591, %v1783
    %v1785 = vpop.f32.mrf.mxu0
    %v1786 = vpop.f32.mrf.mxu0
    %v1787 = vadd.f32 %v596, %v1786
    %v1788 = vpop.f32.mrf.mxu0
    %1789 = vmatprep.mubr.bf16.mxu0 0
    %1790 = vmatmul.mubr.bf16.gmra.mxu0 %v1397
    %v1791 = vpop.f32.mrf.mxu0
    %v1792 = vadd.f32 %v601, %v1791
    %v1793 = vpop.f32.mrf.mxu0
    %v1794 = vpop.f32.mrf.mxu0
    %v1795 = vadd.f32 %v606, %v1794
    %v1796 = vpop.f32.mrf.mxu0
    %1797 = vmatprep.mubr.bf16.mxu0 0
    %1798 = vmatmul.mubr.bf16.gmra.mxu0 %v1400
    %v1799 = vpop.f32.mrf.mxu0
    %v1800 = vadd.f32 %v611, %v1799
    %v1801 = vpop.f32.mrf.mxu0
    %v1802 = vpop.f32.mrf.mxu0
    %v1803 = vadd.f32 %v616, %v1802
    %v1804 = vpop.f32.mrf.mxu0
    %1805 = vmatprep.mubr.bf16.mxu0 0
    %1806 = vmatmul.mubr.bf16.gmra.mxu0 %v1403
    %v1807 = vpop.f32.mrf.mxu0
    %v1808 = vadd.f32 %v621, %v1807
    %v1809 = vpop.f32.mrf.mxu0
    %v1810 = vpop.f32.mrf.mxu0
    %v1811 = vadd.f32 %v626, %v1810
    %v1812 = vpop.f32.mrf.mxu0
    %1813 = vmatprep.mubr.bf16.mxu0 0
    %1814 = vmatmul.mubr.bf16.gmra.mxu0 %v1406
    %v1815 = vpop.f32.mrf.mxu0
    %v1816 = vadd.f32 %v631, %v1815
    %v1817 = vpop.f32.mrf.mxu0
    %v1818 = vpop.f32.mrf.mxu0
    %v1819 = vadd.f32 %v636, %v1818
    %v1820 = vpop.f32.mrf.mxu0
    %1821 = vmatprep.mubr.bf16.mxu0 0
    %1822 = vmatmul.mubr.bf16.gmra.mxu0 %v1409
    %v1823 = vpop.f32.mrf.mxu0
    %v1824 = vadd.f32 %v641, %v1823
    %v1825 = vpop.f32.mrf.mxu0
    %v1826 = vpop.f32.mrf.mxu0
    %v1827 = vadd.f32 %v646, %v1826
    %v1828 = vpop.f32.mrf.mxu0
    %1829 = vmatprep.mubr.bf16.mxu0 0
    %1830 = vmatmul.mubr.bf16.gmra.mxu0 %v1412
    %v1831 = vpop.f32.mrf.mxu0
    %v1832 = vadd.f32 %v651, %v1831
    %v1833 = vpop.f32.mrf.mxu0
    %v1834 = vpop.f32.mrf.mxu0
    %v1835 = vadd.f32 %v656, %v1834
    %v1836 = vpop.f32.mrf.mxu0
    %1837 = vmatprep.mubr.bf16.mxu0 0
    %1838 = vmatmul.mubr.bf16.gmra.mxu0 %v1415
    %v1839 = vpop.f32.mrf.mxu0
    %v1840 = vadd.f32 %v661, %v1839
    %v1841 = vpop.f32.mrf.mxu0
    %v1842 = vpop.f32.mrf.mxu0
    %v1843 = vadd.f32 %v666, %v1842
    %v1844 = vpop.f32.mrf.mxu0
    %1845 = vmatprep.mubr.bf16.mxu0 0
    %1846 = vmatmul.mubr.bf16.gmra.mxu0 %v1418
    %v1847 = vpop.f32.mrf.mxu0
    %v1848 = vadd.f32 %v671, %v1847
    %v1849 = vpop.f32.mrf.mxu0
    %v1850 = vpop.f32.mrf.mxu0
    %v1851 = vadd.f32 %v676, %v1850
    %v1852 = vpop.f32.mrf.mxu0
    %1853 = vmatprep.mubr.bf16.mxu0 0
    %1854 = vmatmul.mubr.bf16.gmra.mxu0 %v1421
    %v1855 = vpop.f32.mrf.mxu0
    %v1856 = vadd.f32 %v681, %v1855
    %v1857 = vpop.f32.mrf.mxu0
    %v1858 = vpop.f32.mrf.mxu0
    %v1859 = vadd.f32 %v686, %v1858
    %v1860 = vpop.f32.mrf.mxu0
    %1861 = vmatprep.mubr.bf16.mxu0 0
    %1862 = vmatmul.mubr.bf16.gmra.mxu0 %v1424
    %v1863 = vpop.f32.mrf.mxu0
    %v1864 = vadd.f32 %v691, %v1863
    %v1865 = vpop.f32.mrf.mxu0
    %v1866 = vpop.f32.mrf.mxu0
    %v1867 = vadd.f32 %v696, %v1866
    %v1868 = vpop.f32.mrf.mxu0
    %1869 = vmatprep.mubr.bf16.mxu0 0
    %1870 = vmatmul.mubr.bf16.gmra.mxu0 %v1427
    %v1871 = vpop.f32.mrf.mxu0
    %v1872 = vadd.f32 %v701, %v1871
    %v1873 = vpop.f32.mrf.mxu0
    %v1874 = vpop.f32.mrf.mxu0
    %v1875 = vadd.f32 %v706, %v1874
    %v1876 = vpop.f32.mrf.mxu0
    %1877 = vmatprep.mubr.bf16.mxu0 0
    %1878 = vmatmul.mubr.bf16.gmra.mxu0 %v1430
    %v1879 = vpop.f32.mrf.mxu0
    %v1880 = vadd.f32 %v711, %v1879
    %v1881 = vpop.f32.mrf.mxu0
    %v1882 = vpop.f32.mrf.mxu0
    %v1883 = vadd.f32 %v716, %v1882
    %v1884 = vpop.f32.mrf.mxu0
    %1885 = vmatprep.mubr.bf16.mxu0 0
    %1886 = vmatmul.mubr.bf16.gmra.mxu0 %v1433
    %v1887 = vpop.f32.mrf.mxu0
    %v1888 = vadd.f32 %v721, %v1887
    %v1889 = vpop.f32.mrf.mxu0
    %v1890 = vpop.f32.mrf.mxu0
    %v1891 = vadd.f32 %v726, %v1890
    %v1892 = vpop.f32.mrf.mxu0
    %1893 = vmatprep.mubr.bf16.mxu0 0
    %1894 = vmatmul.mubr.bf16.gmra.mxu0 %v1436
    %v1895 = vpop.f32.mrf.mxu0
    %v1896 = vadd.f32 %v731, %v1895
    %v1897 = vpop.f32.mrf.mxu0
    %v1898 = vpop.f32.mrf.mxu0
    %v1899 = vadd.f32 %v736, %v1898
    %v1900 = vpop.f32.mrf.mxu0
    %1901 = vmatprep.mubr.bf16.mxu0 0
    %1902 = vmatmul.mubr.bf16.gmra.mxu0 %v1439
    %v1903 = vpop.f32.mrf.mxu0
    %v1904 = vadd.f32 %v741, %v1903
    %v1905 = vpop.f32.mrf.mxu0
    %v1906 = vpop.f32.mrf.mxu0
    %v1907 = vadd.f32 %v746, %v1906
    %v1908 = vpop.f32.mrf.mxu0
    %1909 = vmatprep.mubr.bf16.mxu0 0
    %1910 = vmatmul.mubr.bf16.gmra.mxu0 %v1442
    %v1911 = vpop.f32.mrf.mxu0
    %v1912 = vadd.f32 %v751, %v1911
    %v1913 = vpop.f32.mrf.mxu0
    %v1914 = vpop.f32.mrf.mxu0
    %v1915 = vadd.f32 %v756, %v1914
    %v1916 = vpop.f32.mrf.mxu0
    %1917 = vmatprep.mubr.bf16.mxu0 0
    %1918 = vmatmul.mubr.bf16.gmra.mxu0 %v1445
    %v1919 = vpop.f32.mrf.mxu0
    %v1920 = vadd.f32 %v761, %v1919
    %v1921 = vpop.f32.mrf.mxu0
    %v1922 = vpop.f32.mrf.mxu0
    %v1923 = vadd.f32 %v766, %v1922
    %v1924 = vpop.f32.mrf.mxu0
    %1925 = vmatprep.mubr.bf16.mxu0 0
    %1926 = vmatmul.mubr.bf16.gmra.mxu0 %v1448
    %v1927 = vpop.f32.mrf.mxu0
    %v1928 = vadd.f32 %v771, %v1927
    %v1929 = vpop.f32.mrf.mxu0
    %v1930 = vpop.f32.mrf.mxu0
    %v1931 = vadd.f32 %v776, %v1930
    %v1932 = vpop.f32.mrf.mxu0
    %1933 = vmatprep.mubr.bf16.mxu0 0
    %1934 = vmatmul.mubr.bf16.gmra.mxu0 %v1451
    %v1935 = vpop.f32.mrf.mxu0
    %v1936 = vadd.f32 %v781, %v1935
    %v1937 = vpop.f32.mrf.mxu0
    %v1938 = vpop.f32.mrf.mxu0
    %v1939 = vadd.f32 %v786, %v1938
    %v1940 = vpop.f32.mrf.mxu0
    %1941 = vmatprep.mubr.bf16.mxu0 0
    %1942 = vmatmul.mubr.bf16.gmra.mxu0 %v1454
    %v1943 = vpop.f32.mrf.mxu0
    %v1944 = vadd.f32 %v791, %v1943
    %v1945 = vpop.f32.mrf.mxu0
    %v1946 = vpop.f32.mrf.mxu0
    %v1947 = vadd.f32 %v796, %v1946
    %v1948 = vpop.f32.mrf.mxu0
    %1949 = vmatprep.mubr.bf16.mxu0 0
    %1950 = vmatmul.mubr.bf16.gmra.mxu0 %v1457
    %v1951 = vpop.f32.mrf.mxu0
    %v1952 = vadd.f32 %v801, %v1951
    %v1953 = vpop.f32.mrf.mxu0
    %v1954 = vpop.f32.mrf.mxu0
    %v1955 = vadd.f32 %v806, %v1954
    %v1956 = vpop.f32.mrf.mxu0
    %1957 = vmatprep.mubr.bf16.mxu0 0
    %1958 = vmatmul.mubr.bf16.gmra.mxu0 %v1460
    %v1959 = vpop.f32.mrf.mxu0
    %v1960 = vadd.f32 %v811, %v1959
    %v1961 = vpop.f32.mrf.mxu0
    %v1962 = vpop.f32.mrf.mxu0
    %v1963 = vadd.f32 %v816, %v1962
    %v1964 = vpop.f32.mrf.mxu0
    %1965 = vmatprep.mubr.bf16.mxu0 0
    %1966 = vmatmul.mubr.bf16.gmra.mxu0 %v1463
    %v1967 = vpop.f32.mrf.mxu0
    %v1968 = vadd.f32 %v821, %v1967
    %v1969 = vpop.f32.mrf.mxu0
    %v1970 = vpop.f32.mrf.mxu0
    %v1971 = vadd.f32 %v826, %v1970
    %v1972 = vpop.f32.mrf.mxu0
    %1973 = vmatprep.mubr.bf16.mxu0 0
    %1974 = vmatmul.mubr.bf16.gmra.mxu0 %v1466
    %v1975 = vpop.f32.mrf.mxu0
    %v1976 = vadd.f32 %v831, %v1975
    %v1977 = vpop.f32.mrf.mxu0
    %v1978 = vpop.f32.mrf.mxu0
    %v1979 = vadd.f32 %v836, %v1978
    %v1980 = vpop.f32.mrf.mxu0
    %1981 = vmatprep.mubr.bf16.mxu0 0
    %1982 = vmatmul.mubr.bf16.gmra.mxu0 %v1469
    %v1983 = vpop.f32.mrf.mxu0
    %v1984 = vadd.f32 %v841, %v1983
    %v1985 = vpop.f32.mrf.mxu0
    %v1986 = vpop.f32.mrf.mxu0
    %v1987 = vadd.f32 %v846, %v1986
    %v1988 = vpop.f32.mrf.mxu0
    %1989 = vmatprep.mubr.bf16.mxu0 0
    %1990 = vmatmul.mubr.bf16.gmra.mxu0 %v1472
    %v1991 = vpop.f32.mrf.mxu0
    %v1992 = vadd.f32 %v851, %v1991
    %v1993 = vpop.f32.mrf.mxu0
    %v1994 = vpop.f32.mrf.mxu0
    %v1995 = vadd.f32 %v856, %v1994
    %v1996 = vpop.f32.mrf.mxu0
    %1997 = vmatprep.mubr.bf16.mxu0 0
    %1998 = vmatmul.mubr.bf16.gmra.mxu0 %v1475
    %v1999 = vpop.f32.mrf.mxu0
    %v2000 = vadd.f32 %v861, %v1999
    %v2001 = vpop.f32.mrf.mxu0
    %v2002 = vpop.f32.mrf.mxu0
    %v2003 = vadd.f32 %v866, %v2002
    %v2004 = vpop.f32.mrf.mxu0
    %2005 = vmatprep.mubr.bf16.mxu0 0
    %2006 = vmatmul.mubr.bf16.gmra.mxu0 %v1478
    %v2007 = vpop.f32.mrf.mxu0
    %v2008 = vadd.f32 %v871, %v2007
    %v2009 = vpop.f32.mrf.mxu0
    %v2010 = vpop.f32.mrf.mxu0
    %v2011 = vadd.f32 %v876, %v2010
    %v2012 = vpop.f32.mrf.mxu0
    %2013 = vmatprep.mubr.bf16.mxu0 0
    %2014 = vmatmul.mubr.bf16.gmra.mxu0 %v1481
    %v2015 = vpop.f32.mrf.mxu0
    %v2016 = vadd.f32 %v881, %v2015
    %v2017 = vpop.f32.mrf.mxu0
    %v2018 = vpop.f32.mrf.mxu0
    %v2019 = vadd.f32 %v886, %v2018
    %v2020 = vpop.f32.mrf.mxu0
    %2021 = vmatprep.mubr.bf16.mxu0 0
    %2022 = vmatmul.mubr.bf16.gmra.mxu0 %v1484
    %v2023 = vpop.f32.mrf.mxu0
    %v2024 = vadd.f32 %v891, %v2023
    %v2025 = vpop.f32.mrf.mxu0
    %v2026 = vpop.f32.mrf.mxu0
    %v2027 = vadd.f32 %v896, %v2026
    %v2028 = vpop.f32.mrf.mxu0
    %2029 = vmatprep.mubr.bf16.mxu0 0
    %2030 = vmatmul.mubr.bf16.gmra.mxu0 %v1487
    %v2031 = vpop.f32.mrf.mxu0
    %v2032 = vadd.f32 %v901, %v2031
    %v2033 = vpop.f32.mrf.mxu0
    %v2034 = vpop.f32.mrf.mxu0
    %v2035 = vadd.f32 %v906, %v2034
    %v2036 = vpop.f32.mrf.mxu0
    %2037 = vmatprep.mubr.bf16.mxu0 0
    %2038 = vmatmul.mubr.bf16.gmra.mxu0 %v1490
    %v2039 = vpop.f32.mrf.mxu0
    %v2040 = vadd.f32 %v911, %v2039
    %v2041 = vpop.f32.mrf.mxu0
    %v2042 = vpop.f32.mrf.mxu0
    %v2043 = vadd.f32 %v916, %v2042
    %v2044 = vpop.f32.mrf.mxu0
    %2045 = vmatprep.mubr.bf16.mxu0 0
    %2046 = vmatmul.mubr.bf16.gmra.mxu0 %v1493
    %v2047 = vpop.f32.mrf.mxu0
    %v2048 = vadd.f32 %v921, %v2047
    %v2049 = vpop.f32.mrf.mxu0
    %v2050 = vpop.f32.mrf.mxu0
    %v2051 = vadd.f32 %v926, %v2050
    %v2052 = vpop.f32.mrf.mxu0
    %2053 = vmatprep.mubr.bf16.mxu0 0
    %2054 = vmatmul.mubr.bf16.gmra.mxu0 %v1496
    %v2055 = vpop.f32.mrf.mxu0
    %v2056 = vadd.f32 %v931, %v2055
    %v2057 = vpop.f32.mrf.mxu0
    %v2058 = vpop.f32.mrf.mxu0
    %v2059 = vadd.f32 %v936, %v2058
    %v2060 = vpop.f32.mrf.mxu0
    %2061 = vmatprep.mubr.bf16.mxu0 0
    %2062 = vmatmul.mubr.bf16.gmra.mxu0 %v1499
    %v2063 = vpop.f32.mrf.mxu0
    %v2064 = vadd.f32 %v941, %v2063
    %v2065 = vpop.f32.mrf.mxu0
    %v2066 = vpop.f32.mrf.mxu0
    %v2067 = vadd.f32 %v946, %v2066
    %v2068 = vpop.f32.mrf.mxu0
    %2069 = vdwg.mxu0
    %v2070 = vmax.f32 %v1560, 0.0
    %v2071 = vmax.f32 %v1563, 0.0
    %v2072 = vmax.f32 %v1568, 0.0
    %v2073 = vmax.f32 %v1571, 0.0
    %v2074 = vmax.f32 %v1576, 0.0
    %v2075 = vmax.f32 %v1579, 0.0
    %v2076 = vmax.f32 %v1584, 0.0
    %v2077 = vmax.f32 %v1587, 0.0
    %v2078 = vmax.f32 %v1592, 0.0
    %v2079 = vmax.f32 %v1595, 0.0
    %v2080 = vmax.f32 %v1600, 0.0
    %v2081 = vmax.f32 %v1603, 0.0
    %v2082 = vmax.f32 %v1608, 0.0
    %v2083 = vmax.f32 %v1611, 0.0
    %v2084 = vmax.f32 %v1616, 0.0
    %v2085 = vmax.f32 %v1619, 0.0
    %v2086 = vmax.f32 %v1624, 0.0
    %v2087 = vmax.f32 %v1627, 0.0
    %v2088 = vmax.f32 %v1632, 0.0
    %v2089 = vmax.f32 %v1635, 0.0
    %v2090 = vmax.f32 %v1640, 0.0
    %v2091 = vmax.f32 %v1643, 0.0
    %v2092 = vmax.f32 %v1648, 0.0
    %v2093 = vmax.f32 %v1651, 0.0
    %v2094 = vmax.f32 %v1656, 0.0
    %v2095 = vmax.f32 %v1659, 0.0
    %v2096 = vmax.f32 %v1664, 0.0
    %v2097 = vmax.f32 %v1667, 0.0
    %v2098 = vmax.f32 %v1672, 0.0
    %v2099 = vmax.f32 %v1675, 0.0
    %v2100 = vmax.f32 %v1680, 0.0
    %v2101 = vmax.f32 %v1683, 0.0
    %v2102 = vmax.f32 %v1688, 0.0
    %v2103 = vmax.f32 %v1691, 0.0
    %v2104 = vmax.f32 %v1696, 0.0
    %v2105 = vmax.f32 %v1699, 0.0
    %v2106 = vmax.f32 %v1704, 0.0
    %v2107 = vmax.f32 %v1707, 0.0
    %v2108 = vmax.f32 %v1712, 0.0
    %v2109 = vmax.f32 %v1715, 0.0
    %v2110 = vmax.f32 %v1720, 0.0
    %v2111 = vmax.f32 %v1723, 0.0
    %v2112 = vmax.f32 %v1728, 0.0
    %v2113 = vmax.f32 %v1731, 0.0
    %v2114 = vmax.f32 %v1736, 0.0
    %v2115 = vmax.f32 %v1739, 0.0
    %v2116 = vmax.f32 %v1744, 0.0
    %v2117 = vmax.f32 %v1747, 0.0
    %v2118 = vmax.f32 %v1752, 0.0
    %v2119 = vmax.f32 %v1755, 0.0
    %v2120 = vmax.f32 %v1760, 0.0
    %v2121 = vmax.f32 %v1763, 0.0
    %v2122 = vmax.f32 %v1768, 0.0
    %v2123 = vmax.f32 %v1771, 0.0
    %v2124 = vmax.f32 %v1776, 0.0
    %v2125 = vmax.f32 %v1779, 0.0
    %v2126 = vmax.f32 %v1784, 0.0
    %v2127 = vmax.f32 %v1787, 0.0
    %v2128 = vmax.f32 %v1792, 0.0
    %v2129 = vmax.f32 %v1795, 0.0
    %v2130 = vmax.f32 %v1800, 0.0
    %v2131 = vmax.f32 %v1803, 0.0
    %v2132 = vmax.f32 %v1808, 0.0
    %v2133 = vmax.f32 %v1811, 0.0
    %v2134 = vmax.f32 %v1816, 0.0
    %v2135 = vmax.f32 %v1819, 0.0
    %v2136 = vmax.f32 %v1824, 0.0
    %v2137 = vmax.f32 %v1827, 0.0
    %v2138 = vmax.f32 %v1832, 0.0
    %v2139 = vmax.f32 %v1835, 0.0
    %v2140 = vmax.f32 %v1840, 0.0
    %v2141 = vmax.f32 %v1843, 0.0
    %v2142 = vmax.f32 %v1848, 0.0
    %v2143 = vmax.f32 %v1851, 0.0
    %v2144 = vmax.f32 %v1856, 0.0
    %v2145 = vmax.f32 %v1859, 0.0
    %v2146 = vmax.f32 %v1864, 0.0
    %v2147 = vmax.f32 %v1867, 0.0
    %v2148 = vmax.f32 %v1872, 0.0
    %v2149 = vmax.f32 %v1875, 0.0
    %v2150 = vmax.f32 %v1880, 0.0
    %v2151 = vmax.f32 %v1883, 0.0
    %v2152 = vmax.f32 %v1888, 0.0
    %v2153 = vmax.f32 %v1891, 0.0
    %v2154 = vmax.f32 %v1896, 0.0
    %v2155 = vmax.f32 %v1899, 0.0
    %v2156 = vmax.f32 %v1904, 0.0
    %v2157 = vmax.f32 %v1907, 0.0
    %v2158 = vmax.f32 %v1912, 0.0
    %v2159 = vmax.f32 %v1915, 0.0
    %v2160 = vmax.f32 %v1920, 0.0
    %v2161 = vmax.f32 %v1923, 0.0
    %v2162 = vmax.f32 %v1928, 0.0
    %v2163 = vmax.f32 %v1931, 0.0
    %v2164 = vmax.f32 %v1936, 0.0
    %v2165 = vmax.f32 %v1939, 0.0
    %v2166 = vmax.f32 %v1944, 0.0
    %v2167 = vmax.f32 %v1947, 0.0
    %v2168 = vmax.f32 %v1952, 0.0
    %v2169 = vmax.f32 %v1955, 0.0
    %v2170 = vmax.f32 %v1960, 0.0
    %v2171 = vmax.f32 %v1963, 0.0
    %v2172 = vmax.f32 %v1968, 0.0
    %v2173 = vmax.f32 %v1971, 0.0
    %v2174 = vmax.f32 %v1976, 0.0
    %v2175 = vmax.f32 %v1979, 0.0
    %v2176 = vmax.f32 %v1984, 0.0
    %v2177 = vmax.f32 %v1987, 0.0
    %v2178 = vmax.f32 %v1992, 0.0
    %v2179 = vmax.f32 %v1995, 0.0
    %v2180 = vmax.f32 %v2000, 0.0
    %v2181 = vmax.f32 %v2003, 0.0
    %v2182 = vmax.f32 %v2008, 0.0
    %v2183 = vmax.f32 %v2011, 0.0
    %v2184 = vmax.f32 %v2016, 0.0
    %v2185 = vmax.f32 %v2019, 0.0
    %v2186 = vmax.f32 %v2024, 0.0
    %v2187 = vmax.f32 %v2027, 0.0
    %v2188 = vmax.f32 %v2032, 0.0
    %v2189 = vmax.f32 %v2035, 0.0
    %v2190 = vmax.f32 %v2040, 0.0
    %v2191 = vmax.f32 %v2043, 0.0
    %v2192 = vmax.f32 %v2048, 0.0
    %v2193 = vmax.f32 %v2051, 0.0
    %v2194 = vmax.f32 %v2056, 0.0
    %v2195 = vmax.f32 %v2059, 0.0
    %v2196 = vmax.f32 %v2064, 0.0
    %v2197 = vmax.f32 %v2067, 0.0
    %v2198 = vpack.c.bf16 %v2071, %v2070
    %v2199 = vpack.c.bf16 %v2073, %v2072
    %v2200 = vpack.c.bf16 %v2075, %v2074
    %v2201 = vpack.c.bf16 %v2077, %v2076
    %v2202 = vpack.c.bf16 %v2079, %v2078
    %v2203 = vpack.c.bf16 %v2081, %v2080
    %v2204 = vpack.c.bf16 %v2083, %v2082
    %v2205 = vpack.c.bf16 %v2085, %v2084
    %v2206 = vpack.c.bf16 %v2087, %v2086
    %v2207 = vpack.c.bf16 %v2089, %v2088
    %v2208 = vpack.c.bf16 %v2091, %v2090
    %v2209 = vpack.c.bf16 %v2093, %v2092
    %v2210 = vpack.c.bf16 %v2095, %v2094
    %v2211 = vpack.c.bf16 %v2097, %v2096
    %v2212 = vpack.c.bf16 %v2099, %v2098
    %v2213 = vpack.c.bf16 %v2101, %v2100
    %v2214 = vpack.c.bf16 %v2103, %v2102
    %v2215 = vpack.c.bf16 %v2105, %v2104
    %v2216 = vpack.c.bf16 %v2107, %v2106
    %v2217 = vpack.c.bf16 %v2109, %v2108
    %v2218 = vpack.c.bf16 %v2111, %v2110
    %v2219 = vpack.c.bf16 %v2113, %v2112
    %v2220 = vpack.c.bf16 %v2115, %v2114
    %v2221 = vpack.c.bf16 %v2117, %v2116
    %v2222 = vpack.c.bf16 %v2119, %v2118
    %v2223 = vpack.c.bf16 %v2121, %v2120
    %v2224 = vpack.c.bf16 %v2123, %v2122
    %v2225 = vpack.c.bf16 %v2125, %v2124
    %v2226 = vpack.c.bf16 %v2127, %v2126
    %v2227 = vpack.c.bf16 %v2129, %v2128
    %v2228 = vpack.c.bf16 %v2131, %v2130
    %v2229 = vpack.c.bf16 %v2133, %v2132
    %v2230 = vpack.c.bf16 %v2135, %v2134
    %v2231 = vpack.c.bf16 %v2137, %v2136
    %v2232 = vpack.c.bf16 %v2139, %v2138
    %v2233 = vpack.c.bf16 %v2141, %v2140
    %v2234 = vpack.c.bf16 %v2143, %v2142
    %v2235 = vpack.c.bf16 %v2145, %v2144
    %v2236 = vpack.c.bf16 %v2147, %v2146
    %v2237 = vpack.c.bf16 %v2149, %v2148
    %v2238 = vpack.c.bf16 %v2151, %v2150
    %v2239 = vpack.c.bf16 %v2153, %v2152
    %v2240 = vpack.c.bf16 %v2155, %v2154
    %v2241 = vpack.c.bf16 %v2157, %v2156
    %v2242 = vpack.c.bf16 %v2159, %v2158
    %v2243 = vpack.c.bf16 %v2161, %v2160
    %v2244 = vpack.c.bf16 %v2163, %v2162
    %v2245 = vpack.c.bf16 %v2165, %v2164
    %v2246 = vpack.c.bf16 %v2167, %v2166
    %v2247 = vpack.c.bf16 %v2169, %v2168
    %v2248 = vpack.c.bf16 %v2171, %v2170
    %v2249 = vpack.c.bf16 %v2173, %v2172
    %v2250 = vpack.c.bf16 %v2175, %v2174
    %v2251 = vpack.c.bf16 %v2177, %v2176
    %v2252 = vpack.c.bf16 %v2179, %v2178
    %v2253 = vpack.c.bf16 %v2181, %v2180
    %v2254 = vpack.c.bf16 %v2183, %v2182
    %v2255 = vpack.c.bf16 %v2185, %v2184
    %v2256 = vpack.c.bf16 %v2187, %v2186
    %v2257 = vpack.c.bf16 %v2189, %v2188
    %v2258 = vpack.c.bf16 %v2191, %v2190
    %v2259 = vpack.c.bf16 %v2193, %v2192
    %v2260 = vpack.c.bf16 %v2195, %v2194
    %v2261 = vpack.c.bf16 %v2197, %v2196
    %v2262 = vld [vmem:[%s3] sm:$0xff]
    %v2263 = vld [vmem:[%s3 + $0x8] sm:$0xff]
    %v2264 = vld [vmem:[%s3 + $0x10] sm:$0xff]
    %v2265 = vld [vmem:[%s3 + $0x18] sm:$0xff]
    %v2266 = vld [vmem:[%s3 + $0x20] sm:$0xff]
    %v2267 = vld [vmem:[%s3 + $0x28] sm:$0xff]
    %v2268 = vld [vmem:[%s3 + $0x30] sm:$0xff]
    %v2269 = vld [vmem:[%s3 + $0x38] sm:$0xff]
    %v2270 = vld [vmem:[%s3 + $0x40] sm:$0xff]
    %v2271 = vld [vmem:[%s3 + $0x48] sm:$0xff]
    %v2272 = vld [vmem:[%s3 + $0x50] sm:$0xff]
    %v2273 = vld [vmem:[%s3 + $0x58] sm:$0xff]
    %v2274 = vld [vmem:[%s3 + $0x60] sm:$0xff]
    %v2275 = vld [vmem:[%s3 + $0x68] sm:$0xff]
    %v2276 = vld [vmem:[%s3 + $0x70] sm:$0xff]
    %v2277 = vld [vmem:[%s3 + $0x78] sm:$0xff]
    %v2278 = vld [vmem:[%s3 + $0x80] sm:$0xff]
    %v2279 = vld [vmem:[%s3 + $0x88] sm:$0xff]
    %v2280 = vld [vmem:[%s3 + $0x90] sm:$0xff]
    %v2281 = vld [vmem:[%s3 + $0x98] sm:$0xff]
    %v2282 = vld [vmem:[%s3 + $0xa0] sm:$0xff]
    %v2283 = vld [vmem:[%s3 + $0xa8] sm:$0xff]
    %v2284 = vld [vmem:[%s3 + $0xb0] sm:$0xff]
    %v2285 = vld [vmem:[%s3 + $0xb8] sm:$0xff]
    %v2286 = vld [vmem:[%s3 + $0xc0] sm:$0xff]
    %v2287 = vld [vmem:[%s3 + $0xc8] sm:$0xff]
    %v2288 = vld [vmem:[%s3 + $0xd0] sm:$0xff]
    %v2289 = vld [vmem:[%s3 + $0xd8] sm:$0xff]
    %v2290 = vld [vmem:[%s3 + $0xe0] sm:$0xff]
    %v2291 = vld [vmem:[%s3 + $0xe8] sm:$0xff]
    %v2292 = vld [vmem:[%s3 + $0xf0] sm:$0xff]
    %v2293 = vld [vmem:[%s3 + $0xf8] sm:$0xff]
    %v2294 = vld [vmem:[%s3 + $0x100] sm:$0xff]
    %v2295 = vld [vmem:[%s3 + $0x108] sm:$0xff]
    %v2296 = vld [vmem:[%s3 + $0x110] sm:$0xff]
    %v2297 = vld [vmem:[%s3 + $0x118] sm:$0xff]
    %v2298 = vld [vmem:[%s3 + $0x120] sm:$0xff]
    %v2299 = vld [vmem:[%s3 + $0x128] sm:$0xff]
    %v2300 = vld [vmem:[%s3 + $0x130] sm:$0xff]
    %v2301 = vld [vmem:[%s3 + $0x138] sm:$0xff]
    %v2302 = vld [vmem:[%s3 + $0x140] sm:$0xff]
    %v2303 = vld [vmem:[%s3 + $0x148] sm:$0xff]
    %v2304 = vld [vmem:[%s3 + $0x150] sm:$0xff]
    %v2305 = vld [vmem:[%s3 + $0x158] sm:$0xff]
    %v2306 = vld [vmem:[%s3 + $0x160] sm:$0xff]
    %v2307 = vld [vmem:[%s3 + $0x168] sm:$0xff]
    %v2308 = vld [vmem:[%s3 + $0x170] sm:$0xff]
    %v2309 = vld [vmem:[%s3 + $0x178] sm:$0xff]
    %v2310 = vld [vmem:[%s3 + $0x180] sm:$0xff]
    %v2311 = vld [vmem:[%s3 + $0x188] sm:$0xff]
    %v2312 = vld [vmem:[%s3 + $0x190] sm:$0xff]
    %v2313 = vld [vmem:[%s3 + $0x198] sm:$0xff]
    %v2314 = vld [vmem:[%s3 + $0x1a0] sm:$0xff]
    %v2315 = vld [vmem:[%s3 + $0x1a8] sm:$0xff]
    %v2316 = vld [vmem:[%s3 + $0x1b0] sm:$0xff]
    %v2317 = vld [vmem:[%s3 + $0x1b8] sm:$0xff]
    %v2318 = vld [vmem:[%s3 + $0x1c0] sm:$0xff]
    %v2319 = vld [vmem:[%s3 + $0x1c8] sm:$0xff]
    %v2320 = vld [vmem:[%s3 + $0x1d0] sm:$0xff]
    %v2321 = vld [vmem:[%s3 + $0x1d8] sm:$0xff]
    %v2322 = vld [vmem:[%s3 + $0x1e0] sm:$0xff]
    %v2323 = vld [vmem:[%s3 + $0x1e8] sm:$0xff]
    %v2324 = vld [vmem:[%s3 + $0x1f0] sm:$0xff]
    %v2325 = vld [vmem:[%s3 + $0x1f8] sm:$0xff]
    %v2326 = vld [vmem:[%s3 + $0x200] sm:$0xff]
    %v2327 = vld [vmem:[%s3 + $0x208] sm:$0xff]
    %v2328 = vld [vmem:[%s3 + $0x210] sm:$0xff]
    %v2329 = vld [vmem:[%s3 + $0x218] sm:$0xff]
    %v2330 = vld [vmem:[%s3 + $0x220] sm:$0xff]
    %v2331 = vld [vmem:[%s3 + $0x228] sm:$0xff]
    %v2332 = vld [vmem:[%s3 + $0x230] sm:$0xff]
    %v2333 = vld [vmem:[%s3 + $0x238] sm:$0xff]
    %v2334 = vld [vmem:[%s3 + $0x240] sm:$0xff]
    %v2335 = vld [vmem:[%s3 + $0x248] sm:$0xff]
    %v2336 = vld [vmem:[%s3 + $0x250] sm:$0xff]
    %v2337 = vld [vmem:[%s3 + $0x258] sm:$0xff]
    %v2338 = vld [vmem:[%s3 + $0x260] sm:$0xff]
    %v2339 = vld [vmem:[%s3 + $0x268] sm:$0xff]
    %v2340 = vld [vmem:[%s3 + $0x270] sm:$0xff]
    %v2341 = vld [vmem:[%s3 + $0x278] sm:$0xff]
    %v2342 = vld [vmem:[%s3 + $0x280] sm:$0xff]
    %v2343 = vld [vmem:[%s3 + $0x288] sm:$0xff]
    %v2344 = vld [vmem:[%s3 + $0x290] sm:$0xff]
    %v2345 = vld [vmem:[%s3 + $0x298] sm:$0xff]
    %v2346 = vld [vmem:[%s3 + $0x2a0] sm:$0xff]
    %v2347 = vld [vmem:[%s3 + $0x2a8] sm:$0xff]
    %v2348 = vld [vmem:[%s3 + $0x2b0] sm:$0xff]
    %v2349 = vld [vmem:[%s3 + $0x2b8] sm:$0xff]
    %v2350 = vld [vmem:[%s3 + $0x2c0] sm:$0xff]
    %v2351 = vld [vmem:[%s3 + $0x2c8] sm:$0xff]
    %v2352 = vld [vmem:[%s3 + $0x2d0] sm:$0xff]
    %v2353 = vld [vmem:[%s3 + $0x2d8] sm:$0xff]
    %v2354 = vld [vmem:[%s3 + $0x2e0] sm:$0xff]
    %v2355 = vld [vmem:[%s3 + $0x2e8] sm:$0xff]
    %v2356 = vld [vmem:[%s3 + $0x2f0] sm:$0xff]
    %v2357 = vld [vmem:[%s3 + $0x2f8] sm:$0xff]
    %v2358 = vld [vmem:[%s3 + $0x300] sm:$0xff]
    %v2359 = vld [vmem:[%s3 + $0x308] sm:$0xff]
    %v2360 = vld [vmem:[%s3 + $0x310] sm:$0xff]
    %v2361 = vld [vmem:[%s3 + $0x318] sm:$0xff]
    %v2362 = vld [vmem:[%s3 + $0x320] sm:$0xff]
    %v2363 = vld [vmem:[%s3 + $0x328] sm:$0xff]
    %v2364 = vld [vmem:[%s3 + $0x330] sm:$0xff]
    %v2365 = vld [vmem:[%s3 + $0x338] sm:$0xff]
    %v2366 = vld [vmem:[%s3 + $0x340] sm:$0xff]
    %v2367 = vld [vmem:[%s3 + $0x348] sm:$0xff]
    %v2368 = vld [vmem:[%s3 + $0x350] sm:$0xff]
    %v2369 = vld [vmem:[%s3 + $0x358] sm:$0xff]
    %v2370 = vld [vmem:[%s3 + $0x360] sm:$0xff]
    %v2371 = vld [vmem:[%s3 + $0x368] sm:$0xff]
    %v2372 = vld [vmem:[%s3 + $0x370] sm:$0xff]
    %v2373 = vld [vmem:[%s3 + $0x378] sm:$0xff]
    %v2374 = vld [vmem:[%s3 + $0x380] sm:$0xff]
    %v2375 = vld [vmem:[%s3 + $0x388] sm:$0xff]
    %v2376 = vld [vmem:[%s3 + $0x390] sm:$0xff]
    %v2377 = vld [vmem:[%s3 + $0x398] sm:$0xff]
    %v2378 = vld [vmem:[%s3 + $0x3a0] sm:$0xff]
    %v2379 = vld [vmem:[%s3 + $0x3a8] sm:$0xff]
    %v2380 = vld [vmem:[%s3 + $0x3b0] sm:$0xff]
    %v2381 = vld [vmem:[%s3 + $0x3b8] sm:$0xff]
    %v2382 = vld [vmem:[%s3 + $0x3c0] sm:$0xff]
    %v2383 = vld [vmem:[%s3 + $0x3c8] sm:$0xff]
    %v2384 = vld [vmem:[%s3 + $0x3d0] sm:$0xff]
    %v2385 = vld [vmem:[%s3 + $0x3d8] sm:$0xff]
    %v2386 = vld [vmem:[%s3 + $0x3e0] sm:$0xff]
    %v2387 = vld [vmem:[%s3 + $0x3e8] sm:$0xff]
    %v2388 = vld [vmem:[%s3 + $0x3f0] sm:$0xff]
    %v2389 = vld [vmem:[%s3 + $0x3f8] sm:$0xff]
    %v2390 = vld [vmem:[%s3 + $0x400] sm:$0xff]
    %v2391 = vld [vmem:[%s3 + $0x408] sm:$0xff]
    %v2392 = vld [vmem:[%s3 + $0x410] sm:$0xff]
    %v2393 = vld [vmem:[%s3 + $0x418] sm:$0xff]
    %v2394 = vld [vmem:[%s3 + $0x420] sm:$0xff]
    %v2395 = vld [vmem:[%s3 + $0x428] sm:$0xff]
    %v2396 = vld [vmem:[%s3 + $0x430] sm:$0xff]
    %v2397 = vld [vmem:[%s3 + $0x438] sm:$0xff]
    %v2398 = vld [vmem:[%s3 + $0x440] sm:$0xff]
    %v2399 = vld [vmem:[%s3 + $0x448] sm:$0xff]
    %v2400 = vld [vmem:[%s3 + $0x450] sm:$0xff]
    %v2401 = vld [vmem:[%s3 + $0x458] sm:$0xff]
    %v2402 = vld [vmem:[%s3 + $0x460] sm:$0xff]
    %v2403 = vld [vmem:[%s3 + $0x468] sm:$0xff]
    %v2404 = vld [vmem:[%s3 + $0x470] sm:$0xff]
    %v2405 = vld [vmem:[%s3 + $0x478] sm:$0xff]
    %v2406 = vld [vmem:[%s3 + $0x480] sm:$0xff]
    %v2407 = vld [vmem:[%s3 + $0x488] sm:$0xff]
    %v2408 = vld [vmem:[%s3 + $0x490] sm:$0xff]
    %v2409 = vld [vmem:[%s3 + $0x498] sm:$0xff]
    %v2410 = vld [vmem:[%s3 + $0x4a0] sm:$0xff]
    %v2411 = vld [vmem:[%s3 + $0x4a8] sm:$0xff]
    %v2412 = vld [vmem:[%s3 + $0x4b0] sm:$0xff]
    %v2413 = vld [vmem:[%s3 + $0x4b8] sm:$0xff]
    %v2414 = vld [vmem:[%s3 + $0x4c0] sm:$0xff]
    %v2415 = vld [vmem:[%s3 + $0x4c8] sm:$0xff]
    %v2416 = vld [vmem:[%s3 + $0x4d0] sm:$0xff]
    %v2417 = vld [vmem:[%s3 + $0x4d8] sm:$0xff]
    %v2418 = vld [vmem:[%s3 + $0x4e0] sm:$0xff]
    %v2419 = vld [vmem:[%s3 + $0x4e8] sm:$0xff]
    %v2420 = vld [vmem:[%s3 + $0x4f0] sm:$0xff]
    %v2421 = vld [vmem:[%s3 + $0x4f8] sm:$0xff]
    %v2422 = vld [vmem:[%s3 + $0x500] sm:$0xff]
    %v2423 = vld [vmem:[%s3 + $0x508] sm:$0xff]
    %v2424 = vld [vmem:[%s3 + $0x510] sm:$0xff]
    %v2425 = vld [vmem:[%s3 + $0x518] sm:$0xff]
    %v2426 = vld [vmem:[%s3 + $0x520] sm:$0xff]
    %v2427 = vld [vmem:[%s3 + $0x528] sm:$0xff]
    %v2428 = vld [vmem:[%s3 + $0x530] sm:$0xff]
    %v2429 = vld [vmem:[%s3 + $0x538] sm:$0xff]
    %v2430 = vld [vmem:[%s3 + $0x540] sm:$0xff]
    %v2431 = vld [vmem:[%s3 + $0x548] sm:$0xff]
    %v2432 = vld [vmem:[%s3 + $0x550] sm:$0xff]
    %v2433 = vld [vmem:[%s3 + $0x558] sm:$0xff]
    %v2434 = vld [vmem:[%s3 + $0x560] sm:$0xff]
    %v2435 = vld [vmem:[%s3 + $0x568] sm:$0xff]
    %v2436 = vld [vmem:[%s3 + $0x570] sm:$0xff]
    %v2437 = vld [vmem:[%s3 + $0x578] sm:$0xff]
    %v2438 = vld [vmem:[%s3 + $0x580] sm:$0xff]
    %v2439 = vld [vmem:[%s3 + $0x588] sm:$0xff]
    %v2440 = vld [vmem:[%s3 + $0x590] sm:$0xff]
    %v2441 = vld [vmem:[%s3 + $0x598] sm:$0xff]
    %v2442 = vld [vmem:[%s3 + $0x5a0] sm:$0xff]
    %v2443 = vld [vmem:[%s3 + $0x5a8] sm:$0xff]
    %v2444 = vld [vmem:[%s3 + $0x5b0] sm:$0xff]
    %v2445 = vld [vmem:[%s3 + $0x5b8] sm:$0xff]
    %v2446 = vld [vmem:[%s3 + $0x5c0] sm:$0xff]
    %v2447 = vld [vmem:[%s3 + $0x5c8] sm:$0xff]
    %v2448 = vld [vmem:[%s3 + $0x5d0] sm:$0xff]
    %v2449 = vld [vmem:[%s3 + $0x5d8] sm:$0xff]
    %v2450 = vld [vmem:[%s3 + $0x5e0] sm:$0xff]
    %v2451 = vld [vmem:[%s3 + $0x5e8] sm:$0xff]
    %v2452 = vld [vmem:[%s3 + $0x5f0] sm:$0xff]
    %v2453 = vld [vmem:[%s3 + $0x5f8] sm:$0xff]
    %v2454 = vld [vmem:[%s3 + $0x600] sm:$0xff]
    %v2455 = vld [vmem:[%s3 + $0x608] sm:$0xff]
    %v2456 = vld [vmem:[%s3 + $0x610] sm:$0xff]
    %v2457 = vld [vmem:[%s3 + $0x618] sm:$0xff]
    %v2458 = vld [vmem:[%s3 + $0x620] sm:$0xff]
    %v2459 = vld [vmem:[%s3 + $0x628] sm:$0xff]
    %v2460 = vld [vmem:[%s3 + $0x630] sm:$0xff]
    %v2461 = vld [vmem:[%s3 + $0x638] sm:$0xff]
    %v2462 = vld [vmem:[%s3 + $0x640] sm:$0xff]
    %v2463 = vld [vmem:[%s3 + $0x648] sm:$0xff]
    %v2464 = vld [vmem:[%s3 + $0x650] sm:$0xff]
    %v2465 = vld [vmem:[%s3 + $0x658] sm:$0xff]
    %v2466 = vld [vmem:[%s3 + $0x660] sm:$0xff]
    %v2467 = vld [vmem:[%s3 + $0x668] sm:$0xff]
    %v2468 = vld [vmem:[%s3 + $0x670] sm:$0xff]
    %v2469 = vld [vmem:[%s3 + $0x678] sm:$0xff]
    %v2470 = vld [vmem:[%s3 + $0x680] sm:$0xff]
    %v2471 = vld [vmem:[%s3 + $0x688] sm:$0xff]
    %v2472 = vld [vmem:[%s3 + $0x690] sm:$0xff]
    %v2473 = vld [vmem:[%s3 + $0x698] sm:$0xff]
    %v2474 = vld [vmem:[%s3 + $0x6a0] sm:$0xff]
    %v2475 = vld [vmem:[%s3 + $0x6a8] sm:$0xff]
    %v2476 = vld [vmem:[%s3 + $0x6b0] sm:$0xff]
    %v2477 = vld [vmem:[%s3 + $0x6b8] sm:$0xff]
    %v2478 = vld [vmem:[%s3 + $0x6c0] sm:$0xff]
    %v2479 = vld [vmem:[%s3 + $0x6c8] sm:$0xff]
    %v2480 = vld [vmem:[%s3 + $0x6d0] sm:$0xff]
    %v2481 = vld [vmem:[%s3 + $0x6d8] sm:$0xff]
    %v2482 = vld [vmem:[%s3 + $0x6e0] sm:$0xff]
    %v2483 = vld [vmem:[%s3 + $0x6e8] sm:$0xff]
    %v2484 = vld [vmem:[%s3 + $0x6f0] sm:$0xff]
    %v2485 = vld [vmem:[%s3 + $0x6f8] sm:$0xff]
    %v2486 = vld [vmem:[%s3 + $0x700] sm:$0xff]
    %v2487 = vld [vmem:[%s3 + $0x708] sm:$0xff]
    %v2488 = vld [vmem:[%s3 + $0x710] sm:$0xff]
    %v2489 = vld [vmem:[%s3 + $0x718] sm:$0xff]
    %v2490 = vld [vmem:[%s3 + $0x720] sm:$0xff]
    %v2491 = vld [vmem:[%s3 + $0x728] sm:$0xff]
    %v2492 = vld [vmem:[%s3 + $0x730] sm:$0xff]
    %v2493 = vld [vmem:[%s3 + $0x738] sm:$0xff]
    %v2494 = vld [vmem:[%s3 + $0x740] sm:$0xff]
    %v2495 = vld [vmem:[%s3 + $0x748] sm:$0xff]
    %v2496 = vld [vmem:[%s3 + $0x750] sm:$0xff]
    %v2497 = vld [vmem:[%s3 + $0x758] sm:$0xff]
    %v2498 = vld [vmem:[%s3 + $0x760] sm:$0xff]
    %v2499 = vld [vmem:[%s3 + $0x768] sm:$0xff]
    %v2500 = vld [vmem:[%s3 + $0x770] sm:$0xff]
    %v2501 = vld [vmem:[%s3 + $0x778] sm:$0xff]
    %v2502 = vld [vmem:[%s3 + $0x780] sm:$0xff]
    %v2503 = vld [vmem:[%s3 + $0x788] sm:$0xff]
    %v2504 = vld [vmem:[%s3 + $0x790] sm:$0xff]
    %v2505 = vld [vmem:[%s3 + $0x798] sm:$0xff]
    %v2506 = vld [vmem:[%s3 + $0x7a0] sm:$0xff]
    %v2507 = vld [vmem:[%s3 + $0x7a8] sm:$0xff]
    %v2508 = vld [vmem:[%s3 + $0x7b0] sm:$0xff]
    %v2509 = vld [vmem:[%s3 + $0x7b8] sm:$0xff]
    %v2510 = vld [vmem:[%s3 + $0x7c0] sm:$0xff]
    %v2511 = vld [vmem:[%s3 + $0x7c8] sm:$0xff]
    %v2512 = vld [vmem:[%s3 + $0x7d0] sm:$0xff]
    %v2513 = vld [vmem:[%s3 + $0x7d8] sm:$0xff]
    %v2514 = vld [vmem:[%s3 + $0x7e0] sm:$0xff]
    %v2515 = vld [vmem:[%s3 + $0x7e8] sm:$0xff]
    %v2516 = vld [vmem:[%s3 + $0x7f0] sm:$0xff]
    %v2517 = vld [vmem:[%s3 + $0x7f8] sm:$0xff]
    %v2518 = vld [vmem:[%s4] sm:$0xff]
    %v2519 = vld [vmem:[%s4 + $0x8] sm:$0xff]
    %v2520 = vld [vmem:[%s4 + $0x10] sm:$0xff]
    %v2521 = vld [vmem:[%s4 + $0x18] sm:$0xff]
    %v2522 = vld [vmem:[%s4 + $0x20] sm:$0xff]
    %v2523 = vld [vmem:[%s4 + $0x28] sm:$0xff]
    %v2524 = vld [vmem:[%s4 + $0x30] sm:$0xff]
    %v2525 = vld [vmem:[%s4 + $0x38] sm:$0xff]
    %v2526 = vld [vmem:[%s4 + $0x40] sm:$0xff]
    %v2527 = vld [vmem:[%s4 + $0x48] sm:$0xff]
    %v2528 = vld [vmem:[%s4 + $0x50] sm:$0xff]
    %v2529 = vld [vmem:[%s4 + $0x58] sm:$0xff]
    %v2530 = vld [vmem:[%s4 + $0x60] sm:$0xff]
    %v2531 = vld [vmem:[%s4 + $0x68] sm:$0xff]
    %v2532 = vld [vmem:[%s4 + $0x70] sm:$0xff]
    %v2533 = vld [vmem:[%s4 + $0x78] sm:$0xff]
    %v2534 = vld [vmem:[%s4 + $0x80] sm:$0xff]
    %v2535 = vld [vmem:[%s4 + $0x88] sm:$0xff]
    %v2536 = vld [vmem:[%s4 + $0x90] sm:$0xff]
    %v2537 = vld [vmem:[%s4 + $0x98] sm:$0xff]
    %v2538 = vld [vmem:[%s4 + $0xa0] sm:$0xff]
    %v2539 = vld [vmem:[%s4 + $0xa8] sm:$0xff]
    %v2540 = vld [vmem:[%s4 + $0xb0] sm:$0xff]
    %v2541 = vld [vmem:[%s4 + $0xb8] sm:$0xff]
    %v2542 = vld [vmem:[%s4 + $0xc0] sm:$0xff]
    %v2543 = vld [vmem:[%s4 + $0xc8] sm:$0xff]
    %v2544 = vld [vmem:[%s4 + $0xd0] sm:$0xff]
    %v2545 = vld [vmem:[%s4 + $0xd8] sm:$0xff]
    %v2546 = vld [vmem:[%s4 + $0xe0] sm:$0xff]
    %v2547 = vld [vmem:[%s4 + $0xe8] sm:$0xff]
    %v2548 = vld [vmem:[%s4 + $0xf0] sm:$0xff]
    %v2549 = vld [vmem:[%s4 + $0xf8] sm:$0xff]
    %v2550 = vld [vmem:[%s4 + $0x100] sm:$0xff]
    %v2551 = vld [vmem:[%s4 + $0x108] sm:$0xff]
    %v2552 = vld [vmem:[%s4 + $0x110] sm:$0xff]
    %v2553 = vld [vmem:[%s4 + $0x118] sm:$0xff]
    %v2554 = vld [vmem:[%s4 + $0x120] sm:$0xff]
    %v2555 = vld [vmem:[%s4 + $0x128] sm:$0xff]
    %v2556 = vld [vmem:[%s4 + $0x130] sm:$0xff]
    %v2557 = vld [vmem:[%s4 + $0x138] sm:$0xff]
    %v2558 = vld [vmem:[%s4 + $0x140] sm:$0xff]
    %v2559 = vld [vmem:[%s4 + $0x148] sm:$0xff]
    %v2560 = vld [vmem:[%s4 + $0x150] sm:$0xff]
    %v2561 = vld [vmem:[%s4 + $0x158] sm:$0xff]
    %v2562 = vld [vmem:[%s4 + $0x160] sm:$0xff]
    %v2563 = vld [vmem:[%s4 + $0x168] sm:$0xff]
    %v2564 = vld [vmem:[%s4 + $0x170] sm:$0xff]
    %v2565 = vld [vmem:[%s4 + $0x178] sm:$0xff]
    %v2566 = vld [vmem:[%s4 + $0x180] sm:$0xff]
    %v2567 = vld [vmem:[%s4 + $0x188] sm:$0xff]
    %v2568 = vld [vmem:[%s4 + $0x190] sm:$0xff]
    %v2569 = vld [vmem:[%s4 + $0x198] sm:$0xff]
    %v2570 = vld [vmem:[%s4 + $0x1a0] sm:$0xff]
    %v2571 = vld [vmem:[%s4 + $0x1a8] sm:$0xff]
    %v2572 = vld [vmem:[%s4 + $0x1b0] sm:$0xff]
    %v2573 = vld [vmem:[%s4 + $0x1b8] sm:$0xff]
    %v2574 = vld [vmem:[%s4 + $0x1c0] sm:$0xff]
    %v2575 = vld [vmem:[%s4 + $0x1c8] sm:$0xff]
    %v2576 = vld [vmem:[%s4 + $0x1d0] sm:$0xff]
    %v2577 = vld [vmem:[%s4 + $0x1d8] sm:$0xff]
    %v2578 = vld [vmem:[%s4 + $0x1e0] sm:$0xff]
    %v2579 = vld [vmem:[%s4 + $0x1e8] sm:$0xff]
    %v2580 = vld [vmem:[%s4 + $0x1f0] sm:$0xff]
    %v2581 = vld [vmem:[%s4 + $0x1f8] sm:$0xff]
    %2583 = vset.pattern.permute.xlu0 0
    %2584 = vperm.xlu0 %2583, %v2518
    %v2585 = vpop.permute.xlu0 %2584
    %2588 = vset.pattern.permute.xlu0 0
    %2589 = vperm.xlu0 %2588, %v2519
    %v2590 = vpop.permute.xlu0 %2589
    %2593 = vset.pattern.permute.xlu0 0
    %2594 = vperm.xlu0 %2593, %v2520
    %v2595 = vpop.permute.xlu0 %2594
    %2598 = vset.pattern.permute.xlu0 0
    %2599 = vperm.xlu0 %2598, %v2521
    %v2600 = vpop.permute.xlu0 %2599
    %2603 = vset.pattern.permute.xlu0 0
    %2604 = vperm.xlu0 %2603, %v2522
    %v2605 = vpop.permute.xlu0 %2604
    %2608 = vset.pattern.permute.xlu0 0
    %2609 = vperm.xlu0 %2608, %v2523
    %v2610 = vpop.permute.xlu0 %2609
    %2613 = vset.pattern.permute.xlu0 0
    %2614 = vperm.xlu0 %2613, %v2524
    %v2615 = vpop.permute.xlu0 %2614
    %2618 = vset.pattern.permute.xlu0 0
    %2619 = vperm.xlu0 %2618, %v2525
    %v2620 = vpop.permute.xlu0 %2619
    %2623 = vset.pattern.permute.xlu0 0
    %2624 = vperm.xlu0 %2623, %v2526
    %v2625 = vpop.permute.xlu0 %2624
    %2628 = vset.pattern.permute.xlu0 0
    %2629 = vperm.xlu0 %2628, %v2527
    %v2630 = vpop.permute.xlu0 %2629
    %2633 = vset.pattern.permute.xlu0 0
    %2634 = vperm.xlu0 %2633, %v2528
    %v2635 = vpop.permute.xlu0 %2634
    %2638 = vset.pattern.permute.xlu0 0
    %2639 = vperm.xlu0 %2638, %v2529
    %v2640 = vpop.permute.xlu0 %2639
    %2643 = vset.pattern.permute.xlu0 0
    %2644 = vperm.xlu0 %2643, %v2530
    %v2645 = vpop.permute.xlu0 %2644
    %2648 = vset.pattern.permute.xlu0 0
    %2649 = vperm.xlu0 %2648, %v2531
    %v2650 = vpop.permute.xlu0 %2649
    %2653 = vset.pattern.permute.xlu0 0
    %2654 = vperm.xlu0 %2653, %v2532
    %v2655 = vpop.permute.xlu0 %2654
    %2658 = vset.pattern.permute.xlu0 0
    %2659 = vperm.xlu0 %2658, %v2533
    %v2660 = vpop.permute.xlu0 %2659
    %2663 = vset.pattern.permute.xlu0 0
    %2664 = vperm.xlu0 %2663, %v2534
    %v2665 = vpop.permute.xlu0 %2664
    %2668 = vset.pattern.permute.xlu0 0
    %2669 = vperm.xlu0 %2668, %v2535
    %v2670 = vpop.permute.xlu0 %2669
    %2673 = vset.pattern.permute.xlu0 0
    %2674 = vperm.xlu0 %2673, %v2536
    %v2675 = vpop.permute.xlu0 %2674
    %2678 = vset.pattern.permute.xlu0 0
    %2679 = vperm.xlu0 %2678, %v2537
    %v2680 = vpop.permute.xlu0 %2679
    %2683 = vset.pattern.permute.xlu0 0
    %2684 = vperm.xlu0 %2683, %v2538
    %v2685 = vpop.permute.xlu0 %2684
    %2688 = vset.pattern.permute.xlu0 0
    %2689 = vperm.xlu0 %2688, %v2539
    %v2690 = vpop.permute.xlu0 %2689
    %2693 = vset.pattern.permute.xlu0 0
    %2694 = vperm.xlu0 %2693, %v2540
    %v2695 = vpop.permute.xlu0 %2694
    %2698 = vset.pattern.permute.xlu0 0
    %2699 = vperm.xlu0 %2698, %v2541
    %v2700 = vpop.permute.xlu0 %2699
    %2703 = vset.pattern.permute.xlu0 0
    %2704 = vperm.xlu0 %2703, %v2542
    %v2705 = vpop.permute.xlu0 %2704
    %2708 = vset.pattern.permute.xlu0 0
    %2709 = vperm.xlu0 %2708, %v2543
    %v2710 = vpop.permute.xlu0 %2709
    %2713 = vset.pattern.permute.xlu0 0
    %2714 = vperm.xlu0 %2713, %v2544
    %v2715 = vpop.permute.xlu0 %2714
    %2718 = vset.pattern.permute.xlu0 0
    %2719 = vperm.xlu0 %2718, %v2545
    %v2720 = vpop.permute.xlu0 %2719
    %2723 = vset.pattern.permute.xlu0 0
    %2724 = vperm.xlu0 %2723, %v2546
    %v2725 = vpop.permute.xlu0 %2724
    %2728 = vset.pattern.permute.xlu0 0
    %2729 = vperm.xlu0 %2728, %v2547
    %v2730 = vpop.permute.xlu0 %2729
    %2733 = vset.pattern.permute.xlu0 0
    %2734 = vperm.xlu0 %2733, %v2548
    %v2735 = vpop.permute.xlu0 %2734
    %2738 = vset.pattern.permute.xlu0 0
    %2739 = vperm.xlu0 %2738, %v2549
    %v2740 = vpop.permute.xlu0 %2739
    %2743 = vset.pattern.permute.xlu0 0
    %2744 = vperm.xlu0 %2743, %v2550
    %v2745 = vpop.permute.xlu0 %2744
    %2748 = vset.pattern.permute.xlu0 0
    %2749 = vperm.xlu0 %2748, %v2551
    %v2750 = vpop.permute.xlu0 %2749
    %2753 = vset.pattern.permute.xlu0 0
    %2754 = vperm.xlu0 %2753, %v2552
    %v2755 = vpop.permute.xlu0 %2754
    %2758 = vset.pattern.permute.xlu0 0
    %2759 = vperm.xlu0 %2758, %v2553
    %v2760 = vpop.permute.xlu0 %2759
    %2763 = vset.pattern.permute.xlu0 0
    %2764 = vperm.xlu0 %2763, %v2554
    %v2765 = vpop.permute.xlu0 %2764
    %2768 = vset.pattern.permute.xlu0 0
    %2769 = vperm.xlu0 %2768, %v2555
    %v2770 = vpop.permute.xlu0 %2769
    %2773 = vset.pattern.permute.xlu0 0
    %2774 = vperm.xlu0 %2773, %v2556
    %v2775 = vpop.permute.xlu0 %2774
    %2778 = vset.pattern.permute.xlu0 0
    %2779 = vperm.xlu0 %2778, %v2557
    %v2780 = vpop.permute.xlu0 %2779
    %2783 = vset.pattern.permute.xlu0 0
    %2784 = vperm.xlu0 %2783, %v2558
    %v2785 = vpop.permute.xlu0 %2784
    %2788 = vset.pattern.permute.xlu0 0
    %2789 = vperm.xlu0 %2788, %v2559
    %v2790 = vpop.permute.xlu0 %2789
    %2793 = vset.pattern.permute.xlu0 0
    %2794 = vperm.xlu0 %2793, %v2560
    %v2795 = vpop.permute.xlu0 %2794
    %2798 = vset.pattern.permute.xlu0 0
    %2799 = vperm.xlu0 %2798, %v2561
    %v2800 = vpop.permute.xlu0 %2799
    %2803 = vset.pattern.permute.xlu0 0
    %2804 = vperm.xlu0 %2803, %v2562
    %v2805 = vpop.permute.xlu0 %2804
    %2808 = vset.pattern.permute.xlu0 0
    %2809 = vperm.xlu0 %2808, %v2563
    %v2810 = vpop.permute.xlu0 %2809
    %2813 = vset.pattern.permute.xlu0 0
    %2814 = vperm.xlu0 %2813, %v2564
    %v2815 = vpop.permute.xlu0 %2814
    %2818 = vset.pattern.permute.xlu0 0
    %2819 = vperm.xlu0 %2818, %v2565
    %v2820 = vpop.permute.xlu0 %2819
    %2823 = vset.pattern.permute.xlu0 0
    %2824 = vperm.xlu0 %2823, %v2566
    %v2825 = vpop.permute.xlu0 %2824
    %2828 = vset.pattern.permute.xlu0 0
    %2829 = vperm.xlu0 %2828, %v2567
    %v2830 = vpop.permute.xlu0 %2829
    %2833 = vset.pattern.permute.xlu0 0
    %2834 = vperm.xlu0 %2833, %v2568
    %v2835 = vpop.permute.xlu0 %2834
    %2838 = vset.pattern.permute.xlu0 0
    %2839 = vperm.xlu0 %2838, %v2569
    %v2840 = vpop.permute.xlu0 %2839
    %2843 = vset.pattern.permute.xlu0 0
    %2844 = vperm.xlu0 %2843, %v2570
    %v2845 = vpop.permute.xlu0 %2844
    %2848 = vset.pattern.permute.xlu0 0
    %2849 = vperm.xlu0 %2848, %v2571
    %v2850 = vpop.permute.xlu0 %2849
    %2853 = vset.pattern.permute.xlu0 0
    %2854 = vperm.xlu0 %2853, %v2572
    %v2855 = vpop.permute.xlu0 %2854
    %2858 = vset.pattern.permute.xlu0 0
    %2859 = vperm.xlu0 %2858, %v2573
    %v2860 = vpop.permute.xlu0 %2859
    %2863 = vset.pattern.permute.xlu0 0
    %2864 = vperm.xlu0 %2863, %v2574
    %v2865 = vpop.permute.xlu0 %2864
    %2868 = vset.pattern.permute.xlu0 0
    %2869 = vperm.xlu0 %2868, %v2575
    %v2870 = vpop.permute.xlu0 %2869
    %2873 = vset.pattern.permute.xlu0 0
    %2874 = vperm.xlu0 %2873, %v2576
    %v2875 = vpop.permute.xlu0 %2874
    %2878 = vset.pattern.permute.xlu0 0
    %2879 = vperm.xlu0 %2878, %v2577
    %v2880 = vpop.permute.xlu0 %2879
    %2883 = vset.pattern.permute.xlu0 0
    %2884 = vperm.xlu0 %2883, %v2578
    %v2885 = vpop.permute.xlu0 %2884
    %2888 = vset.pattern.permute.xlu0 0
    %2889 = vperm.xlu0 %2888, %v2579
    %v2890 = vpop.permute.xlu0 %2889
    %2893 = vset.pattern.permute.xlu0 0
    %2894 = vperm.xlu0 %2893, %v2580
    %v2895 = vpop.permute.xlu0 %2894
    %2898 = vset.pattern.permute.xlu0 0
    %2899 = vperm.xlu0 %2898, %v2581
    %v2900 = vpop.permute.xlu0 %2899
    %v3158 = vunpack.c.l.b16 %v2262
    %v3159 = vunpack.c.h.b16 %v2262
    %v3160 = vunpack.c.l.b16 %v2263
    %v3161 = vunpack.c.h.b16 %v2263
    %v3162 = vunpack.c.l.b16 %v2264
    %v3163 = vunpack.c.h.b16 %v2264
    %v3164 = vunpack.c.l.b16 %v2265
    %v3165 = vunpack.c.h.b16 %v2265
    %v3166 = vunpack.c.l.b16 %v2266
    %v3167 = vunpack.c.h.b16 %v2266
    %v3168 = vunpack.c.l.b16 %v2267
    %v3169 = vunpack.c.h.b16 %v2267
    %v3170 = vunpack.c.l.b16 %v2268
    %v3171 = vunpack.c.h.b16 %v2268
    %v3172 = vunpack.c.l.b16 %v2269
    %v3173 = vunpack.c.h.b16 %v2269
    %v3174 = vunpack.c.l.b16 %v2270
    %v3175 = vunpack.c.h.b16 %v2270
    %v3176 = vunpack.c.l.b16 %v2271
    %v3177 = vunpack.c.h.b16 %v2271
    %v3178 = vunpack.c.l.b16 %v2272
    %v3179 = vunpack.c.h.b16 %v2272
    %v3180 = vunpack.c.l.b16 %v2273
    %v3181 = vunpack.c.h.b16 %v2273
    %v3182 = vunpack.c.l.b16 %v2274
    %v3183 = vunpack.c.h.b16 %v2274
    %v3184 = vunpack.c.l.b16 %v2275
    %v3185 = vunpack.c.h.b16 %v2275
    %v3186 = vunpack.c.l.b16 %v2276
    %v3187 = vunpack.c.h.b16 %v2276
    %v3188 = vunpack.c.l.b16 %v2277
    %v3189 = vunpack.c.h.b16 %v2277
    %v3190 = vunpack.c.l.b16 %v2278
    %v3191 = vunpack.c.h.b16 %v2278
    %v3192 = vunpack.c.l.b16 %v2279
    %v3193 = vunpack.c.h.b16 %v2279
    %v3194 = vunpack.c.l.b16 %v2280
    %v3195 = vunpack.c.h.b16 %v2280
    %v3196 = vunpack.c.l.b16 %v2281
    %v3197 = vunpack.c.h.b16 %v2281
    %v3198 = vunpack.c.l.b16 %v2282
    %v3199 = vunpack.c.h.b16 %v2282
    %v3200 = vunpack.c.l.b16 %v2283
    %v3201 = vunpack.c.h.b16 %v2283
    %v3202 = vunpack.c.l.b16 %v2284
    %v3203 = vunpack.c.h.b16 %v2284
    %v3204 = vunpack.c.l.b16 %v2285
    %v3205 = vunpack.c.h.b16 %v2285
    %v3206 = vunpack.c.l.b16 %v2286
    %v3207 = vunpack.c.h.b16 %v2286
    %v3208 = vunpack.c.l.b16 %v2287
    %v3209 = vunpack.c.h.b16 %v2287
    %v3210 = vunpack.c.l.b16 %v2288
    %v3211 = vunpack.c.h.b16 %v2288
    %v3212 = vunpack.c.l.b16 %v2289
    %v3213 = vunpack.c.h.b16 %v2289
    %v3214 = vunpack.c.l.b16 %v2290
    %v3215 = vunpack.c.h.b16 %v2290
    %v3216 = vunpack.c.l.b16 %v2291
    %v3217 = vunpack.c.h.b16 %v2291
    %v3218 = vunpack.c.l.b16 %v2292
    %v3219 = vunpack.c.h.b16 %v2292
    %v3220 = vunpack.c.l.b16 %v2293
    %v3221 = vunpack.c.h.b16 %v2293
    %v3222 = vunpack.c.l.b16 %v2294
    %v3223 = vunpack.c.h.b16 %v2294
    %v3224 = vunpack.c.l.b16 %v2295
    %v3225 = vunpack.c.h.b16 %v2295
    %v3226 = vunpack.c.l.b16 %v2296
    %v3227 = vunpack.c.h.b16 %v2296
    %v3228 = vunpack.c.l.b16 %v2297
    %v3229 = vunpack.c.h.b16 %v2297
    %v3230 = vunpack.c.l.b16 %v2298
    %v3231 = vunpack.c.h.b16 %v2298
    %v3232 = vunpack.c.l.b16 %v2299
    %v3233 = vunpack.c.h.b16 %v2299
    %v3234 = vunpack.c.l.b16 %v2300
    %v3235 = vunpack.c.h.b16 %v2300
    %v3236 = vunpack.c.l.b16 %v2301
    %v3237 = vunpack.c.h.b16 %v2301
    %v3238 = vunpack.c.l.b16 %v2302
    %v3239 = vunpack.c.h.b16 %v2302
    %v3240 = vunpack.c.l.b16 %v2303
    %v3241 = vunpack.c.h.b16 %v2303
    %v3242 = vunpack.c.l.b16 %v2304
    %v3243 = vunpack.c.h.b16 %v2304
    %v3244 = vunpack.c.l.b16 %v2305
    %v3245 = vunpack.c.h.b16 %v2305
    %v3246 = vunpack.c.l.b16 %v2306
    %v3247 = vunpack.c.h.b16 %v2306
    %v3248 = vunpack.c.l.b16 %v2307
    %v3249 = vunpack.c.h.b16 %v2307
    %v3250 = vunpack.c.l.b16 %v2308
    %v3251 = vunpack.c.h.b16 %v2308
    %v3252 = vunpack.c.l.b16 %v2309
    %v3253 = vunpack.c.h.b16 %v2309
    %v3254 = vunpack.c.l.b16 %v2310
    %v3255 = vunpack.c.h.b16 %v2310
    %v3256 = vunpack.c.l.b16 %v2311
    %v3257 = vunpack.c.h.b16 %v2311
    %v3258 = vunpack.c.l.b16 %v2312
    %v3259 = vunpack.c.h.b16 %v2312
    %v3260 = vunpack.c.l.b16 %v2313
    %v3261 = vunpack.c.h.b16 %v2313
    %v3262 = vunpack.c.l.b16 %v2314
    %v3263 = vunpack.c.h.b16 %v2314
    %v3264 = vunpack.c.l.b16 %v2315
    %v3265 = vunpack.c.h.b16 %v2315
    %v3266 = vunpack.c.l.b16 %v2316
    %v3267 = vunpack.c.h.b16 %v2316
    %v3268 = vunpack.c.l.b16 %v2317
    %v3269 = vunpack.c.h.b16 %v2317
    %v3270 = vunpack.c.l.b16 %v2318
    %v3271 = vunpack.c.h.b16 %v2318
    %v3272 = vunpack.c.l.b16 %v2319
    %v3273 = vunpack.c.h.b16 %v2319
    %v3274 = vunpack.c.l.b16 %v2320
    %v3275 = vunpack.c.h.b16 %v2320
    %v3276 = vunpack.c.l.b16 %v2321
    %v3277 = vunpack.c.h.b16 %v2321
    %v3278 = vunpack.c.l.b16 %v2322
    %v3279 = vunpack.c.h.b16 %v2322
    %v3280 = vunpack.c.l.b16 %v2323
    %v3281 = vunpack.c.h.b16 %v2323
    %v3282 = vunpack.c.l.b16 %v2324
    %v3283 = vunpack.c.h.b16 %v2324
    %v3284 = vunpack.c.l.b16 %v2325
    %v3285 = vunpack.c.h.b16 %v2325
    %v3286 = vunpack.c.l.b16 %v2326
    %v3287 = vunpack.c.h.b16 %v2326
    %v3288 = vunpack.c.l.b16 %v2327
    %v3289 = vunpack.c.h.b16 %v2327
    %v3290 = vunpack.c.l.b16 %v2328
    %v3291 = vunpack.c.h.b16 %v2328
    %v3292 = vunpack.c.l.b16 %v2329
    %v3293 = vunpack.c.h.b16 %v2329
    %v3294 = vunpack.c.l.b16 %v2330
    %v3295 = vunpack.c.h.b16 %v2330
    %v3296 = vunpack.c.l.b16 %v2331
    %v3297 = vunpack.c.h.b16 %v2331
    %v3298 = vunpack.c.l.b16 %v2332
    %v3299 = vunpack.c.h.b16 %v2332
    %v3300 = vunpack.c.l.b16 %v2333
    %v3301 = vunpack.c.h.b16 %v2333
    %v3302 = vunpack.c.l.b16 %v2334
    %v3303 = vunpack.c.h.b16 %v2334
    %v3304 = vunpack.c.l.b16 %v2335
    %v3305 = vunpack.c.h.b16 %v2335
    %v3306 = vunpack.c.l.b16 %v2336
    %v3307 = vunpack.c.h.b16 %v2336
    %v3308 = vunpack.c.l.b16 %v2337
    %v3309 = vunpack.c.h.b16 %v2337
    %v3310 = vunpack.c.l.b16 %v2338
    %v3311 = vunpack.c.h.b16 %v2338
    %v3312 = vunpack.c.l.b16 %v2339
    %v3313 = vunpack.c.h.b16 %v2339
    %v3314 = vunpack.c.l.b16 %v2340
    %v3315 = vunpack.c.h.b16 %v2340
    %v3316 = vunpack.c.l.b16 %v2341
    %v3317 = vunpack.c.h.b16 %v2341
    %v3318 = vunpack.c.l.b16 %v2342
    %v3319 = vunpack.c.h.b16 %v2342
    %v3320 = vunpack.c.l.b16 %v2343
    %v3321 = vunpack.c.h.b16 %v2343
    %v3322 = vunpack.c.l.b16 %v2344
    %v3323 = vunpack.c.h.b16 %v2344
    %v3324 = vunpack.c.l.b16 %v2345
    %v3325 = vunpack.c.h.b16 %v2345
    %v3326 = vunpack.c.l.b16 %v2346
    %v3327 = vunpack.c.h.b16 %v2346
    %v3328 = vunpack.c.l.b16 %v2347
    %v3329 = vunpack.c.h.b16 %v2347
    %v3330 = vunpack.c.l.b16 %v2348
    %v3331 = vunpack.c.h.b16 %v2348
    %v3332 = vunpack.c.l.b16 %v2349
    %v3333 = vunpack.c.h.b16 %v2349
    %v3334 = vunpack.c.l.b16 %v2350
    %v3335 = vunpack.c.h.b16 %v2350
    %v3336 = vunpack.c.l.b16 %v2351
    %v3337 = vunpack.c.h.b16 %v2351
    %v3338 = vunpack.c.l.b16 %v2352
    %v3339 = vunpack.c.h.b16 %v2352
    %v3340 = vunpack.c.l.b16 %v2353
    %v3341 = vunpack.c.h.b16 %v2353
    %v3342 = vunpack.c.l.b16 %v2354
    %v3343 = vunpack.c.h.b16 %v2354
    %v3344 = vunpack.c.l.b16 %v2355
    %v3345 = vunpack.c.h.b16 %v2355
    %v3346 = vunpack.c.l.b16 %v2356
    %v3347 = vunpack.c.h.b16 %v2356
    %v3348 = vunpack.c.l.b16 %v2357
    %v3349 = vunpack.c.h.b16 %v2357
    %v3350 = vunpack.c.l.b16 %v2358
    %v3351 = vunpack.c.h.b16 %v2358
    %v3352 = vunpack.c.l.b16 %v2359
    %v3353 = vunpack.c.h.b16 %v2359
    %v3354 = vunpack.c.l.b16 %v2360
    %v3355 = vunpack.c.h.b16 %v2360
    %v3356 = vunpack.c.l.b16 %v2361
    %v3357 = vunpack.c.h.b16 %v2361
    %v3358 = vunpack.c.l.b16 %v2362
    %v3359 = vunpack.c.h.b16 %v2362
    %v3360 = vunpack.c.l.b16 %v2363
    %v3361 = vunpack.c.h.b16 %v2363
    %v3362 = vunpack.c.l.b16 %v2364
    %v3363 = vunpack.c.h.b16 %v2364
    %v3364 = vunpack.c.l.b16 %v2365
    %v3365 = vunpack.c.h.b16 %v2365
    %v3366 = vunpack.c.l.b16 %v2366
    %v3367 = vunpack.c.h.b16 %v2366
    %v3368 = vunpack.c.l.b16 %v2367
    %v3369 = vunpack.c.h.b16 %v2367
    %v3370 = vunpack.c.l.b16 %v2368
    %v3371 = vunpack.c.h.b16 %v2368
    %v3372 = vunpack.c.l.b16 %v2369
    %v3373 = vunpack.c.h.b16 %v2369
    %v3374 = vunpack.c.l.b16 %v2370
    %v3375 = vunpack.c.h.b16 %v2370
    %v3376 = vunpack.c.l.b16 %v2371
    %v3377 = vunpack.c.h.b16 %v2371
    %v3378 = vunpack.c.l.b16 %v2372
    %v3379 = vunpack.c.h.b16 %v2372
    %v3380 = vunpack.c.l.b16 %v2373
    %v3381 = vunpack.c.h.b16 %v2373
    %v3382 = vunpack.c.l.b16 %v2374
    %v3383 = vunpack.c.h.b16 %v2374
    %v3384 = vunpack.c.l.b16 %v2375
    %v3385 = vunpack.c.h.b16 %v2375
    %v3386 = vunpack.c.l.b16 %v2376
    %v3387 = vunpack.c.h.b16 %v2376
    %v3388 = vunpack.c.l.b16 %v2377
    %v3389 = vunpack.c.h.b16 %v2377
    %v3390 = vunpack.c.l.b16 %v2378
    %v3391 = vunpack.c.h.b16 %v2378
    %v3392 = vunpack.c.l.b16 %v2379
    %v3393 = vunpack.c.h.b16 %v2379
    %v3394 = vunpack.c.l.b16 %v2380
    %v3395 = vunpack.c.h.b16 %v2380
    %v3396 = vunpack.c.l.b16 %v2381
    %v3397 = vunpack.c.h.b16 %v2381
    %v3398 = vunpack.c.l.b16 %v2382
    %v3399 = vunpack.c.h.b16 %v2382
    %v3400 = vunpack.c.l.b16 %v2383
    %v3401 = vunpack.c.h.b16 %v2383
    %v3402 = vunpack.c.l.b16 %v2384
    %v3403 = vunpack.c.h.b16 %v2384
    %v3404 = vunpack.c.l.b16 %v2385
    %v3405 = vunpack.c.h.b16 %v2385
    %v3406 = vunpack.c.l.b16 %v2386
    %v3407 = vunpack.c.h.b16 %v2386
    %v3408 = vunpack.c.l.b16 %v2387
    %v3409 = vunpack.c.h.b16 %v2387
    %v3410 = vunpack.c.l.b16 %v2388
    %v3411 = vunpack.c.h.b16 %v2388
    %v3412 = vunpack.c.l.b16 %v2389
    %v3413 = vunpack.c.h.b16 %v2389
    %v3414 = vunpack.c.l.b16 %v2390
    %v3415 = vunpack.c.h.b16 %v2390
    %v3416 = vunpack.c.l.b16 %v2391
    %v3417 = vunpack.c.h.b16 %v2391
    %v3418 = vunpack.c.l.b16 %v2392
    %v3419 = vunpack.c.h.b16 %v2392
    %v3420 = vunpack.c.l.b16 %v2393
    %v3421 = vunpack.c.h.b16 %v2393
    %v3422 = vunpack.c.l.b16 %v2394
    %v3423 = vunpack.c.h.b16 %v2394
    %v3424 = vunpack.c.l.b16 %v2395
    %v3425 = vunpack.c.h.b16 %v2395
    %v3426 = vunpack.c.l.b16 %v2396
    %v3427 = vunpack.c.h.b16 %v2396
    %v3428 = vunpack.c.l.b16 %v2397
    %v3429 = vunpack.c.h.b16 %v2397
    %v3430 = vunpack.c.l.b16 %v2398
    %v3431 = vunpack.c.h.b16 %v2398
    %v3432 = vunpack.c.l.b16 %v2399
    %v3433 = vunpack.c.h.b16 %v2399
    %v3434 = vunpack.c.l.b16 %v2400
    %v3435 = vunpack.c.h.b16 %v2400
    %v3436 = vunpack.c.l.b16 %v2401
    %v3437 = vunpack.c.h.b16 %v2401
    %v3438 = vunpack.c.l.b16 %v2402
    %v3439 = vunpack.c.h.b16 %v2402
    %v3440 = vunpack.c.l.b16 %v2403
    %v3441 = vunpack.c.h.b16 %v2403
    %v3442 = vunpack.c.l.b16 %v2404
    %v3443 = vunpack.c.h.b16 %v2404
    %v3444 = vunpack.c.l.b16 %v2405
    %v3445 = vunpack.c.h.b16 %v2405
    %v3446 = vunpack.c.l.b16 %v2406
    %v3447 = vunpack.c.h.b16 %v2406
    %v3448 = vunpack.c.l.b16 %v2407
    %v3449 = vunpack.c.h.b16 %v2407
    %v3450 = vunpack.c.l.b16 %v2408
    %v3451 = vunpack.c.h.b16 %v2408
    %v3452 = vunpack.c.l.b16 %v2409
    %v3453 = vunpack.c.h.b16 %v2409
    %v3454 = vunpack.c.l.b16 %v2410
    %v3455 = vunpack.c.h.b16 %v2410
    %v3456 = vunpack.c.l.b16 %v2411
    %v3457 = vunpack.c.h.b16 %v2411
    %v3458 = vunpack.c.l.b16 %v2412
    %v3459 = vunpack.c.h.b16 %v2412
    %v3460 = vunpack.c.l.b16 %v2413
    %v3461 = vunpack.c.h.b16 %v2413
    %v3462 = vunpack.c.l.b16 %v2414
    %v3463 = vunpack.c.h.b16 %v2414
    %v3464 = vunpack.c.l.b16 %v2415
    %v3465 = vunpack.c.h.b16 %v2415
    %v3466 = vunpack.c.l.b16 %v2416
    %v3467 = vunpack.c.h.b16 %v2416
    %v3468 = vunpack.c.l.b16 %v2417
    %v3469 = vunpack.c.h.b16 %v2417
    %v3470 = vunpack.c.l.b16 %v2418
    %v3471 = vunpack.c.h.b16 %v2418
    %v3472 = vunpack.c.l.b16 %v2419
    %v3473 = vunpack.c.h.b16 %v2419
    %v3474 = vunpack.c.l.b16 %v2420
    %v3475 = vunpack.c.h.b16 %v2420
    %v3476 = vunpack.c.l.b16 %v2421
    %v3477 = vunpack.c.h.b16 %v2421
    %v3478 = vunpack.c.l.b16 %v2422
    %v3479 = vunpack.c.h.b16 %v2422
    %v3480 = vunpack.c.l.b16 %v2423
    %v3481 = vunpack.c.h.b16 %v2423
    %v3482 = vunpack.c.l.b16 %v2424
    %v3483 = vunpack.c.h.b16 %v2424
    %v3484 = vunpack.c.l.b16 %v2425
    %v3485 = vunpack.c.h.b16 %v2425
    %v3486 = vunpack.c.l.b16 %v2426
    %v3487 = vunpack.c.h.b16 %v2426
    %v3488 = vunpack.c.l.b16 %v2427
    %v3489 = vunpack.c.h.b16 %v2427
    %v3490 = vunpack.c.l.b16 %v2428
    %v3491 = vunpack.c.h.b16 %v2428
    %v3492 = vunpack.c.l.b16 %v2429
    %v3493 = vunpack.c.h.b16 %v2429
    %v3494 = vunpack.c.l.b16 %v2430
    %v3495 = vunpack.c.h.b16 %v2430
    %v3496 = vunpack.c.l.b16 %v2431
    %v3497 = vunpack.c.h.b16 %v2431
    %v3498 = vunpack.c.l.b16 %v2432
    %v3499 = vunpack.c.h.b16 %v2432
    %v3500 = vunpack.c.l.b16 %v2433
    %v3501 = vunpack.c.h.b16 %v2433
    %v3502 = vunpack.c.l.b16 %v2434
    %v3503 = vunpack.c.h.b16 %v2434
    %v3504 = vunpack.c.l.b16 %v2435
    %v3505 = vunpack.c.h.b16 %v2435
    %v3506 = vunpack.c.l.b16 %v2436
    %v3507 = vunpack.c.h.b16 %v2436
    %v3508 = vunpack.c.l.b16 %v2437
    %v3509 = vunpack.c.h.b16 %v2437
    %v3510 = vunpack.c.l.b16 %v2438
    %v3511 = vunpack.c.h.b16 %v2438
    %v3512 = vunpack.c.l.b16 %v2439
    %v3513 = vunpack.c.h.b16 %v2439
    %v3514 = vunpack.c.l.b16 %v2440
    %v3515 = vunpack.c.h.b16 %v2440
    %v3516 = vunpack.c.l.b16 %v2441
    %v3517 = vunpack.c.h.b16 %v2441
    %v3518 = vunpack.c.l.b16 %v2442
    %v3519 = vunpack.c.h.b16 %v2442
    %v3520 = vunpack.c.l.b16 %v2443
    %v3521 = vunpack.c.h.b16 %v2443
    %v3522 = vunpack.c.l.b16 %v2444
    %v3523 = vunpack.c.h.b16 %v2444
    %v3524 = vunpack.c.l.b16 %v2445
    %v3525 = vunpack.c.h.b16 %v2445
    %v3526 = vunpack.c.l.b16 %v2446
    %v3527 = vunpack.c.h.b16 %v2446
    %v3528 = vunpack.c.l.b16 %v2447
    %v3529 = vunpack.c.h.b16 %v2447
    %v3530 = vunpack.c.l.b16 %v2448
    %v3531 = vunpack.c.h.b16 %v2448
    %v3532 = vunpack.c.l.b16 %v2449
    %v3533 = vunpack.c.h.b16 %v2449
    %v3534 = vunpack.c.l.b16 %v2450
    %v3535 = vunpack.c.h.b16 %v2450
    %v3536 = vunpack.c.l.b16 %v2451
    %v3537 = vunpack.c.h.b16 %v2451
    %v3538 = vunpack.c.l.b16 %v2452
    %v3539 = vunpack.c.h.b16 %v2452
    %v3540 = vunpack.c.l.b16 %v2453
    %v3541 = vunpack.c.h.b16 %v2453
    %v3542 = vunpack.c.l.b16 %v2454
    %v3543 = vunpack.c.h.b16 %v2454
    %v3544 = vunpack.c.l.b16 %v2455
    %v3545 = vunpack.c.h.b16 %v2455
    %v3546 = vunpack.c.l.b16 %v2456
    %v3547 = vunpack.c.h.b16 %v2456
    %v3548 = vunpack.c.l.b16 %v2457
    %v3549 = vunpack.c.h.b16 %v2457
    %v3550 = vunpack.c.l.b16 %v2458
    %v3551 = vunpack.c.h.b16 %v2458
    %v3552 = vunpack.c.l.b16 %v2459
    %v3553 = vunpack.c.h.b16 %v2459
    %v3554 = vunpack.c.l.b16 %v2460
    %v3555 = vunpack.c.h.b16 %v2460
    %v3556 = vunpack.c.l.b16 %v2461
    %v3557 = vunpack.c.h.b16 %v2461
    %v3558 = vunpack.c.l.b16 %v2462
    %v3559 = vunpack.c.h.b16 %v2462
    %v3560 = vunpack.c.l.b16 %v2463
    %v3561 = vunpack.c.h.b16 %v2463
    %v3562 = vunpack.c.l.b16 %v2464
    %v3563 = vunpack.c.h.b16 %v2464
    %v3564 = vunpack.c.l.b16 %v2465
    %v3565 = vunpack.c.h.b16 %v2465
    %v3566 = vunpack.c.l.b16 %v2466
    %v3567 = vunpack.c.h.b16 %v2466
    %v3568 = vunpack.c.l.b16 %v2467
    %v3569 = vunpack.c.h.b16 %v2467
    %v3570 = vunpack.c.l.b16 %v2468
    %v3571 = vunpack.c.h.b16 %v2468
    %v3572 = vunpack.c.l.b16 %v2469
    %v3573 = vunpack.c.h.b16 %v2469
    %v3574 = vunpack.c.l.b16 %v2470
    %v3575 = vunpack.c.h.b16 %v2470
    %v3576 = vunpack.c.l.b16 %v2471
    %v3577 = vunpack.c.h.b16 %v2471
    %v3578 = vunpack.c.l.b16 %v2472
    %v3579 = vunpack.c.h.b16 %v2472
    %v3580 = vunpack.c.l.b16 %v2473
    %v3581 = vunpack.c.h.b16 %v2473
    %v3582 = vunpack.c.l.b16 %v2474
    %v3583 = vunpack.c.h.b16 %v2474
    %v3584 = vunpack.c.l.b16 %v2475
    %v3585 = vunpack.c.h.b16 %v2475
    %v3586 = vunpack.c.l.b16 %v2476
    %v3587 = vunpack.c.h.b16 %v2476
    %v3588 = vunpack.c.l.b16 %v2477
    %v3589 = vunpack.c.h.b16 %v2477
    %v3590 = vunpack.c.l.b16 %v2478
    %v3591 = vunpack.c.h.b16 %v2478
    %v3592 = vunpack.c.l.b16 %v2479
    %v3593 = vunpack.c.h.b16 %v2479
    %v3594 = vunpack.c.l.b16 %v2480
    %v3595 = vunpack.c.h.b16 %v2480
    %v3596 = vunpack.c.l.b16 %v2481
    %v3597 = vunpack.c.h.b16 %v2481
    %v3598 = vunpack.c.l.b16 %v2482
    %v3599 = vunpack.c.h.b16 %v2482
    %v3600 = vunpack.c.l.b16 %v2483
    %v3601 = vunpack.c.h.b16 %v2483
    %v3602 = vunpack.c.l.b16 %v2484
    %v3603 = vunpack.c.h.b16 %v2484
    %v3604 = vunpack.c.l.b16 %v2485
    %v3605 = vunpack.c.h.b16 %v2485
    %v3606 = vunpack.c.l.b16 %v2486
    %v3607 = vunpack.c.h.b16 %v2486
    %v3608 = vunpack.c.l.b16 %v2487
    %v3609 = vunpack.c.h.b16 %v2487
    %v3610 = vunpack.c.l.b16 %v2488
    %v3611 = vunpack.c.h.b16 %v2488
    %v3612 = vunpack.c.l.b16 %v2489
    %v3613 = vunpack.c.h.b16 %v2489
    %v3614 = vunpack.c.l.b16 %v2490
    %v3615 = vunpack.c.h.b16 %v2490
    %v3616 = vunpack.c.l.b16 %v2491
    %v3617 = vunpack.c.h.b16 %v2491
    %v3618 = vunpack.c.l.b16 %v2492
    %v3619 = vunpack.c.h.b16 %v2492
    %v3620 = vunpack.c.l.b16 %v2493
    %v3621 = vunpack.c.h.b16 %v2493
    %v3622 = vunpack.c.l.b16 %v2494
    %v3623 = vunpack.c.h.b16 %v2494
    %v3624 = vunpack.c.l.b16 %v2495
    %v3625 = vunpack.c.h.b16 %v2495
    %v3626 = vunpack.c.l.b16 %v2496
    %v3627 = vunpack.c.h.b16 %v2496
    %v3628 = vunpack.c.l.b16 %v2497
    %v3629 = vunpack.c.h.b16 %v2497
    %v3630 = vunpack.c.l.b16 %v2498
    %v3631 = vunpack.c.h.b16 %v2498
    %v3632 = vunpack.c.l.b16 %v2499
    %v3633 = vunpack.c.h.b16 %v2499
    %v3634 = vunpack.c.l.b16 %v2500
    %v3635 = vunpack.c.h.b16 %v2500
    %v3636 = vunpack.c.l.b16 %v2501
    %v3637 = vunpack.c.h.b16 %v2501
    %v3638 = vunpack.c.l.b16 %v2502
    %v3639 = vunpack.c.h.b16 %v2502
    %v3640 = vunpack.c.l.b16 %v2503
    %v3641 = vunpack.c.h.b16 %v2503
    %v3642 = vunpack.c.l.b16 %v2504
    %v3643 = vunpack.c.h.b16 %v2504
    %v3644 = vunpack.c.l.b16 %v2505
    %v3645 = vunpack.c.h.b16 %v2505
    %v3646 = vunpack.c.l.b16 %v2506
    %v3647 = vunpack.c.h.b16 %v2506
    %v3648 = vunpack.c.l.b16 %v2507
    %v3649 = vunpack.c.h.b16 %v2507
    %v3650 = vunpack.c.l.b16 %v2508
    %v3651 = vunpack.c.h.b16 %v2508
    %v3652 = vunpack.c.l.b16 %v2509
    %v3653 = vunpack.c.h.b16 %v2509
    %v3654 = vunpack.c.l.b16 %v2510
    %v3655 = vunpack.c.h.b16 %v2510
    %v3656 = vunpack.c.l.b16 %v2511
    %v3657 = vunpack.c.h.b16 %v2511
    %v3658 = vunpack.c.l.b16 %v2512
    %v3659 = vunpack.c.h.b16 %v2512
    %v3660 = vunpack.c.l.b16 %v2513
    %v3661 = vunpack.c.h.b16 %v2513
    %v3662 = vunpack.c.l.b16 %v2514
    %v3663 = vunpack.c.h.b16 %v2514
    %v3664 = vunpack.c.l.b16 %v2515
    %v3665 = vunpack.c.h.b16 %v2515
    %v3666 = vunpack.c.l.b16 %v2516
    %v3667 = vunpack.c.h.b16 %v2516
    %v3668 = vunpack.c.l.b16 %v2517
    %v3669 = vunpack.c.h.b16 %v2517
    %v3670 = vpack.c.b16 %v3166, %v3158
    %v3671 = vpack.c.b16 %v3167, %v3159
    %v3672 = vpack.c.b16 %v3168, %v3160
    %v3673 = vpack.c.b16 %v3169, %v3161
    %v3674 = vpack.c.b16 %v3170, %v3162
    %v3675 = vpack.c.b16 %v3171, %v3163
    %v3676 = vpack.c.b16 %v3172, %v3164
    %v3677 = vpack.c.b16 %v3173, %v3165
    %v3678 = vpack.c.b16 %v3182, %v3174
    %v3679 = vpack.c.b16 %v3183, %v3175
    %v3680 = vpack.c.b16 %v3184, %v3176
    %v3681 = vpack.c.b16 %v3185, %v3177
    %v3682 = vpack.c.b16 %v3186, %v3178
    %v3683 = vpack.c.b16 %v3187, %v3179
    %v3684 = vpack.c.b16 %v3188, %v3180
    %v3685 = vpack.c.b16 %v3189, %v3181
    %v3686 = vpack.c.b16 %v3198, %v3190
    %v3687 = vpack.c.b16 %v3199, %v3191
    %v3688 = vpack.c.b16 %v3200, %v3192
    %v3689 = vpack.c.b16 %v3201, %v3193
    %v3690 = vpack.c.b16 %v3202, %v3194
    %v3691 = vpack.c.b16 %v3203, %v3195
    %v3692 = vpack.c.b16 %v3204, %v3196
    %v3693 = vpack.c.b16 %v3205, %v3197
    %v3694 = vpack.c.b16 %v3214, %v3206
    %v3695 = vpack.c.b16 %v3215, %v3207
    %v3696 = vpack.c.b16 %v3216, %v3208
    %v3697 = vpack.c.b16 %v3217, %v3209
    %v3698 = vpack.c.b16 %v3218, %v3210
    %v3699 = vpack.c.b16 %v3219, %v3211
    %v3700 = vpack.c.b16 %v3220, %v3212
    %v3701 = vpack.c.b16 %v3221, %v3213
    %v3702 = vpack.c.b16 %v3230, %v3222
    %v3703 = vpack.c.b16 %v3231, %v3223
    %v3704 = vpack.c.b16 %v3232, %v3224
    %v3705 = vpack.c.b16 %v3233, %v3225
    %v3706 = vpack.c.b16 %v3234, %v3226
    %v3707 = vpack.c.b16 %v3235, %v3227
    %v3708 = vpack.c.b16 %v3236, %v3228
    %v3709 = vpack.c.b16 %v3237, %v3229
    %v3710 = vpack.c.b16 %v3246, %v3238
    %v3711 = vpack.c.b16 %v3247, %v3239
    %v3712 = vpack.c.b16 %v3248, %v3240
    %v3713 = vpack.c.b16 %v3249, %v3241
    %v3714 = vpack.c.b16 %v3250, %v3242
    %v3715 = vpack.c.b16 %v3251, %v3243
    %v3716 = vpack.c.b16 %v3252, %v3244
    %v3717 = vpack.c.b16 %v3253, %v3245
    %v3718 = vpack.c.b16 %v3262, %v3254
    %v3719 = vpack.c.b16 %v3263, %v3255
    %v3720 = vpack.c.b16 %v3264, %v3256
    %v3721 = vpack.c.b16 %v3265, %v3257
    %v3722 = vpack.c.b16 %v3266, %v3258
    %v3723 = vpack.c.b16 %v3267, %v3259
    %v3724 = vpack.c.b16 %v3268, %v3260
    %v3725 = vpack.c.b16 %v3269, %v3261
    %v3726 = vpack.c.b16 %v3278, %v3270
    %v3727 = vpack.c.b16 %v3279, %v3271
    %v3728 = vpack.c.b16 %v3280, %v3272
    %v3729 = vpack.c.b16 %v3281, %v3273
    %v3730 = vpack.c.b16 %v3282, %v3274
    %v3731 = vpack.c.b16 %v3283, %v3275
    %v3732 = vpack.c.b16 %v3284, %v3276
    %v3733 = vpack.c.b16 %v3285, %v3277
    %v3734 = vpack.c.b16 %v3294, %v3286
    %v3735 = vpack.c.b16 %v3295, %v3287
    %v3736 = vpack.c.b16 %v3296, %v3288
    %v3737 = vpack.c.b16 %v3297, %v3289
    %v3738 = vpack.c.b16 %v3298, %v3290
    %v3739 = vpack.c.b16 %v3299, %v3291
    %v3740 = vpack.c.b16 %v3300, %v3292
    %v3741 = vpack.c.b16 %v3301, %v3293
    %v3742 = vpack.c.b16 %v3310, %v3302
    %v3743 = vpack.c.b16 %v3311, %v3303
    %v3744 = vpack.c.b16 %v3312, %v3304
    %v3745 = vpack.c.b16 %v3313, %v3305
    %v3746 = vpack.c.b16 %v3314, %v3306
    %v3747 = vpack.c.b16 %v3315, %v3307
    %v3748 = vpack.c.b16 %v3316, %v3308
    %v3749 = vpack.c.b16 %v3317, %v3309
    %v3750 = vpack.c.b16 %v3326, %v3318
    %v3751 = vpack.c.b16 %v3327, %v3319
    %v3752 = vpack.c.b16 %v3328, %v3320
    %v3753 = vpack.c.b16 %v3329, %v3321
    %v3754 = vpack.c.b16 %v3330, %v3322
    %v3755 = vpack.c.b16 %v3331, %v3323
    %v3756 = vpack.c.b16 %v3332, %v3324
    %v3757 = vpack.c.b16 %v3333, %v3325
    %v3758 = vpack.c.b16 %v3342, %v3334
    %v3759 = vpack.c.b16 %v3343, %v3335
    %v3760 = vpack.c.b16 %v3344, %v3336
    %v3761 = vpack.c.b16 %v3345, %v3337
    %v3762 = vpack.c.b16 %v3346, %v3338
    %v3763 = vpack.c.b16 %v3347, %v3339
    %v3764 = vpack.c.b16 %v3348, %v3340
    %v3765 = vpack.c.b16 %v3349, %v3341
    %v3766 = vpack.c.b16 %v3358, %v3350
    %v3767 = vpack.c.b16 %v3359, %v3351
    %v3768 = vpack.c.b16 %v3360, %v3352
    %v3769 = vpack.c.b16 %v3361, %v3353
    %v3770 = vpack.c.b16 %v3362, %v3354
    %v3771 = vpack.c.b16 %v3363, %v3355
    %v3772 = vpack.c.b16 %v3364, %v3356
    %v3773 = vpack.c.b16 %v3365, %v3357
    %v3774 = vpack.c.b16 %v3374, %v3366
    %v3775 = vpack.c.b16 %v3375, %v3367
    %v3776 = vpack.c.b16 %v3376, %v3368
    %v3777 = vpack.c.b16 %v3377, %v3369
    %v3778 = vpack.c.b16 %v3378, %v3370
    %v3779 = vpack.c.b16 %v3379, %v3371
    %v3780 = vpack.c.b16 %v3380, %v3372
    %v3781 = vpack.c.b16 %v3381, %v3373
    %v3782 = vpack.c.b16 %v3390, %v3382
    %v3783 = vpack.c.b16 %v3391, %v3383
    %v3784 = vpack.c.b16 %v3392, %v3384
    %v3785 = vpack.c.b16 %v3393, %v3385
    %v3786 = vpack.c.b16 %v3394, %v3386
    %v3787 = vpack.c.b16 %v3395, %v3387
    %v3788 = vpack.c.b16 %v3396, %v3388
    %v3789 = vpack.c.b16 %v3397, %v3389
    %v3790 = vpack.c.b16 %v3406, %v3398
    %v3791 = vpack.c.b16 %v3407, %v3399
    %v3792 = vpack.c.b16 %v3408, %v3400
    %v3793 = vpack.c.b16 %v3409, %v3401
    %v3794 = vpack.c.b16 %v3410, %v3402
    %v3795 = vpack.c.b16 %v3411, %v3403
    %v3796 = vpack.c.b16 %v3412, %v3404
    %v3797 = vpack.c.b16 %v3413, %v3405
    %v3798 = vpack.c.b16 %v3422, %v3414
    %v3799 = vpack.c.b16 %v3423, %v3415
    %v3800 = vpack.c.b16 %v3424, %v3416
    %v3801 = vpack.c.b16 %v3425, %v3417
    %v3802 = vpack.c.b16 %v3426, %v3418
    %v3803 = vpack.c.b16 %v3427, %v3419
    %v3804 = vpack.c.b16 %v3428, %v3420
    %v3805 = vpack.c.b16 %v3429, %v3421
    %v3806 = vpack.c.b16 %v3438, %v3430
    %v3807 = vpack.c.b16 %v3439, %v3431
    %v3808 = vpack.c.b16 %v3440, %v3432
    %v3809 = vpack.c.b16 %v3441, %v3433
    %v3810 = vpack.c.b16 %v3442, %v3434
    %v3811 = vpack.c.b16 %v3443, %v3435
    %v3812 = vpack.c.b16 %v3444, %v3436
    %v3813 = vpack.c.b16 %v3445, %v3437
    %v3814 = vpack.c.b16 %v3454, %v3446
    %v3815 = vpack.c.b16 %v3455, %v3447
    %v3816 = vpack.c.b16 %v3456, %v3448
    %v3817 = vpack.c.b16 %v3457, %v3449
    %v3818 = vpack.c.b16 %v3458, %v3450
    %v3819 = vpack.c.b16 %v3459, %v3451
    %v3820 = vpack.c.b16 %v3460, %v3452
    %v3821 = vpack.c.b16 %v3461, %v3453
    %v3822 = vpack.c.b16 %v3470, %v3462
    %v3823 = vpack.c.b16 %v3471, %v3463
    %v3824 = vpack.c.b16 %v3472, %v3464
    %v3825 = vpack.c.b16 %v3473, %v3465
    %v3826 = vpack.c.b16 %v3474, %v3466
    %v3827 = vpack.c.b16 %v3475, %v3467
    %v3828 = vpack.c.b16 %v3476, %v3468
    %v3829 = vpack.c.b16 %v3477, %v3469
    %v3830 = vpack.c.b16 %v3486, %v3478
    %v3831 = vpack.c.b16 %v3487, %v3479
    %v3832 = vpack.c.b16 %v3488, %v3480
    %v3833 = vpack.c.b16 %v3489, %v3481
    %v3834 = vpack.c.b16 %v3490, %v3482
    %v3835 = vpack.c.b16 %v3491, %v3483
    %v3836 = vpack.c.b16 %v3492, %v3484
    %v3837 = vpack.c.b16 %v3493, %v3485
    %v3838 = vpack.c.b16 %v3502, %v3494
    %v3839 = vpack.c.b16 %v3503, %v3495
    %v3840 = vpack.c.b16 %v3504, %v3496
    %v3841 = vpack.c.b16 %v3505, %v3497
    %v3842 = vpack.c.b16 %v3506, %v3498
    %v3843 = vpack.c.b16 %v3507, %v3499
    %v3844 = vpack.c.b16 %v3508, %v3500
    %v3845 = vpack.c.b16 %v3509, %v3501
    %v3846 = vpack.c.b16 %v3518, %v3510
    %v3847 = vpack.c.b16 %v3519, %v3511
    %v3848 = vpack.c.b16 %v3520, %v3512
    %v3849 = vpack.c.b16 %v3521, %v3513
    %v3850 = vpack.c.b16 %v3522, %v3514
    %v3851 = vpack.c.b16 %v3523, %v3515
    %v3852 = vpack.c.b16 %v3524, %v3516
    %v3853 = vpack.c.b16 %v3525, %v3517
    %v3854 = vpack.c.b16 %v3534, %v3526
    %v3855 = vpack.c.b16 %v3535, %v3527
    %v3856 = vpack.c.b16 %v3536, %v3528
    %v3857 = vpack.c.b16 %v3537, %v3529
    %v3858 = vpack.c.b16 %v3538, %v3530
    %v3859 = vpack.c.b16 %v3539, %v3531
    %v3860 = vpack.c.b16 %v3540, %v3532
    %v3861 = vpack.c.b16 %v3541, %v3533
    %v3862 = vpack.c.b16 %v3550, %v3542
    %v3863 = vpack.c.b16 %v3551, %v3543
    %v3864 = vpack.c.b16 %v3552, %v3544
    %v3865 = vpack.c.b16 %v3553, %v3545
    %v3866 = vpack.c.b16 %v3554, %v3546
    %v3867 = vpack.c.b16 %v3555, %v3547
    %v3868 = vpack.c.b16 %v3556, %v3548
    %v3869 = vpack.c.b16 %v3557, %v3549
    %v3870 = vpack.c.b16 %v3566, %v3558
    %v3871 = vpack.c.b16 %v3567, %v3559
    %v3872 = vpack.c.b16 %v3568, %v3560
    %v3873 = vpack.c.b16 %v3569, %v3561
    %v3874 = vpack.c.b16 %v3570, %v3562
    %v3875 = vpack.c.b16 %v3571, %v3563
    %v3876 = vpack.c.b16 %v3572, %v3564
    %v3877 = vpack.c.b16 %v3573, %v3565
    %v3878 = vpack.c.b16 %v3582, %v3574
    %v3879 = vpack.c.b16 %v3583, %v3575
    %v3880 = vpack.c.b16 %v3584, %v3576
    %v3881 = vpack.c.b16 %v3585, %v3577
    %v3882 = vpack.c.b16 %v3586, %v3578
    %v3883 = vpack.c.b16 %v3587, %v3579
    %v3884 = vpack.c.b16 %v3588, %v3580
    %v3885 = vpack.c.b16 %v3589, %v3581
    %v3886 = vpack.c.b16 %v3598, %v3590
    %v3887 = vpack.c.b16 %v3599, %v3591
    %v3888 = vpack.c.b16 %v3600, %v3592
    %v3889 = vpack.c.b16 %v3601, %v3593
    %v3890 = vpack.c.b16 %v3602, %v3594
    %v3891 = vpack.c.b16 %v3603, %v3595
    %v3892 = vpack.c.b16 %v3604, %v3596
    %v3893 = vpack.c.b16 %v3605, %v3597
    %v3894 = vpack.c.b16 %v3614, %v3606
    %v3895 = vpack.c.b16 %v3615, %v3607
    %v3896 = vpack.c.b16 %v3616, %v3608
    %v3897 = vpack.c.b16 %v3617, %v3609
    %v3898 = vpack.c.b16 %v3618, %v3610
    %v3899 = vpack.c.b16 %v3619, %v3611
    %v3900 = vpack.c.b16 %v3620, %v3612
    %v3901 = vpack.c.b16 %v3621, %v3613
    %v3902 = vpack.c.b16 %v3630, %v3622
    %v3903 = vpack.c.b16 %v3631, %v3623
    %v3904 = vpack.c.b16 %v3632, %v3624
    %v3905 = vpack.c.b16 %v3633, %v3625
    %v3906 = vpack.c.b16 %v3634, %v3626
    %v3907 = vpack.c.b16 %v3635, %v3627
    %v3908 = vpack.c.b16 %v3636, %v3628
    %v3909 = vpack.c.b16 %v3637, %v3629
    %v3910 = vpack.c.b16 %v3646, %v3638
    %v3911 = vpack.c.b16 %v3647, %v3639
    %v3912 = vpack.c.b16 %v3648, %v3640
    %v3913 = vpack.c.b16 %v3649, %v3641
    %v3914 = vpack.c.b16 %v3650, %v3642
    %v3915 = vpack.c.b16 %v3651, %v3643
    %v3916 = vpack.c.b16 %v3652, %v3644
    %v3917 = vpack.c.b16 %v3653, %v3645
    %v3918 = vpack.c.b16 %v3662, %v3654
    %v3919 = vpack.c.b16 %v3663, %v3655
    %v3920 = vpack.c.b16 %v3664, %v3656
    %v3921 = vpack.c.b16 %v3665, %v3657
    %v3922 = vpack.c.b16 %v3666, %v3658
    %v3923 = vpack.c.b16 %v3667, %v3659
    %v3924 = vpack.c.b16 %v3668, %v3660
    %v3925 = vpack.c.b16 %v3669, %v3661
    %4182 = vmatprep.subr.bf16.mxu0 0
    %4183 = vmatpush1.bf16.msra.mxu0 %v2205
    %4184 = vmatprep.subr.bf16.mxu0 0
    %4185 = vmatpush1.bf16.msra.mxu0 %v2204
    %4186 = vmatprep.subr.bf16.mxu0 0
    %4187 = vmatpush1.bf16.msra.mxu0 %v2203
    %4188 = vmatprep.subr.bf16.mxu0 0
    %4189 = vmatpush1.bf16.msra.mxu0 %v2202
    %4190 = vmatprep.subr.bf16.mxu0 0
    %4191 = vmatpush1.bf16.msra.mxu0 %v2201
    %4192 = vmatprep.subr.bf16.mxu0 0
    %4193 = vmatpush1.bf16.msra.mxu0 %v2200
    %4194 = vmatprep.subr.bf16.mxu0 0
    %4195 = vmatpush1.bf16.msra.mxu0 %v2199
    %4196 = vmatprep.subr.bf16.mxu0 0
    %4197 = vmatpush1.bf16.msra.mxu0 %v2198
    %4198 = vmatprep.subr.bf16.mxu0 0
    %4199 = vmatpush2.bf16.msra.mxu0 %v2213
    %4200 = vmatprep.subr.bf16.mxu0 0
    %4201 = vmatpush2.bf16.msra.mxu0 %v2212
    %4202 = vmatprep.subr.bf16.mxu0 0
    %4203 = vmatpush2.bf16.msra.mxu0 %v2211
    %4204 = vmatprep.subr.bf16.mxu0 0
    %4205 = vmatpush2.bf16.msra.mxu0 %v2210
    %4206 = vmatprep.subr.bf16.mxu0 0
    %4207 = vmatpush2.bf16.msra.mxu0 %v2209
    %4208 = vmatprep.subr.bf16.mxu0 0
    %4209 = vmatpush2.bf16.msra.mxu0 %v2208
    %4210 = vmatprep.subr.bf16.mxu0 0
    %4211 = vmatpush2.bf16.msra.mxu0 %v2207
    %4212 = vmatprep.subr.bf16.mxu0 0
    %4213 = vmatpush2.bf16.msra.mxu0 %v2206
    %4214 = vmatprep.mubr.bf16.mxu0 %v3671
    %4215 = vmatmul.mubr.bf16.gmra.mxu0 %v3670
    %v4216 = vpop.f32.mrf.mxu0
    %v4217 = vadd.f32 %v2585, %v4216
    %v4218 = vpop.f32.mrf.mxu0
    %v4219 = vpop.f32.mrf.mxu0
    %v4220 = vadd.f32 %v2590, %v4219
    %v4221 = vpop.f32.mrf.mxu0
    %4222 = vmatprep.mubr.bf16.mxu0 %v3679
    %4223 = vmatmul.mubr.bf16.gmra.mxu0 %v3678
    %v4224 = vpop.f32.mrf.mxu0
    %v4225 = vadd.f32 %v2595, %v4224
    %v4226 = vpop.f32.mrf.mxu0
    %v4227 = vpop.f32.mrf.mxu0
    %v4228 = vadd.f32 %v2600, %v4227
    %v4229 = vpop.f32.mrf.mxu0
    %4230 = vmatprep.mubr.bf16.mxu0 %v3687
    %4231 = vmatmul.mubr.bf16.gmra.mxu0 %v3686
    %v4232 = vpop.f32.mrf.mxu0
    %v4233 = vadd.f32 %v2605, %v4232
    %v4234 = vpop.f32.mrf.mxu0
    %v4235 = vpop.f32.mrf.mxu0
    %v4236 = vadd.f32 %v2610, %v4235
    %v4237 = vpop.f32.mrf.mxu0
    %4238 = vmatprep.mubr.bf16.mxu0 %v3695
    %4239 = vmatmul.mubr.bf16.gmra.mxu0 %v3694
    %v4240 = vpop.f32.mrf.mxu0
    %v4241 = vadd.f32 %v2615, %v4240
    %v4242 = vpop.f32.mrf.mxu0
    %v4243 = vpop.f32.mrf.mxu0
    %v4244 = vadd.f32 %v2620, %v4243
    %v4245 = vpop.f32.mrf.mxu0
    %4246 = vmatprep.mubr.bf16.mxu0 %v3703
    %4247 = vmatmul.mubr.bf16.gmra.mxu0 %v3702
    %v4248 = vpop.f32.mrf.mxu0
    %v4249 = vadd.f32 %v2625, %v4248
    %v4250 = vpop.f32.mrf.mxu0
    %v4251 = vpop.f32.mrf.mxu0
    %v4252 = vadd.f32 %v2630, %v4251
    %v4253 = vpop.f32.mrf.mxu0
    %4254 = vmatprep.mubr.bf16.mxu0 %v3711
    %4255 = vmatmul.mubr.bf16.gmra.mxu0 %v3710
    %v4256 = vpop.f32.mrf.mxu0
    %v4257 = vadd.f32 %v2635, %v4256
    %v4258 = vpop.f32.mrf.mxu0
    %v4259 = vpop.f32.mrf.mxu0
    %v4260 = vadd.f32 %v2640, %v4259
    %v4261 = vpop.f32.mrf.mxu0
    %4262 = vmatprep.mubr.bf16.mxu0 %v3719
    %4263 = vmatmul.mubr.bf16.gmra.mxu0 %v3718
    %v4264 = vpop.f32.mrf.mxu0
    %v4265 = vadd.f32 %v2645, %v4264
    %v4266 = vpop.f32.mrf.mxu0
    %v4267 = vpop.f32.mrf.mxu0
    %v4268 = vadd.f32 %v2650, %v4267
    %v4269 = vpop.f32.mrf.mxu0
    %4270 = vmatprep.mubr.bf16.mxu0 %v3727
    %4271 = vmatmul.mubr.bf16.gmra.mxu0 %v3726
    %v4272 = vpop.f32.mrf.mxu0
    %v4273 = vadd.f32 %v2655, %v4272
    %v4274 = vpop.f32.mrf.mxu0
    %v4275 = vpop.f32.mrf.mxu0
    %v4276 = vadd.f32 %v2660, %v4275
    %v4277 = vpop.f32.mrf.mxu0
    %4278 = vmatprep.mubr.bf16.mxu0 %v3735
    %4279 = vmatmul.mubr.bf16.gmra.mxu0 %v3734
    %v4280 = vpop.f32.mrf.mxu0
    %v4281 = vadd.f32 %v2665, %v4280
    %v4282 = vpop.f32.mrf.mxu0
    %v4283 = vpop.f32.mrf.mxu0
    %v4284 = vadd.f32 %v2670, %v4283
    %v4285 = vpop.f32.mrf.mxu0
    %4286 = vmatprep.mubr.bf16.mxu0 %v3743
    %4287 = vmatmul.mubr.bf16.gmra.mxu0 %v3742
    %v4288 = vpop.f32.mrf.mxu0
    %v4289 = vadd.f32 %v2675, %v4288
    %v4290 = vpop.f32.mrf.mxu0
    %v4291 = vpop.f32.mrf.mxu0
    %v4292 = vadd.f32 %v2680, %v4291
    %v4293 = vpop.f32.mrf.mxu0
    %4294 = vmatprep.mubr.bf16.mxu0 %v3751
    %4295 = vmatmul.mubr.bf16.gmra.mxu0 %v3750
    %v4296 = vpop.f32.mrf.mxu0
    %v4297 = vadd.f32 %v2685, %v4296
    %v4298 = vpop.f32.mrf.mxu0
    %v4299 = vpop.f32.mrf.mxu0
    %v4300 = vadd.f32 %v2690, %v4299
    %v4301 = vpop.f32.mrf.mxu0
    %4302 = vmatprep.mubr.bf16.mxu0 %v3759
    %4303 = vmatmul.mubr.bf16.gmra.mxu0 %v3758
    %v4304 = vpop.f32.mrf.mxu0
    %v4305 = vadd.f32 %v2695, %v4304
    %v4306 = vpop.f32.mrf.mxu0
    %v4307 = vpop.f32.mrf.mxu0
    %v4308 = vadd.f32 %v2700, %v4307
    %v4309 = vpop.f32.mrf.mxu0
    %4310 = vmatprep.mubr.bf16.mxu0 %v3767
    %4311 = vmatmul.mubr.bf16.gmra.mxu0 %v3766
    %v4312 = vpop.f32.mrf.mxu0
    %v4313 = vadd.f32 %v2705, %v4312
    %v4314 = vpop.f32.mrf.mxu0
    %v4315 = vpop.f32.mrf.mxu0
    %v4316 = vadd.f32 %v2710, %v4315
    %v4317 = vpop.f32.mrf.mxu0
    %4318 = vmatprep.mubr.bf16.mxu0 %v3775
    %4319 = vmatmul.mubr.bf16.gmra.mxu0 %v3774
    %v4320 = vpop.f32.mrf.mxu0
    %v4321 = vadd.f32 %v2715, %v4320
    %v4322 = vpop.f32.mrf.mxu0
    %v4323 = vpop.f32.mrf.mxu0
    %v4324 = vadd.f32 %v2720, %v4323
    %v4325 = vpop.f32.mrf.mxu0
    %4326 = vmatprep.mubr.bf16.mxu0 %v3783
    %4327 = vmatmul.mubr.bf16.gmra.mxu0 %v3782
    %v4328 = vpop.f32.mrf.mxu0
    %v4329 = vadd.f32 %v2725, %v4328
    %v4330 = vpop.f32.mrf.mxu0
    %v4331 = vpop.f32.mrf.mxu0
    %v4332 = vadd.f32 %v2730, %v4331
    %v4333 = vpop.f32.mrf.mxu0
    %4334 = vmatprep.mubr.bf16.mxu0 %v3791
    %4335 = vmatmul.mubr.bf16.gmra.mxu0 %v3790
    %v4336 = vpop.f32.mrf.mxu0
    %v4337 = vadd.f32 %v2735, %v4336
    %v4338 = vpop.f32.mrf.mxu0
    %v4339 = vpop.f32.mrf.mxu0
    %v4340 = vadd.f32 %v2740, %v4339
    %v4341 = vpop.f32.mrf.mxu0
    %4342 = vmatprep.mubr.bf16.mxu0 %v3799
    %4343 = vmatmul.mubr.bf16.gmra.mxu0 %v3798
    %v4344 = vpop.f32.mrf.mxu0
    %v4345 = vadd.f32 %v2745, %v4344
    %v4346 = vpop.f32.mrf.mxu0
    %v4347 = vpop.f32.mrf.mxu0
    %v4348 = vadd.f32 %v2750, %v4347
    %v4349 = vpop.f32.mrf.mxu0
    %4350 = vmatprep.mubr.bf16.mxu0 %v3807
    %4351 = vmatmul.mubr.bf16.gmra.mxu0 %v3806
    %v4352 = vpop.f32.mrf.mxu0
    %v4353 = vadd.f32 %v2755, %v4352
    %v4354 = vpop.f32.mrf.mxu0
    %v4355 = vpop.f32.mrf.mxu0
    %v4356 = vadd.f32 %v2760, %v4355
    %v4357 = vpop.f32.mrf.mxu0
    %4358 = vmatprep.mubr.bf16.mxu0 %v3815
    %4359 = vmatmul.mubr.bf16.gmra.mxu0 %v3814
    %v4360 = vpop.f32.mrf.mxu0
    %v4361 = vadd.f32 %v2765, %v4360
    %v4362 = vpop.f32.mrf.mxu0
    %v4363 = vpop.f32.mrf.mxu0
    %v4364 = vadd.f32 %v2770, %v4363
    %v4365 = vpop.f32.mrf.mxu0
    %4366 = vmatprep.mubr.bf16.mxu0 %v3823
    %4367 = vmatmul.mubr.bf16.gmra.mxu0 %v3822
    %v4368 = vpop.f32.mrf.mxu0
    %v4369 = vadd.f32 %v2775, %v4368
    %v4370 = vpop.f32.mrf.mxu0
    %v4371 = vpop.f32.mrf.mxu0
    %v4372 = vadd.f32 %v2780, %v4371
    %v4373 = vpop.f32.mrf.mxu0
    %4374 = vmatprep.mubr.bf16.mxu0 %v3831
    %4375 = vmatmul.mubr.bf16.gmra.mxu0 %v3830
    %v4376 = vpop.f32.mrf.mxu0
    %v4377 = vadd.f32 %v2785, %v4376
    %v4378 = vpop.f32.mrf.mxu0
    %v4379 = vpop.f32.mrf.mxu0
    %v4380 = vadd.f32 %v2790, %v4379
    %v4381 = vpop.f32.mrf.mxu0
    %4382 = vmatprep.mubr.bf16.mxu0 %v3839
    %4383 = vmatmul.mubr.bf16.gmra.mxu0 %v3838
    %v4384 = vpop.f32.mrf.mxu0
    %v4385 = vadd.f32 %v2795, %v4384
    %v4386 = vpop.f32.mrf.mxu0
    %v4387 = vpop.f32.mrf.mxu0
    %v4388 = vadd.f32 %v2800, %v4387
    %v4389 = vpop.f32.mrf.mxu0
    %4390 = vmatprep.mubr.bf16.mxu0 %v3847
    %4391 = vmatmul.mubr.bf16.gmra.mxu0 %v3846
    %v4392 = vpop.f32.mrf.mxu0
    %v4393 = vadd.f32 %v2805, %v4392
    %v4394 = vpop.f32.mrf.mxu0
    %v4395 = vpop.f32.mrf.mxu0
    %v4396 = vadd.f32 %v2810, %v4395
    %v4397 = vpop.f32.mrf.mxu0
    %4398 = vmatprep.mubr.bf16.mxu0 %v3855
    %4399 = vmatmul.mubr.bf16.gmra.mxu0 %v3854
    %v4400 = vpop.f32.mrf.mxu0
    %v4401 = vadd.f32 %v2815, %v4400
    %v4402 = vpop.f32.mrf.mxu0
    %v4403 = vpop.f32.mrf.mxu0
    %v4404 = vadd.f32 %v2820, %v4403
    %v4405 = vpop.f32.mrf.mxu0
    %4406 = vmatprep.mubr.bf16.mxu0 %v3863
    %4407 = vmatmul.mubr.bf16.gmra.mxu0 %v3862
    %v4408 = vpop.f32.mrf.mxu0
    %v4409 = vadd.f32 %v2825, %v4408
    %v4410 = vpop.f32.mrf.mxu0
    %v4411 = vpop.f32.mrf.mxu0
    %v4412 = vadd.f32 %v2830, %v4411
    %v4413 = vpop.f32.mrf.mxu0
    %4414 = vmatprep.mubr.bf16.mxu0 %v3871
    %4415 = vmatmul.mubr.bf16.gmra.mxu0 %v3870
    %v4416 = vpop.f32.mrf.mxu0
    %v4417 = vadd.f32 %v2835, %v4416
    %v4418 = vpop.f32.mrf.mxu0
    %v4419 = vpop.f32.mrf.mxu0
    %v4420 = vadd.f32 %v2840, %v4419
    %v4421 = vpop.f32.mrf.mxu0
    %4422 = vmatprep.mubr.bf16.mxu0 %v3879
    %4423 = vmatmul.mubr.bf16.gmra.mxu0 %v3878
    %v4424 = vpop.f32.mrf.mxu0
    %v4425 = vadd.f32 %v2845, %v4424
    %v4426 = vpop.f32.mrf.mxu0
    %v4427 = vpop.f32.mrf.mxu0
    %v4428 = vadd.f32 %v2850, %v4427
    %v4429 = vpop.f32.mrf.mxu0
    %4430 = vmatprep.mubr.bf16.mxu0 %v3887
    %4431 = vmatmul.mubr.bf16.gmra.mxu0 %v3886
    %v4432 = vpop.f32.mrf.mxu0
    %v4433 = vadd.f32 %v2855, %v4432
    %v4434 = vpop.f32.mrf.mxu0
    %v4435 = vpop.f32.mrf.mxu0
    %v4436 = vadd.f32 %v2860, %v4435
    %v4437 = vpop.f32.mrf.mxu0
    %4438 = vmatprep.mubr.bf16.mxu0 %v3895
    %4439 = vmatmul.mubr.bf16.gmra.mxu0 %v3894
    %v4440 = vpop.f32.mrf.mxu0
    %v4441 = vadd.f32 %v2865, %v4440
    %v4442 = vpop.f32.mrf.mxu0
    %v4443 = vpop.f32.mrf.mxu0
    %v4444 = vadd.f32 %v2870, %v4443
    %v4445 = vpop.f32.mrf.mxu0
    %4446 = vmatprep.mubr.bf16.mxu0 %v3903
    %4447 = vmatmul.mubr.bf16.gmra.mxu0 %v3902
    %v4448 = vpop.f32.mrf.mxu0
    %v4449 = vadd.f32 %v2875, %v4448
    %v4450 = vpop.f32.mrf.mxu0
    %v4451 = vpop.f32.mrf.mxu0
    %v4452 = vadd.f32 %v2880, %v4451
    %v4453 = vpop.f32.mrf.mxu0
    %4454 = vmatprep.mubr.bf16.mxu0 %v3911
    %4455 = vmatmul.mubr.bf16.gmra.mxu0 %v3910
    %v4456 = vpop.f32.mrf.mxu0
    %v4457 = vadd.f32 %v2885, %v4456
    %v4458 = vpop.f32.mrf.mxu0
    %v4459 = vpop.f32.mrf.mxu0
    %v4460 = vadd.f32 %v2890, %v4459
    %v4461 = vpop.f32.mrf.mxu0
    %4462 = vmatprep.mubr.bf16.mxu0 %v3919
    %4463 = vmatmul.mubr.bf16.gmra.mxu0 %v3918
    %v4464 = vpop.f32.mrf.mxu0
    %v4465 = vadd.f32 %v2895, %v4464
    %v4466 = vpop.f32.mrf.mxu0
    %v4467 = vpop.f32.mrf.mxu0
    %v4468 = vadd.f32 %v2900, %v4467
    %v4469 = vpop.f32.mrf.mxu0
    %4470 = vdwg.mxu0
    %4471 = vmatprep.subr.bf16.mxu0 0
    %4472 = vmatpush1.bf16.msra.mxu0 %v2221
    %4473 = vmatprep.subr.bf16.mxu0 0
    %4474 = vmatpush1.bf16.msra.mxu0 %v2220
    %4475 = vmatprep.subr.bf16.mxu0 0
    %4476 = vmatpush1.bf16.msra.mxu0 %v2219
    %4477 = vmatprep.subr.bf16.mxu0 0
    %4478 = vmatpush1.bf16.msra.mxu0 %v2218
    %4479 = vmatprep.subr.bf16.mxu0 0
    %4480 = vmatpush1.bf16.msra.mxu0 %v2217
    %4481 = vmatprep.subr.bf16.mxu0 0
    %4482 = vmatpush1.bf16.msra.mxu0 %v2216
    %4483 = vmatprep.subr.bf16.mxu0 0
    %4484 = vmatpush1.bf16.msra.mxu0 %v2215
    %4485 = vmatprep.subr.bf16.mxu0 0
    %4486 = vmatpush1.bf16.msra.mxu0 %v2214
    %4487 = vmatprep.subr.bf16.mxu0 0
    %4488 = vmatpush2.bf16.msra.mxu0 %v2229
    %4489 = vmatprep.subr.bf16.mxu0 0
    %4490 = vmatpush2.bf16.msra.mxu0 %v2228
    %4491 = vmatprep.subr.bf16.mxu0 0
    %4492 = vmatpush2.bf16.msra.mxu0 %v2227
    %4493 = vmatprep.subr.bf16.mxu0 0
    %4494 = vmatpush2.bf16.msra.mxu0 %v2226
    %4495 = vmatprep.subr.bf16.mxu0 0
    %4496 = vmatpush2.bf16.msra.mxu0 %v2225
    %4497 = vmatprep.subr.bf16.mxu0 0
    %4498 = vmatpush2.bf16.msra.mxu0 %v2224
    %4499 = vmatprep.subr.bf16.mxu0 0
    %4500 = vmatpush2.bf16.msra.mxu0 %v2223
    %4501 = vmatprep.subr.bf16.mxu0 0
    %4502 = vmatpush2.bf16.msra.mxu0 %v2222
    %4503 = vmatprep.mubr.bf16.mxu0 %v3673
    %4504 = vmatmul.mubr.bf16.gmra.mxu0 %v3672
    %v4505 = vpop.f32.mrf.mxu0
    %v4506 = vadd.f32 %v4217, %v4505
    %v4507 = vpop.f32.mrf.mxu0
    %v4508 = vpop.f32.mrf.mxu0
    %v4509 = vadd.f32 %v4220, %v4508
    %v4510 = vpop.f32.mrf.mxu0
    %4511 = vmatprep.mubr.bf16.mxu0 %v3681
    %4512 = vmatmul.mubr.bf16.gmra.mxu0 %v3680
    %v4513 = vpop.f32.mrf.mxu0
    %v4514 = vadd.f32 %v4225, %v4513
    %v4515 = vpop.f32.mrf.mxu0
    %v4516 = vpop.f32.mrf.mxu0
    %v4517 = vadd.f32 %v4228, %v4516
    %v4518 = vpop.f32.mrf.mxu0
    %4519 = vmatprep.mubr.bf16.mxu0 %v3689
    %4520 = vmatmul.mubr.bf16.gmra.mxu0 %v3688
    %v4521 = vpop.f32.mrf.mxu0
    %v4522 = vadd.f32 %v4233, %v4521
    %v4523 = vpop.f32.mrf.mxu0
    %v4524 = vpop.f32.mrf.mxu0
    %v4525 = vadd.f32 %v4236, %v4524
    %v4526 = vpop.f32.mrf.mxu0
    %4527 = vmatprep.mubr.bf16.mxu0 %v3697
    %4528 = vmatmul.mubr.bf16.gmra.mxu0 %v3696
    %v4529 = vpop.f32.mrf.mxu0
    %v4530 = vadd.f32 %v4241, %v4529
    %v4531 = vpop.f32.mrf.mxu0
    %v4532 = vpop.f32.mrf.mxu0
    %v4533 = vadd.f32 %v4244, %v4532
    %v4534 = vpop.f32.mrf.mxu0
    %4535 = vmatprep.mubr.bf16.mxu0 %v3705
    %4536 = vmatmul.mubr.bf16.gmra.mxu0 %v3704
    %v4537 = vpop.f32.mrf.mxu0
    %v4538 = vadd.f32 %v4249, %v4537
    %v4539 = vpop.f32.mrf.mxu0
    %v4540 = vpop.f32.mrf.mxu0
    %v4541 = vadd.f32 %v4252, %v4540
    %v4542 = vpop.f32.mrf.mxu0
    %4543 = vmatprep.mubr.bf16.mxu0 %v3713
    %4544 = vmatmul.mubr.bf16.gmra.mxu0 %v3712
    %v4545 = vpop.f32.mrf.mxu0
    %v4546 = vadd.f32 %v4257, %v4545
    %v4547 = vpop.f32.mrf.mxu0
    %v4548 = vpop.f32.mrf.mxu0
    %v4549 = vadd.f32 %v4260, %v4548
    %v4550 = vpop.f32.mrf.mxu0
    %4551 = vmatprep.mubr.bf16.mxu0 %v3721
    %4552 = vmatmul.mubr.bf16.gmra.mxu0 %v3720
    %v4553 = vpop.f32.mrf.mxu0
    %v4554 = vadd.f32 %v4265, %v4553
    %v4555 = vpop.f32.mrf.mxu0
    %v4556 = vpop.f32.mrf.mxu0
    %v4557 = vadd.f32 %v4268, %v4556
    %v4558 = vpop.f32.mrf.mxu0
    %4559 = vmatprep.mubr.bf16.mxu0 %v3729
    %4560 = vmatmul.mubr.bf16.gmra.mxu0 %v3728
    %v4561 = vpop.f32.mrf.mxu0
    %v4562 = vadd.f32 %v4273, %v4561
    %v4563 = vpop.f32.mrf.mxu0
    %v4564 = vpop.f32.mrf.mxu0
    %v4565 = vadd.f32 %v4276, %v4564
    %v4566 = vpop.f32.mrf.mxu0
    %4567 = vmatprep.mubr.bf16.mxu0 %v3737
    %4568 = vmatmul.mubr.bf16.gmra.mxu0 %v3736
    %v4569 = vpop.f32.mrf.mxu0
    %v4570 = vadd.f32 %v4281, %v4569
    %v4571 = vpop.f32.mrf.mxu0
    %v4572 = vpop.f32.mrf.mxu0
    %v4573 = vadd.f32 %v4284, %v4572
    %v4574 = vpop.f32.mrf.mxu0
    %4575 = vmatprep.mubr.bf16.mxu0 %v3745
    %4576 = vmatmul.mubr.bf16.gmra.mxu0 %v3744
    %v4577 = vpop.f32.mrf.mxu0
    %v4578 = vadd.f32 %v4289, %v4577
    %v4579 = vpop.f32.mrf.mxu0
    %v4580 = vpop.f32.mrf.mxu0
    %v4581 = vadd.f32 %v4292, %v4580
    %v4582 = vpop.f32.mrf.mxu0
    %4583 = vmatprep.mubr.bf16.mxu0 %v3753
    %4584 = vmatmul.mubr.bf16.gmra.mxu0 %v3752
    %v4585 = vpop.f32.mrf.mxu0
    %v4586 = vadd.f32 %v4297, %v4585
    %v4587 = vpop.f32.mrf.mxu0
    %v4588 = vpop.f32.mrf.mxu0
    %v4589 = vadd.f32 %v4300, %v4588
    %v4590 = vpop.f32.mrf.mxu0
    %4591 = vmatprep.mubr.bf16.mxu0 %v3761
    %4592 = vmatmul.mubr.bf16.gmra.mxu0 %v3760
    %v4593 = vpop.f32.mrf.mxu0
    %v4594 = vadd.f32 %v4305, %v4593
    %v4595 = vpop.f32.mrf.mxu0
    %v4596 = vpop.f32.mrf.mxu0
    %v4597 = vadd.f32 %v4308, %v4596
    %v4598 = vpop.f32.mrf.mxu0
    %4599 = vmatprep.mubr.bf16.mxu0 %v3769
    %4600 = vmatmul.mubr.bf16.gmra.mxu0 %v3768
    %v4601 = vpop.f32.mrf.mxu0
    %v4602 = vadd.f32 %v4313, %v4601
    %v4603 = vpop.f32.mrf.mxu0
    %v4604 = vpop.f32.mrf.mxu0
    %v4605 = vadd.f32 %v4316, %v4604
    %v4606 = vpop.f32.mrf.mxu0
    %4607 = vmatprep.mubr.bf16.mxu0 %v3777
    %4608 = vmatmul.mubr.bf16.gmra.mxu0 %v3776
    %v4609 = vpop.f32.mrf.mxu0
    %v4610 = vadd.f32 %v4321, %v4609
    %v4611 = vpop.f32.mrf.mxu0
    %v4612 = vpop.f32.mrf.mxu0
    %v4613 = vadd.f32 %v4324, %v4612
    %v4614 = vpop.f32.mrf.mxu0
    %4615 = vmatprep.mubr.bf16.mxu0 %v3785
    %4616 = vmatmul.mubr.bf16.gmra.mxu0 %v3784
    %v4617 = vpop.f32.mrf.mxu0
    %v4618 = vadd.f32 %v4329, %v4617
    %v4619 = vpop.f32.mrf.mxu0
    %v4620 = vpop.f32.mrf.mxu0
    %v4621 = vadd.f32 %v4332, %v4620
    %v4622 = vpop.f32.mrf.mxu0
    %4623 = vmatprep.mubr.bf16.mxu0 %v3793
    %4624 = vmatmul.mubr.bf16.gmra.mxu0 %v3792
    %v4625 = vpop.f32.mrf.mxu0
    %v4626 = vadd.f32 %v4337, %v4625
    %v4627 = vpop.f32.mrf.mxu0
    %v4628 = vpop.f32.mrf.mxu0
    %v4629 = vadd.f32 %v4340, %v4628
    %v4630 = vpop.f32.mrf.mxu0
    %4631 = vmatprep.mubr.bf16.mxu0 %v3801
    %4632 = vmatmul.mubr.bf16.gmra.mxu0 %v3800
    %v4633 = vpop.f32.mrf.mxu0
    %v4634 = vadd.f32 %v4345, %v4633
    %v4635 = vpop.f32.mrf.mxu0
    %v4636 = vpop.f32.mrf.mxu0
    %v4637 = vadd.f32 %v4348, %v4636
    %v4638 = vpop.f32.mrf.mxu0
    %4639 = vmatprep.mubr.bf16.mxu0 %v3809
    %4640 = vmatmul.mubr.bf16.gmra.mxu0 %v3808
    %v4641 = vpop.f32.mrf.mxu0
    %v4642 = vadd.f32 %v4353, %v4641
    %v4643 = vpop.f32.mrf.mxu0
    %v4644 = vpop.f32.mrf.mxu0
    %v4645 = vadd.f32 %v4356, %v4644
    %v4646 = vpop.f32.mrf.mxu0
    %4647 = vmatprep.mubr.bf16.mxu0 %v3817
    %4648 = vmatmul.mubr.bf16.gmra.mxu0 %v3816
    %v4649 = vpop.f32.mrf.mxu0
    %v4650 = vadd.f32 %v4361, %v4649
    %v4651 = vpop.f32.mrf.mxu0
    %v4652 = vpop.f32.mrf.mxu0
    %v4653 = vadd.f32 %v4364, %v4652
    %v4654 = vpop.f32.mrf.mxu0
    %4655 = vmatprep.mubr.bf16.mxu0 %v3825
    %4656 = vmatmul.mubr.bf16.gmra.mxu0 %v3824
    %v4657 = vpop.f32.mrf.mxu0
    %v4658 = vadd.f32 %v4369, %v4657
    %v4659 = vpop.f32.mrf.mxu0
    %v4660 = vpop.f32.mrf.mxu0
    %v4661 = vadd.f32 %v4372, %v4660
    %v4662 = vpop.f32.mrf.mxu0
    %4663 = vmatprep.mubr.bf16.mxu0 %v3833
    %4664 = vmatmul.mubr.bf16.gmra.mxu0 %v3832
    %v4665 = vpop.f32.mrf.mxu0
    %v4666 = vadd.f32 %v4377, %v4665
    %v4667 = vpop.f32.mrf.mxu0
    %v4668 = vpop.f32.mrf.mxu0
    %v4669 = vadd.f32 %v4380, %v4668
    %v4670 = vpop.f32.mrf.mxu0
    %4671 = vmatprep.mubr.bf16.mxu0 %v3841
    %4672 = vmatmul.mubr.bf16.gmra.mxu0 %v3840
    %v4673 = vpop.f32.mrf.mxu0
    %v4674 = vadd.f32 %v4385, %v4673
    %v4675 = vpop.f32.mrf.mxu0
    %v4676 = vpop.f32.mrf.mxu0
    %v4677 = vadd.f32 %v4388, %v4676
    %v4678 = vpop.f32.mrf.mxu0
    %4679 = vmatprep.mubr.bf16.mxu0 %v3849
    %4680 = vmatmul.mubr.bf16.gmra.mxu0 %v3848
    %v4681 = vpop.f32.mrf.mxu0
    %v4682 = vadd.f32 %v4393, %v4681
    %v4683 = vpop.f32.mrf.mxu0
    %v4684 = vpop.f32.mrf.mxu0
    %v4685 = vadd.f32 %v4396, %v4684
    %v4686 = vpop.f32.mrf.mxu0
    %4687 = vmatprep.mubr.bf16.mxu0 %v3857
    %4688 = vmatmul.mubr.bf16.gmra.mxu0 %v3856
    %v4689 = vpop.f32.mrf.mxu0
    %v4690 = vadd.f32 %v4401, %v4689
    %v4691 = vpop.f32.mrf.mxu0
    %v4692 = vpop.f32.mrf.mxu0
    %v4693 = vadd.f32 %v4404, %v4692
    %v4694 = vpop.f32.mrf.mxu0
    %4695 = vmatprep.mubr.bf16.mxu0 %v3865
    %4696 = vmatmul.mubr.bf16.gmra.mxu0 %v3864
    %v4697 = vpop.f32.mrf.mxu0
    %v4698 = vadd.f32 %v4409, %v4697
    %v4699 = vpop.f32.mrf.mxu0
    %v4700 = vpop.f32.mrf.mxu0
    %v4701 = vadd.f32 %v4412, %v4700
    %v4702 = vpop.f32.mrf.mxu0
    %4703 = vmatprep.mubr.bf16.mxu0 %v3873
    %4704 = vmatmul.mubr.bf16.gmra.mxu0 %v3872
    %v4705 = vpop.f32.mrf.mxu0
    %v4706 = vadd.f32 %v4417, %v4705
    %v4707 = vpop.f32.mrf.mxu0
    %v4708 = vpop.f32.mrf.mxu0
    %v4709 = vadd.f32 %v4420, %v4708
    %v4710 = vpop.f32.mrf.mxu0
    %4711 = vmatprep.mubr.bf16.mxu0 %v3881
    %4712 = vmatmul.mubr.bf16.gmra.mxu0 %v3880
    %v4713 = vpop.f32.mrf.mxu0
    %v4714 = vadd.f32 %v4425, %v4713
    %v4715 = vpop.f32.mrf.mxu0
    %v4716 = vpop.f32.mrf.mxu0
    %v4717 = vadd.f32 %v4428, %v4716
    %v4718 = vpop.f32.mrf.mxu0
    %4719 = vmatprep.mubr.bf16.mxu0 %v3889
    %4720 = vmatmul.mubr.bf16.gmra.mxu0 %v3888
    %v4721 = vpop.f32.mrf.mxu0
    %v4722 = vadd.f32 %v4433, %v4721
    %v4723 = vpop.f32.mrf.mxu0
    %v4724 = vpop.f32.mrf.mxu0
    %v4725 = vadd.f32 %v4436, %v4724
    %v4726 = vpop.f32.mrf.mxu0
    %4727 = vmatprep.mubr.bf16.mxu0 %v3897
    %4728 = vmatmul.mubr.bf16.gmra.mxu0 %v3896
    %v4729 = vpop.f32.mrf.mxu0
    %v4730 = vadd.f32 %v4441, %v4729
    %v4731 = vpop.f32.mrf.mxu0
    %v4732 = vpop.f32.mrf.mxu0
    %v4733 = vadd.f32 %v4444, %v4732
    %v4734 = vpop.f32.mrf.mxu0
    %4735 = vmatprep.mubr.bf16.mxu0 %v3905
    %4736 = vmatmul.mubr.bf16.gmra.mxu0 %v3904
    %v4737 = vpop.f32.mrf.mxu0
    %v4738 = vadd.f32 %v4449, %v4737
    %v4739 = vpop.f32.mrf.mxu0
    %v4740 = vpop.f32.mrf.mxu0
    %v4741 = vadd.f32 %v4452, %v4740
    %v4742 = vpop.f32.mrf.mxu0
    %4743 = vmatprep.mubr.bf16.mxu0 %v3913
    %4744 = vmatmul.mubr.bf16.gmra.mxu0 %v3912
    %v4745 = vpop.f32.mrf.mxu0
    %v4746 = vadd.f32 %v4457, %v4745
    %v4747 = vpop.f32.mrf.mxu0
    %v4748 = vpop.f32.mrf.mxu0
    %v4749 = vadd.f32 %v4460, %v4748
    %v4750 = vpop.f32.mrf.mxu0
    %4751 = vmatprep.mubr.bf16.mxu0 %v3921
    %4752 = vmatmul.mubr.bf16.gmra.mxu0 %v3920
    %v4753 = vpop.f32.mrf.mxu0
    %v4754 = vadd.f32 %v4465, %v4753
    %v4755 = vpop.f32.mrf.mxu0
    %v4756 = vpop.f32.mrf.mxu0
    %v4757 = vadd.f32 %v4468, %v4756
    %v4758 = vpop.f32.mrf.mxu0
    %4759 = vdwg.mxu0
    %4760 = vmatprep.subr.bf16.mxu0 0
    %4761 = vmatpush1.bf16.msra.mxu0 %v2237
    %4762 = vmatprep.subr.bf16.mxu0 0
    %4763 = vmatpush1.bf16.msra.mxu0 %v2236
    %4764 = vmatprep.subr.bf16.mxu0 0
    %4765 = vmatpush1.bf16.msra.mxu0 %v2235
    %4766 = vmatprep.subr.bf16.mxu0 0
    %4767 = vmatpush1.bf16.msra.mxu0 %v2234
    %4768 = vmatprep.subr.bf16.mxu0 0
    %4769 = vmatpush1.bf16.msra.mxu0 %v2233
    %4770 = vmatprep.subr.bf16.mxu0 0
    %4771 = vmatpush1.bf16.msra.mxu0 %v2232
    %4772 = vmatprep.subr.bf16.mxu0 0
    %4773 = vmatpush1.bf16.msra.mxu0 %v2231
    %4774 = vmatprep.subr.bf16.mxu0 0
    %4775 = vmatpush1.bf16.msra.mxu0 %v2230
    %4776 = vmatprep.subr.bf16.mxu0 0
    %4777 = vmatpush2.bf16.msra.mxu0 %v2245
    %4778 = vmatprep.subr.bf16.mxu0 0
    %4779 = vmatpush2.bf16.msra.mxu0 %v2244
    %4780 = vmatprep.subr.bf16.mxu0 0
    %4781 = vmatpush2.bf16.msra.mxu0 %v2243
    %4782 = vmatprep.subr.bf16.mxu0 0
    %4783 = vmatpush2.bf16.msra.mxu0 %v2242
    %4784 = vmatprep.subr.bf16.mxu0 0
    %4785 = vmatpush2.bf16.msra.mxu0 %v2241
    %4786 = vmatprep.subr.bf16.mxu0 0
    %4787 = vmatpush2.bf16.msra.mxu0 %v2240
    %4788 = vmatprep.subr.bf16.mxu0 0
    %4789 = vmatpush2.bf16.msra.mxu0 %v2239
    %4790 = vmatprep.subr.bf16.mxu0 0
    %4791 = vmatpush2.bf16.msra.mxu0 %v2238
    %4792 = vmatprep.mubr.bf16.mxu0 %v3675
    %4793 = vmatmul.mubr.bf16.gmra.mxu0 %v3674
    %v4794 = vpop.f32.mrf.mxu0
    %v4795 = vadd.f32 %v4506, %v4794
    %v4796 = vpop.f32.mrf.mxu0
    %v4797 = vpop.f32.mrf.mxu0
    %v4798 = vadd.f32 %v4509, %v4797
    %v4799 = vpop.f32.mrf.mxu0
    %4800 = vmatprep.mubr.bf16.mxu0 %v3683
    %4801 = vmatmul.mubr.bf16.gmra.mxu0 %v3682
    %v4802 = vpop.f32.mrf.mxu0
    %v4803 = vadd.f32 %v4514, %v4802
    %v4804 = vpop.f32.mrf.mxu0
    %v4805 = vpop.f32.mrf.mxu0
    %v4806 = vadd.f32 %v4517, %v4805
    %v4807 = vpop.f32.mrf.mxu0
    %4808 = vmatprep.mubr.bf16.mxu0 %v3691
    %4809 = vmatmul.mubr.bf16.gmra.mxu0 %v3690
    %v4810 = vpop.f32.mrf.mxu0
    %v4811 = vadd.f32 %v4522, %v4810
    %v4812 = vpop.f32.mrf.mxu0
    %v4813 = vpop.f32.mrf.mxu0
    %v4814 = vadd.f32 %v4525, %v4813
    %v4815 = vpop.f32.mrf.mxu0
    %4816 = vmatprep.mubr.bf16.mxu0 %v3699
    %4817 = vmatmul.mubr.bf16.gmra.mxu0 %v3698
    %v4818 = vpop.f32.mrf.mxu0
    %v4819 = vadd.f32 %v4530, %v4818
    %v4820 = vpop.f32.mrf.mxu0
    %v4821 = vpop.f32.mrf.mxu0
    %v4822 = vadd.f32 %v4533, %v4821
    %v4823 = vpop.f32.mrf.mxu0
    %4824 = vmatprep.mubr.bf16.mxu0 %v3707
    %4825 = vmatmul.mubr.bf16.gmra.mxu0 %v3706
    %v4826 = vpop.f32.mrf.mxu0
    %v4827 = vadd.f32 %v4538, %v4826
    %v4828 = vpop.f32.mrf.mxu0
    %v4829 = vpop.f32.mrf.mxu0
    %v4830 = vadd.f32 %v4541, %v4829
    %v4831 = vpop.f32.mrf.mxu0
    %4832 = vmatprep.mubr.bf16.mxu0 %v3715
    %4833 = vmatmul.mubr.bf16.gmra.mxu0 %v3714
    %v4834 = vpop.f32.mrf.mxu0
    %v4835 = vadd.f32 %v4546, %v4834
    %v4836 = vpop.f32.mrf.mxu0
    %v4837 = vpop.f32.mrf.mxu0
    %v4838 = vadd.f32 %v4549, %v4837
    %v4839 = vpop.f32.mrf.mxu0
    %4840 = vmatprep.mubr.bf16.mxu0 %v3723
    %4841 = vmatmul.mubr.bf16.gmra.mxu0 %v3722
    %v4842 = vpop.f32.mrf.mxu0
    %v4843 = vadd.f32 %v4554, %v4842
    %v4844 = vpop.f32.mrf.mxu0
    %v4845 = vpop.f32.mrf.mxu0
    %v4846 = vadd.f32 %v4557, %v4845
    %v4847 = vpop.f32.mrf.mxu0
    %4848 = vmatprep.mubr.bf16.mxu0 %v3731
    %4849 = vmatmul.mubr.bf16.gmra.mxu0 %v3730
    %v4850 = vpop.f32.mrf.mxu0
    %v4851 = vadd.f32 %v4562, %v4850
    %v4852 = vpop.f32.mrf.mxu0
    %v4853 = vpop.f32.mrf.mxu0
    %v4854 = vadd.f32 %v4565, %v4853
    %v4855 = vpop.f32.mrf.mxu0
    %4856 = vmatprep.mubr.bf16.mxu0 %v3739
    %4857 = vmatmul.mubr.bf16.gmra.mxu0 %v3738
    %v4858 = vpop.f32.mrf.mxu0
    %v4859 = vadd.f32 %v4570, %v4858
    %v4860 = vpop.f32.mrf.mxu0
    %v4861 = vpop.f32.mrf.mxu0
    %v4862 = vadd.f32 %v4573, %v4861
    %v4863 = vpop.f32.mrf.mxu0
    %4864 = vmatprep.mubr.bf16.mxu0 %v3747
    %4865 = vmatmul.mubr.bf16.gmra.mxu0 %v3746
    %v4866 = vpop.f32.mrf.mxu0
    %v4867 = vadd.f32 %v4578, %v4866
    %v4868 = vpop.f32.mrf.mxu0
    %v4869 = vpop.f32.mrf.mxu0
    %v4870 = vadd.f32 %v4581, %v4869
    %v4871 = vpop.f32.mrf.mxu0
    %4872 = vmatprep.mubr.bf16.mxu0 %v3755
    %4873 = vmatmul.mubr.bf16.gmra.mxu0 %v3754
    %v4874 = vpop.f32.mrf.mxu0
    %v4875 = vadd.f32 %v4586, %v4874
    %v4876 = vpop.f32.mrf.mxu0
    %v4877 = vpop.f32.mrf.mxu0
    %v4878 = vadd.f32 %v4589, %v4877
    %v4879 = vpop.f32.mrf.mxu0
    %4880 = vmatprep.mubr.bf16.mxu0 %v3763
    %4881 = vmatmul.mubr.bf16.gmra.mxu0 %v3762
    %v4882 = vpop.f32.mrf.mxu0
    %v4883 = vadd.f32 %v4594, %v4882
    %v4884 = vpop.f32.mrf.mxu0
    %v4885 = vpop.f32.mrf.mxu0
    %v4886 = vadd.f32 %v4597, %v4885
    %v4887 = vpop.f32.mrf.mxu0
    %4888 = vmatprep.mubr.bf16.mxu0 %v3771
    %4889 = vmatmul.mubr.bf16.gmra.mxu0 %v3770
    %v4890 = vpop.f32.mrf.mxu0
    %v4891 = vadd.f32 %v4602, %v4890
    %v4892 = vpop.f32.mrf.mxu0
    %v4893 = vpop.f32.mrf.mxu0
    %v4894 = vadd.f32 %v4605, %v4893
    %v4895 = vpop.f32.mrf.mxu0
    %4896 = vmatprep.mubr.bf16.mxu0 %v3779
    %4897 = vmatmul.mubr.bf16.gmra.mxu0 %v3778
    %v4898 = vpop.f32.mrf.mxu0
    %v4899 = vadd.f32 %v4610, %v4898
    %v4900 = vpop.f32.mrf.mxu0
    %v4901 = vpop.f32.mrf.mxu0
    %v4902 = vadd.f32 %v4613, %v4901
    %v4903 = vpop.f32.mrf.mxu0
    %4904 = vmatprep.mubr.bf16.mxu0 %v3787
    %4905 = vmatmul.mubr.bf16.gmra.mxu0 %v3786
    %v4906 = vpop.f32.mrf.mxu0
    %v4907 = vadd.f32 %v4618, %v4906
    %v4908 = vpop.f32.mrf.mxu0
    %v4909 = vpop.f32.mrf.mxu0
    %v4910 = vadd.f32 %v4621, %v4909
    %v4911 = vpop.f32.mrf.mxu0
    %4912 = vmatprep.mubr.bf16.mxu0 %v3795
    %4913 = vmatmul.mubr.bf16.gmra.mxu0 %v3794
    %v4914 = vpop.f32.mrf.mxu0
    %v4915 = vadd.f32 %v4626, %v4914
    %v4916 = vpop.f32.mrf.mxu0
    %v4917 = vpop.f32.mrf.mxu0
    %v4918 = vadd.f32 %v4629, %v4917
    %v4919 = vpop.f32.mrf.mxu0
    %4920 = vmatprep.mubr.bf16.mxu0 %v3803
    %4921 = vmatmul.mubr.bf16.gmra.mxu0 %v3802
    %v4922 = vpop.f32.mrf.mxu0
    %v4923 = vadd.f32 %v4634, %v4922
    %v4924 = vpop.f32.mrf.mxu0
    %v4925 = vpop.f32.mrf.mxu0
    %v4926 = vadd.f32 %v4637, %v4925
    %v4927 = vpop.f32.mrf.mxu0
    %4928 = vmatprep.mubr.bf16.mxu0 %v3811
    %4929 = vmatmul.mubr.bf16.gmra.mxu0 %v3810
    %v4930 = vpop.f32.mrf.mxu0
    %v4931 = vadd.f32 %v4642, %v4930
    %v4932 = vpop.f32.mrf.mxu0
    %v4933 = vpop.f32.mrf.mxu0
    %v4934 = vadd.f32 %v4645, %v4933
    %v4935 = vpop.f32.mrf.mxu0
    %4936 = vmatprep.mubr.bf16.mxu0 %v3819
    %4937 = vmatmul.mubr.bf16.gmra.mxu0 %v3818
    %v4938 = vpop.f32.mrf.mxu0
    %v4939 = vadd.f32 %v4650, %v4938
    %v4940 = vpop.f32.mrf.mxu0
    %v4941 = vpop.f32.mrf.mxu0
    %v4942 = vadd.f32 %v4653, %v4941
    %v4943 = vpop.f32.mrf.mxu0
    %4944 = vmatprep.mubr.bf16.mxu0 %v3827
    %4945 = vmatmul.mubr.bf16.gmra.mxu0 %v3826
    %v4946 = vpop.f32.mrf.mxu0
    %v4947 = vadd.f32 %v4658, %v4946
    %v4948 = vpop.f32.mrf.mxu0
    %v4949 = vpop.f32.mrf.mxu0
    %v4950 = vadd.f32 %v4661, %v4949
    %v4951 = vpop.f32.mrf.mxu0
    %4952 = vmatprep.mubr.bf16.mxu0 %v3835
    %4953 = vmatmul.mubr.bf16.gmra.mxu0 %v3834
    %v4954 = vpop.f32.mrf.mxu0
    %v4955 = vadd.f32 %v4666, %v4954
    %v4956 = vpop.f32.mrf.mxu0
    %v4957 = vpop.f32.mrf.mxu0
    %v4958 = vadd.f32 %v4669, %v4957
    %v4959 = vpop.f32.mrf.mxu0
    %4960 = vmatprep.mubr.bf16.mxu0 %v3843
    %4961 = vmatmul.mubr.bf16.gmra.mxu0 %v3842
    %v4962 = vpop.f32.mrf.mxu0
    %v4963 = vadd.f32 %v4674, %v4962
    %v4964 = vpop.f32.mrf.mxu0
    %v4965 = vpop.f32.mrf.mxu0
    %v4966 = vadd.f32 %v4677, %v4965
    %v4967 = vpop.f32.mrf.mxu0
    %4968 = vmatprep.mubr.bf16.mxu0 %v3851
    %4969 = vmatmul.mubr.bf16.gmra.mxu0 %v3850
    %v4970 = vpop.f32.mrf.mxu0
    %v4971 = vadd.f32 %v4682, %v4970
    %v4972 = vpop.f32.mrf.mxu0
    %v4973 = vpop.f32.mrf.mxu0
    %v4974 = vadd.f32 %v4685, %v4973
    %v4975 = vpop.f32.mrf.mxu0
    %4976 = vmatprep.mubr.bf16.mxu0 %v3859
    %4977 = vmatmul.mubr.bf16.gmra.mxu0 %v3858
    %v4978 = vpop.f32.mrf.mxu0
    %v4979 = vadd.f32 %v4690, %v4978
    %v4980 = vpop.f32.mrf.mxu0
    %v4981 = vpop.f32.mrf.mxu0
    %v4982 = vadd.f32 %v4693, %v4981
    %v4983 = vpop.f32.mrf.mxu0
    %4984 = vmatprep.mubr.bf16.mxu0 %v3867
    %4985 = vmatmul.mubr.bf16.gmra.mxu0 %v3866
    %v4986 = vpop.f32.mrf.mxu0
    %v4987 = vadd.f32 %v4698, %v4986
    %v4988 = vpop.f32.mrf.mxu0
    %v4989 = vpop.f32.mrf.mxu0
    %v4990 = vadd.f32 %v4701, %v4989
    %v4991 = vpop.f32.mrf.mxu0
    %4992 = vmatprep.mubr.bf16.mxu0 %v3875
    %4993 = vmatmul.mubr.bf16.gmra.mxu0 %v3874
    %v4994 = vpop.f32.mrf.mxu0
    %v4995 = vadd.f32 %v4706, %v4994
    %v4996 = vpop.f32.mrf.mxu0
    %v4997 = vpop.f32.mrf.mxu0
    %v4998 = vadd.f32 %v4709, %v4997
    %v4999 = vpop.f32.mrf.mxu0
    %5000 = vmatprep.mubr.bf16.mxu0 %v3883
    %5001 = vmatmul.mubr.bf16.gmra.mxu0 %v3882
    %v5002 = vpop.f32.mrf.mxu0
    %v5003 = vadd.f32 %v4714, %v5002
    %v5004 = vpop.f32.mrf.mxu0
    %v5005 = vpop.f32.mrf.mxu0
    %v5006 = vadd.f32 %v4717, %v5005
    %v5007 = vpop.f32.mrf.mxu0
    %5008 = vmatprep.mubr.bf16.mxu0 %v3891
    %5009 = vmatmul.mubr.bf16.gmra.mxu0 %v3890
    %v5010 = vpop.f32.mrf.mxu0
    %v5011 = vadd.f32 %v4722, %v5010
    %v5012 = vpop.f32.mrf.mxu0
    %v5013 = vpop.f32.mrf.mxu0
    %v5014 = vadd.f32 %v4725, %v5013
    %v5015 = vpop.f32.mrf.mxu0
    %5016 = vmatprep.mubr.bf16.mxu0 %v3899
    %5017 = vmatmul.mubr.bf16.gmra.mxu0 %v3898
    %v5018 = vpop.f32.mrf.mxu0
    %v5019 = vadd.f32 %v4730, %v5018
    %v5020 = vpop.f32.mrf.mxu0
    %v5021 = vpop.f32.mrf.mxu0
    %v5022 = vadd.f32 %v4733, %v5021
    %v5023 = vpop.f32.mrf.mxu0
    %5024 = vmatprep.mubr.bf16.mxu0 %v3907
    %5025 = vmatmul.mubr.bf16.gmra.mxu0 %v3906
    %v5026 = vpop.f32.mrf.mxu0
    %v5027 = vadd.f32 %v4738, %v5026
    %v5028 = vpop.f32.mrf.mxu0
    %v5029 = vpop.f32.mrf.mxu0
    %v5030 = vadd.f32 %v4741, %v5029
    %v5031 = vpop.f32.mrf.mxu0
    %5032 = vmatprep.mubr.bf16.mxu0 %v3915
    %5033 = vmatmul.mubr.bf16.gmra.mxu0 %v3914
    %v5034 = vpop.f32.mrf.mxu0
    %v5035 = vadd.f32 %v4746, %v5034
    %v5036 = vpop.f32.mrf.mxu0
    %v5037 = vpop.f32.mrf.mxu0
    %v5038 = vadd.f32 %v4749, %v5037
    %v5039 = vpop.f32.mrf.mxu0
    %5040 = vmatprep.mubr.bf16.mxu0 %v3923
    %5041 = vmatmul.mubr.bf16.gmra.mxu0 %v3922
    %v5042 = vpop.f32.mrf.mxu0
    %v5043 = vadd.f32 %v4754, %v5042
    %v5044 = vpop.f32.mrf.mxu0
    %v5045 = vpop.f32.mrf.mxu0
    %v5046 = vadd.f32 %v4757, %v5045
    %v5047 = vpop.f32.mrf.mxu0
    %5048 = vdwg.mxu0
    %5049 = vmatprep.subr.bf16.mxu0 0
    %5050 = vmatpush1.bf16.msra.mxu0 %v2253
    %5051 = vmatprep.subr.bf16.mxu0 0
    %5052 = vmatpush1.bf16.msra.mxu0 %v2252
    %5053 = vmatprep.subr.bf16.mxu0 0
    %5054 = vmatpush1.bf16.msra.mxu0 %v2251
    %5055 = vmatprep.subr.bf16.mxu0 0
    %5056 = vmatpush1.bf16.msra.mxu0 %v2250
    %5057 = vmatprep.subr.bf16.mxu0 0
    %5058 = vmatpush1.bf16.msra.mxu0 %v2249
    %5059 = vmatprep.subr.bf16.mxu0 0
    %5060 = vmatpush1.bf16.msra.mxu0 %v2248
    %5061 = vmatprep.subr.bf16.mxu0 0
    %5062 = vmatpush1.bf16.msra.mxu0 %v2247
    %5063 = vmatprep.subr.bf16.mxu0 0
    %5064 = vmatpush1.bf16.msra.mxu0 %v2246
    %5065 = vmatprep.subr.bf16.mxu0 0
    %5066 = vmatpush2.bf16.msra.mxu0 %v2261
    %5067 = vmatprep.subr.bf16.mxu0 0
    %5068 = vmatpush2.bf16.msra.mxu0 %v2260
    %5069 = vmatprep.subr.bf16.mxu0 0
    %5070 = vmatpush2.bf16.msra.mxu0 %v2259
    %5071 = vmatprep.subr.bf16.mxu0 0
    %5072 = vmatpush2.bf16.msra.mxu0 %v2258
    %5073 = vmatprep.subr.bf16.mxu0 0
    %5074 = vmatpush2.bf16.msra.mxu0 %v2257
    %5075 = vmatprep.subr.bf16.mxu0 0
    %5076 = vmatpush2.bf16.msra.mxu0 %v2256
    %5077 = vmatprep.subr.bf16.mxu0 0
    %5078 = vmatpush2.bf16.msra.mxu0 %v2255
    %5079 = vmatprep.subr.bf16.mxu0 0
    %5080 = vmatpush2.bf16.msra.mxu0 %v2254
    %5081 = vmatprep.mubr.bf16.mxu0 %v3677
    %5082 = vmatmul.mubr.bf16.gmra.mxu0 %v3676
    %v5083 = vpop.f32.mrf.mxu0
    %v5084 = vadd.f32 %v4795, %v5083
    %v5085 = vpop.f32.mrf.mxu0
    %v5086 = vpop.f32.mrf.mxu0
    %v5087 = vadd.f32 %v4798, %v5086
    %v5088 = vpop.f32.mrf.mxu0
    %5089 = vmatprep.mubr.bf16.mxu0 %v3685
    %5090 = vmatmul.mubr.bf16.gmra.mxu0 %v3684
    %v5091 = vpop.f32.mrf.mxu0
    %v5092 = vadd.f32 %v4803, %v5091
    %v5093 = vpop.f32.mrf.mxu0
    %v5094 = vpop.f32.mrf.mxu0
    %v5095 = vadd.f32 %v4806, %v5094
    %v5096 = vpop.f32.mrf.mxu0
    %5097 = vmatprep.mubr.bf16.mxu0 %v3693
    %5098 = vmatmul.mubr.bf16.gmra.mxu0 %v3692
    %v5099 = vpop.f32.mrf.mxu0
    %v5100 = vadd.f32 %v4811, %v5099
    %v5101 = vpop.f32.mrf.mxu0
    %v5102 = vpop.f32.mrf.mxu0
    %v5103 = vadd.f32 %v4814, %v5102
    %v5104 = vpop.f32.mrf.mxu0
    %5105 = vmatprep.mubr.bf16.mxu0 %v3701
    %5106 = vmatmul.mubr.bf16.gmra.mxu0 %v3700
    %v5107 = vpop.f32.mrf.mxu0
    %v5108 = vadd.f32 %v4819, %v5107
    %v5109 = vpop.f32.mrf.mxu0
    %v5110 = vpop.f32.mrf.mxu0
    %v5111 = vadd.f32 %v4822, %v5110
    %v5112 = vpop.f32.mrf.mxu0
    %5113 = vmatprep.mubr.bf16.mxu0 %v3709
    %5114 = vmatmul.mubr.bf16.gmra.mxu0 %v3708
    %v5115 = vpop.f32.mrf.mxu0
    %v5116 = vadd.f32 %v4827, %v5115
    %v5117 = vpop.f32.mrf.mxu0
    %v5118 = vpop.f32.mrf.mxu0
    %v5119 = vadd.f32 %v4830, %v5118
    %v5120 = vpop.f32.mrf.mxu0
    %5121 = vmatprep.mubr.bf16.mxu0 %v3717
    %5122 = vmatmul.mubr.bf16.gmra.mxu0 %v3716
    %v5123 = vpop.f32.mrf.mxu0
    %v5124 = vadd.f32 %v4835, %v5123
    %v5125 = vpop.f32.mrf.mxu0
    %v5126 = vpop.f32.mrf.mxu0
    %v5127 = vadd.f32 %v4838, %v5126
    %v5128 = vpop.f32.mrf.mxu0
    %5129 = vmatprep.mubr.bf16.mxu0 %v3725
    %5130 = vmatmul.mubr.bf16.gmra.mxu0 %v3724
    %v5131 = vpop.f32.mrf.mxu0
    %v5132 = vadd.f32 %v4843, %v5131
    %v5133 = vpop.f32.mrf.mxu0
    %v5134 = vpop.f32.mrf.mxu0
    %v5135 = vadd.f32 %v4846, %v5134
    %v5136 = vpop.f32.mrf.mxu0
    %5137 = vmatprep.mubr.bf16.mxu0 %v3733
    %5138 = vmatmul.mubr.bf16.gmra.mxu0 %v3732
    %v5139 = vpop.f32.mrf.mxu0
    %v5140 = vadd.f32 %v4851, %v5139
    %v5141 = vpop.f32.mrf.mxu0
    %v5142 = vpop.f32.mrf.mxu0
    %v5143 = vadd.f32 %v4854, %v5142
    %v5144 = vpop.f32.mrf.mxu0
    %5145 = vmatprep.mubr.bf16.mxu0 %v3741
    %5146 = vmatmul.mubr.bf16.gmra.mxu0 %v3740
    %v5147 = vpop.f32.mrf.mxu0
    %v5148 = vadd.f32 %v4859, %v5147
    %v5149 = vpop.f32.mrf.mxu0
    %v5150 = vpop.f32.mrf.mxu0
    %v5151 = vadd.f32 %v4862, %v5150
    %v5152 = vpop.f32.mrf.mxu0
    %5153 = vmatprep.mubr.bf16.mxu0 %v3749
    %5154 = vmatmul.mubr.bf16.gmra.mxu0 %v3748
    %v5155 = vpop.f32.mrf.mxu0
    %v5156 = vadd.f32 %v4867, %v5155
    %v5157 = vpop.f32.mrf.mxu0
    %v5158 = vpop.f32.mrf.mxu0
    %v5159 = vadd.f32 %v4870, %v5158
    %v5160 = vpop.f32.mrf.mxu0
    %5161 = vmatprep.mubr.bf16.mxu0 %v3757
    %5162 = vmatmul.mubr.bf16.gmra.mxu0 %v3756
    %v5163 = vpop.f32.mrf.mxu0
    %v5164 = vadd.f32 %v4875, %v5163
    %v5165 = vpop.f32.mrf.mxu0
    %v5166 = vpop.f32.mrf.mxu0
    %v5167 = vadd.f32 %v4878, %v5166
    %v5168 = vpop.f32.mrf.mxu0
    %5169 = vmatprep.mubr.bf16.mxu0 %v3765
    %5170 = vmatmul.mubr.bf16.gmra.mxu0 %v3764
    %v5171 = vpop.f32.mrf.mxu0
    %v5172 = vadd.f32 %v4883, %v5171
    %v5173 = vpop.f32.mrf.mxu0
    %v5174 = vpop.f32.mrf.mxu0
    %v5175 = vadd.f32 %v4886, %v5174
    %v5176 = vpop.f32.mrf.mxu0
    %5177 = vmatprep.mubr.bf16.mxu0 %v3773
    %5178 = vmatmul.mubr.bf16.gmra.mxu0 %v3772
    %v5179 = vpop.f32.mrf.mxu0
    %v5180 = vadd.f32 %v4891, %v5179
    %v5181 = vpop.f32.mrf.mxu0
    %v5182 = vpop.f32.mrf.mxu0
    %v5183 = vadd.f32 %v4894, %v5182
    %v5184 = vpop.f32.mrf.mxu0
    %5185 = vmatprep.mubr.bf16.mxu0 %v3781
    %5186 = vmatmul.mubr.bf16.gmra.mxu0 %v3780
    %v5187 = vpop.f32.mrf.mxu0
    %v5188 = vadd.f32 %v4899, %v5187
    %v5189 = vpop.f32.mrf.mxu0
    %v5190 = vpop.f32.mrf.mxu0
    %v5191 = vadd.f32 %v4902, %v5190
    %v5192 = vpop.f32.mrf.mxu0
    %5193 = vmatprep.mubr.bf16.mxu0 %v3789
    %5194 = vmatmul.mubr.bf16.gmra.mxu0 %v3788
    %v5195 = vpop.f32.mrf.mxu0
    %v5196 = vadd.f32 %v4907, %v5195
    %v5197 = vpop.f32.mrf.mxu0
    %v5198 = vpop.f32.mrf.mxu0
    %v5199 = vadd.f32 %v4910, %v5198
    %v5200 = vpop.f32.mrf.mxu0
    %5201 = vmatprep.mubr.bf16.mxu0 %v3797
    %5202 = vmatmul.mubr.bf16.gmra.mxu0 %v3796
    %v5203 = vpop.f32.mrf.mxu0
    %v5204 = vadd.f32 %v4915, %v5203
    %v5205 = vpop.f32.mrf.mxu0
    %v5206 = vpop.f32.mrf.mxu0
    %v5207 = vadd.f32 %v4918, %v5206
    %v5208 = vpop.f32.mrf.mxu0
    %5209 = vmatprep.mubr.bf16.mxu0 %v3805
    %5210 = vmatmul.mubr.bf16.gmra.mxu0 %v3804
    %v5211 = vpop.f32.mrf.mxu0
    %v5212 = vadd.f32 %v4923, %v5211
    %v5213 = vpop.f32.mrf.mxu0
    %v5214 = vpop.f32.mrf.mxu0
    %v5215 = vadd.f32 %v4926, %v5214
    %v5216 = vpop.f32.mrf.mxu0
    %5217 = vmatprep.mubr.bf16.mxu0 %v3813
    %5218 = vmatmul.mubr.bf16.gmra.mxu0 %v3812
    %v5219 = vpop.f32.mrf.mxu0
    %v5220 = vadd.f32 %v4931, %v5219
    %v5221 = vpop.f32.mrf.mxu0
    %v5222 = vpop.f32.mrf.mxu0
    %v5223 = vadd.f32 %v4934, %v5222
    %v5224 = vpop.f32.mrf.mxu0
    %5225 = vmatprep.mubr.bf16.mxu0 %v3821
    %5226 = vmatmul.mubr.bf16.gmra.mxu0 %v3820
    %v5227 = vpop.f32.mrf.mxu0
    %v5228 = vadd.f32 %v4939, %v5227
    %v5229 = vpop.f32.mrf.mxu0
    %v5230 = vpop.f32.mrf.mxu0
    %v5231 = vadd.f32 %v4942, %v5230
    %v5232 = vpop.f32.mrf.mxu0
    %5233 = vmatprep.mubr.bf16.mxu0 %v3829
    %5234 = vmatmul.mubr.bf16.gmra.mxu0 %v3828
    %v5235 = vpop.f32.mrf.mxu0
    %v5236 = vadd.f32 %v4947, %v5235
    %v5237 = vpop.f32.mrf.mxu0
    %v5238 = vpop.f32.mrf.mxu0
    %v5239 = vadd.f32 %v4950, %v5238
    %v5240 = vpop.f32.mrf.mxu0
    %5241 = vmatprep.mubr.bf16.mxu0 %v3837
    %5242 = vmatmul.mubr.bf16.gmra.mxu0 %v3836
    %v5243 = vpop.f32.mrf.mxu0
    %v5244 = vadd.f32 %v4955, %v5243
    %v5245 = vpop.f32.mrf.mxu0
    %v5246 = vpop.f32.mrf.mxu0
    %v5247 = vadd.f32 %v4958, %v5246
    %v5248 = vpop.f32.mrf.mxu0
    %5249 = vmatprep.mubr.bf16.mxu0 %v3845
    %5250 = vmatmul.mubr.bf16.gmra.mxu0 %v3844
    %v5251 = vpop.f32.mrf.mxu0
    %v5252 = vadd.f32 %v4963, %v5251
    %v5253 = vpop.f32.mrf.mxu0
    %v5254 = vpop.f32.mrf.mxu0
    %v5255 = vadd.f32 %v4966, %v5254
    %v5256 = vpop.f32.mrf.mxu0
    %5257 = vmatprep.mubr.bf16.mxu0 %v3853
    %5258 = vmatmul.mubr.bf16.gmra.mxu0 %v3852
    %v5259 = vpop.f32.mrf.mxu0
    %v5260 = vadd.f32 %v4971, %v5259
    %v5261 = vpop.f32.mrf.mxu0
    %v5262 = vpop.f32.mrf.mxu0
    %v5263 = vadd.f32 %v4974, %v5262
    %v5264 = vpop.f32.mrf.mxu0
    %5265 = vmatprep.mubr.bf16.mxu0 %v3861
    %5266 = vmatmul.mubr.bf16.gmra.mxu0 %v3860
    %v5267 = vpop.f32.mrf.mxu0
    %v5268 = vadd.f32 %v4979, %v5267
    %v5269 = vpop.f32.mrf.mxu0
    %v5270 = vpop.f32.mrf.mxu0
    %v5271 = vadd.f32 %v4982, %v5270
    %v5272 = vpop.f32.mrf.mxu0
    %5273 = vmatprep.mubr.bf16.mxu0 %v3869
    %5274 = vmatmul.mubr.bf16.gmra.mxu0 %v3868
    %v5275 = vpop.f32.mrf.mxu0
    %v5276 = vadd.f32 %v4987, %v5275
    %v5277 = vpop.f32.mrf.mxu0
    %v5278 = vpop.f32.mrf.mxu0
    %v5279 = vadd.f32 %v4990, %v5278
    %v5280 = vpop.f32.mrf.mxu0
    %5281 = vmatprep.mubr.bf16.mxu0 %v3877
    %5282 = vmatmul.mubr.bf16.gmra.mxu0 %v3876
    %v5283 = vpop.f32.mrf.mxu0
    %v5284 = vadd.f32 %v4995, %v5283
    %v5285 = vpop.f32.mrf.mxu0
    %v5286 = vpop.f32.mrf.mxu0
    %v5287 = vadd.f32 %v4998, %v5286
    %v5288 = vpop.f32.mrf.mxu0
    %5289 = vmatprep.mubr.bf16.mxu0 %v3885
    %5290 = vmatmul.mubr.bf16.gmra.mxu0 %v3884
    %v5291 = vpop.f32.mrf.mxu0
    %v5292 = vadd.f32 %v5003, %v5291
    %v5293 = vpop.f32.mrf.mxu0
    %v5294 = vpop.f32.mrf.mxu0
    %v5295 = vadd.f32 %v5006, %v5294
    %v5296 = vpop.f32.mrf.mxu0
    %5297 = vmatprep.mubr.bf16.mxu0 %v3893
    %5298 = vmatmul.mubr.bf16.gmra.mxu0 %v3892
    %v5299 = vpop.f32.mrf.mxu0
    %v5300 = vadd.f32 %v5011, %v5299
    %v5301 = vpop.f32.mrf.mxu0
    %v5302 = vpop.f32.mrf.mxu0
    %v5303 = vadd.f32 %v5014, %v5302
    %v5304 = vpop.f32.mrf.mxu0
    %5305 = vmatprep.mubr.bf16.mxu0 %v3901
    %5306 = vmatmul.mubr.bf16.gmra.mxu0 %v3900
    %v5307 = vpop.f32.mrf.mxu0
    %v5308 = vadd.f32 %v5019, %v5307
    %v5309 = vpop.f32.mrf.mxu0
    %v5310 = vpop.f32.mrf.mxu0
    %v5311 = vadd.f32 %v5022, %v5310
    %v5312 = vpop.f32.mrf.mxu0
    %5313 = vmatprep.mubr.bf16.mxu0 %v3909
    %5314 = vmatmul.mubr.bf16.gmra.mxu0 %v3908
    %v5315 = vpop.f32.mrf.mxu0
    %v5316 = vadd.f32 %v5027, %v5315
    %v5317 = vpop.f32.mrf.mxu0
    %v5318 = vpop.f32.mrf.mxu0
    %v5319 = vadd.f32 %v5030, %v5318
    %v5320 = vpop.f32.mrf.mxu0
    %5321 = vmatprep.mubr.bf16.mxu0 %v3917
    %5322 = vmatmul.mubr.bf16.gmra.mxu0 %v3916
    %v5323 = vpop.f32.mrf.mxu0
    %v5324 = vadd.f32 %v5035, %v5323
    %v5325 = vpop.f32.mrf.mxu0
    %v5326 = vpop.f32.mrf.mxu0
    %v5327 = vadd.f32 %v5038, %v5326
    %v5328 = vpop.f32.mrf.mxu0
    %5329 = vmatprep.mubr.bf16.mxu0 %v3925
    %5330 = vmatmul.mubr.bf16.gmra.mxu0 %v3924
    %v5331 = vpop.f32.mrf.mxu0
    %v5332 = vadd.f32 %v5043, %v5331
    %v5333 = vpop.f32.mrf.mxu0
    %v5334 = vpop.f32.mrf.mxu0
    %v5335 = vadd.f32 %v5046, %v5334
    %v5336 = vpop.f32.mrf.mxu0
    %5337 = vdwg.mxu0
    %v5338 = vmax.f32 %v5084, 0.0
    %v5339 = vmax.f32 %v5087, 0.0
    %v5340 = vmax.f32 %v5092, 0.0
    %v5341 = vmax.f32 %v5095, 0.0
    %v5342 = vmax.f32 %v5100, 0.0
    %v5343 = vmax.f32 %v5103, 0.0
    %v5344 = vmax.f32 %v5108, 0.0
    %v5345 = vmax.f32 %v5111, 0.0
    %v5346 = vmax.f32 %v5116, 0.0
    %v5347 = vmax.f32 %v5119, 0.0
    %v5348 = vmax.f32 %v5124, 0.0
    %v5349 = vmax.f32 %v5127, 0.0
    %v5350 = vmax.f32 %v5132, 0.0
    %v5351 = vmax.f32 %v5135, 0.0
    %v5352 = vmax.f32 %v5140, 0.0
    %v5353 = vmax.f32 %v5143, 0.0
    %v5354 = vmax.f32 %v5148, 0.0
    %v5355 = vmax.f32 %v5151, 0.0
    %v5356 = vmax.f32 %v5156, 0.0
    %v5357 = vmax.f32 %v5159, 0.0
    %v5358 = vmax.f32 %v5164, 0.0
    %v5359 = vmax.f32 %v5167, 0.0
    %v5360 = vmax.f32 %v5172, 0.0
    %v5361 = vmax.f32 %v5175, 0.0
    %v5362 = vmax.f32 %v5180, 0.0
    %v5363 = vmax.f32 %v5183, 0.0
    %v5364 = vmax.f32 %v5188, 0.0
    %v5365 = vmax.f32 %v5191, 0.0
    %v5366 = vmax.f32 %v5196, 0.0
    %v5367 = vmax.f32 %v5199, 0.0
    %v5368 = vmax.f32 %v5204, 0.0
    %v5369 = vmax.f32 %v5207, 0.0
    %v5370 = vmax.f32 %v5212, 0.0
    %v5371 = vmax.f32 %v5215, 0.0
    %v5372 = vmax.f32 %v5220, 0.0
    %v5373 = vmax.f32 %v5223, 0.0
    %v5374 = vmax.f32 %v5228, 0.0
    %v5375 = vmax.f32 %v5231, 0.0
    %v5376 = vmax.f32 %v5236, 0.0
    %v5377 = vmax.f32 %v5239, 0.0
    %v5378 = vmax.f32 %v5244, 0.0
    %v5379 = vmax.f32 %v5247, 0.0
    %v5380 = vmax.f32 %v5252, 0.0
    %v5381 = vmax.f32 %v5255, 0.0
    %v5382 = vmax.f32 %v5260, 0.0
    %v5383 = vmax.f32 %v5263, 0.0
    %v5384 = vmax.f32 %v5268, 0.0
    %v5385 = vmax.f32 %v5271, 0.0
    %v5386 = vmax.f32 %v5276, 0.0
    %v5387 = vmax.f32 %v5279, 0.0
    %v5388 = vmax.f32 %v5284, 0.0
    %v5389 = vmax.f32 %v5287, 0.0
    %v5390 = vmax.f32 %v5292, 0.0
    %v5391 = vmax.f32 %v5295, 0.0
    %v5392 = vmax.f32 %v5300, 0.0
    %v5393 = vmax.f32 %v5303, 0.0
    %v5394 = vmax.f32 %v5308, 0.0
    %v5395 = vmax.f32 %v5311, 0.0
    %v5396 = vmax.f32 %v5316, 0.0
    %v5397 = vmax.f32 %v5319, 0.0
    %v5398 = vmax.f32 %v5324, 0.0
    %v5399 = vmax.f32 %v5327, 0.0
    %v5400 = vmax.f32 %v5332, 0.0
    %v5401 = vmax.f32 %v5335, 0.0
    %v5402 = vpack.c.bf16 %v5339, %v5338
    %v5403 = vpack.c.bf16 %v5341, %v5340
    %v5404 = vpack.c.bf16 %v5343, %v5342
    %v5405 = vpack.c.bf16 %v5345, %v5344
    %v5406 = vpack.c.bf16 %v5347, %v5346
    %v5407 = vpack.c.bf16 %v5349, %v5348
    %v5408 = vpack.c.bf16 %v5351, %v5350
    %v5409 = vpack.c.bf16 %v5353, %v5352
    %v5410 = vpack.c.bf16 %v5355, %v5354
    %v5411 = vpack.c.bf16 %v5357, %v5356
    %v5412 = vpack.c.bf16 %v5359, %v5358
    %v5413 = vpack.c.bf16 %v5361, %v5360
    %v5414 = vpack.c.bf16 %v5363, %v5362
    %v5415 = vpack.c.bf16 %v5365, %v5364
    %v5416 = vpack.c.bf16 %v5367, %v5366
    %v5417 = vpack.c.bf16 %v5369, %v5368
    %v5418 = vpack.c.bf16 %v5371, %v5370
    %v5419 = vpack.c.bf16 %v5373, %v5372
    %v5420 = vpack.c.bf16 %v5375, %v5374
    %v5421 = vpack.c.bf16 %v5377, %v5376
    %v5422 = vpack.c.bf16 %v5379, %v5378
    %v5423 = vpack.c.bf16 %v5381, %v5380
    %v5424 = vpack.c.bf16 %v5383, %v5382
    %v5425 = vpack.c.bf16 %v5385, %v5384
    %v5426 = vpack.c.bf16 %v5387, %v5386
    %v5427 = vpack.c.bf16 %v5389, %v5388
    %v5428 = vpack.c.bf16 %v5391, %v5390
    %v5429 = vpack.c.bf16 %v5393, %v5392
    %v5430 = vpack.c.bf16 %v5395, %v5394
    %v5431 = vpack.c.bf16 %v5397, %v5396
    %v5432 = vpack.c.bf16 %v5399, %v5398
    %v5433 = vpack.c.bf16 %v5401, %v5400
    %v5434 = vld [vmem:[%s5] sm:$0xff]
    %v5435 = vld [vmem:[%s5 + $0x8] sm:$0xff]
    %v5436 = vld [vmem:[%s5 + $0x10] sm:$0xff]
    %v5437 = vld [vmem:[%s5 + $0x18] sm:$0xff]
    %v5438 = vld [vmem:[%s5 + $0x20] sm:$0xff]
    %v5439 = vld [vmem:[%s5 + $0x28] sm:$0xff]
    %v5440 = vld [vmem:[%s5 + $0x30] sm:$0xff]
    %v5441 = vld [vmem:[%s5 + $0x38] sm:$0xff]
    %v5442 = vld [vmem:[%s5 + $0x40] sm:$0xff]
    %v5443 = vld [vmem:[%s5 + $0x48] sm:$0xff]
    %v5444 = vld [vmem:[%s5 + $0x50] sm:$0xff]
    %v5445 = vld [vmem:[%s5 + $0x58] sm:$0xff]
    %v5446 = vld [vmem:[%s5 + $0x60] sm:$0xff]
    %v5447 = vld [vmem:[%s5 + $0x68] sm:$0xff]
    %v5448 = vld [vmem:[%s5 + $0x70] sm:$0xff]
    %v5449 = vld [vmem:[%s5 + $0x78] sm:$0xff]
    %v5450 = vld [vmem:[%s5 + $0x80] sm:$0xff]
    %v5451 = vld [vmem:[%s5 + $0x88] sm:$0xff]
    %v5452 = vld [vmem:[%s5 + $0x90] sm:$0xff]
    %v5453 = vld [vmem:[%s5 + $0x98] sm:$0xff]
    %v5454 = vld [vmem:[%s5 + $0xa0] sm:$0xff]
    %v5455 = vld [vmem:[%s5 + $0xa8] sm:$0xff]
    %v5456 = vld [vmem:[%s5 + $0xb0] sm:$0xff]
    %v5457 = vld [vmem:[%s5 + $0xb8] sm:$0xff]
    %v5458 = vld [vmem:[%s5 + $0xc0] sm:$0xff]
    %v5459 = vld [vmem:[%s5 + $0xc8] sm:$0xff]
    %v5460 = vld [vmem:[%s5 + $0xd0] sm:$0xff]
    %v5461 = vld [vmem:[%s5 + $0xd8] sm:$0xff]
    %v5462 = vld [vmem:[%s5 + $0xe0] sm:$0xff]
    %v5463 = vld [vmem:[%s5 + $0xe8] sm:$0xff]
    %v5464 = vld [vmem:[%s5 + $0xf0] sm:$0xff]
    %v5465 = vld [vmem:[%s5 + $0xf8] sm:$0xff]
    %v5466 = vld [vmem:[%s5 + $0x100] sm:$0xff]
    %v5467 = vld [vmem:[%s5 + $0x108] sm:$0xff]
    %v5468 = vld [vmem:[%s5 + $0x110] sm:$0xff]
    %v5469 = vld [vmem:[%s5 + $0x118] sm:$0xff]
    %v5470 = vld [vmem:[%s5 + $0x120] sm:$0xff]
    %v5471 = vld [vmem:[%s5 + $0x128] sm:$0xff]
    %v5472 = vld [vmem:[%s5 + $0x130] sm:$0xff]
    %v5473 = vld [vmem:[%s5 + $0x138] sm:$0xff]
    %v5474 = vld [vmem:[%s5 + $0x140] sm:$0xff]
    %v5475 = vld [vmem:[%s5 + $0x148] sm:$0xff]
    %v5476 = vld [vmem:[%s5 + $0x150] sm:$0xff]
    %v5477 = vld [vmem:[%s5 + $0x158] sm:$0xff]
    %v5478 = vld [vmem:[%s5 + $0x160] sm:$0xff]
    %v5479 = vld [vmem:[%s5 + $0x168] sm:$0xff]
    %v5480 = vld [vmem:[%s5 + $0x170] sm:$0xff]
    %v5481 = vld [vmem:[%s5 + $0x178] sm:$0xff]
    %v5482 = vld [vmem:[%s5 + $0x180] sm:$0xff]
    %v5483 = vld [vmem:[%s5 + $0x188] sm:$0xff]
    %v5484 = vld [vmem:[%s5 + $0x190] sm:$0xff]
    %v5485 = vld [vmem:[%s5 + $0x198] sm:$0xff]
    %v5486 = vld [vmem:[%s5 + $0x1a0] sm:$0xff]
    %v5487 = vld [vmem:[%s5 + $0x1a8] sm:$0xff]
    %v5488 = vld [vmem:[%s5 + $0x1b0] sm:$0xff]
    %v5489 = vld [vmem:[%s5 + $0x1b8] sm:$0xff]
    %v5490 = vld [vmem:[%s5 + $0x1c0] sm:$0xff]
    %v5491 = vld [vmem:[%s5 + $0x1c8] sm:$0xff]
    %v5492 = vld [vmem:[%s5 + $0x1d0] sm:$0xff]
    %v5493 = vld [vmem:[%s5 + $0x1d8] sm:$0xff]
    %v5494 = vld [vmem:[%s5 + $0x1e0] sm:$0xff]
    %v5495 = vld [vmem:[%s5 + $0x1e8] sm:$0xff]
    %v5496 = vld [vmem:[%s5 + $0x1f0] sm:$0xff]
    %v5497 = vld [vmem:[%s5 + $0x1f8] sm:$0xff]
    %v5498 = vld [vmem:[%s6] sm:$0xff]
    %v5499 = vld [vmem:[%s6 + $0x8] sm:$0xff]
    %v5500 = vld [vmem:[%s6 + $0x10] sm:$0xff]
    %v5501 = vld [vmem:[%s6 + $0x18] sm:$0xff]
    %v5502 = vld [vmem:[%s6 + $0x20] sm:$0xff]
    %v5503 = vld [vmem:[%s6 + $0x28] sm:$0xff]
    %v5504 = vld [vmem:[%s6 + $0x30] sm:$0xff]
    %v5505 = vld [vmem:[%s6 + $0x38] sm:$0xff]
    %v5506 = vld [vmem:[%s6 + $0x40] sm:$0xff]
    %v5507 = vld [vmem:[%s6 + $0x48] sm:$0xff]
    %v5508 = vld [vmem:[%s6 + $0x50] sm:$0xff]
    %v5509 = vld [vmem:[%s6 + $0x58] sm:$0xff]
    %v5510 = vld [vmem:[%s6 + $0x60] sm:$0xff]
    %v5511 = vld [vmem:[%s6 + $0x68] sm:$0xff]
    %v5512 = vld [vmem:[%s6 + $0x70] sm:$0xff]
    %v5513 = vld [vmem:[%s6 + $0x78] sm:$0xff]
    %v5514 = vld [vmem:[%s6 + $0x80] sm:$0xff]
    %v5515 = vld [vmem:[%s6 + $0x88] sm:$0xff]
    %v5516 = vld [vmem:[%s6 + $0x90] sm:$0xff]
    %v5517 = vld [vmem:[%s6 + $0x98] sm:$0xff]
    %v5518 = vld [vmem:[%s6 + $0xa0] sm:$0xff]
    %v5519 = vld [vmem:[%s6 + $0xa8] sm:$0xff]
    %v5520 = vld [vmem:[%s6 + $0xb0] sm:$0xff]
    %v5521 = vld [vmem:[%s6 + $0xb8] sm:$0xff]
    %v5522 = vld [vmem:[%s6 + $0xc0] sm:$0xff]
    %v5523 = vld [vmem:[%s6 + $0xc8] sm:$0xff]
    %v5524 = vld [vmem:[%s6 + $0xd0] sm:$0xff]
    %v5525 = vld [vmem:[%s6 + $0xd8] sm:$0xff]
    %v5526 = vld [vmem:[%s6 + $0xe0] sm:$0xff]
    %v5527 = vld [vmem:[%s6 + $0xe8] sm:$0xff]
    %v5528 = vld [vmem:[%s6 + $0xf0] sm:$0xff]
    %v5529 = vld [vmem:[%s6 + $0xf8] sm:$0xff]
    %5531 = vset.pattern.permute.xlu0 0
    %5532 = vperm.xlu0 %5531, %v5498
    %v5533 = vpop.permute.xlu0 %5532
    %5536 = vset.pattern.permute.xlu0 0
    %5537 = vperm.xlu0 %5536, %v5499
    %v5538 = vpop.permute.xlu0 %5537
    %5541 = vset.pattern.permute.xlu0 0
    %5542 = vperm.xlu0 %5541, %v5500
    %v5543 = vpop.permute.xlu0 %5542
    %5546 = vset.pattern.permute.xlu0 0
    %5547 = vperm.xlu0 %5546, %v5501
    %v5548 = vpop.permute.xlu0 %5547
    %5551 = vset.pattern.permute.xlu0 0
    %5552 = vperm.xlu0 %5551, %v5502
    %v5553 = vpop.permute.xlu0 %5552
    %5556 = vset.pattern.permute.xlu0 0
    %5557 = vperm.xlu0 %5556, %v5503
    %v5558 = vpop.permute.xlu0 %5557
    %5561 = vset.pattern.permute.xlu0 0
    %5562 = vperm.xlu0 %5561, %v5504
    %v5563 = vpop.permute.xlu0 %5562
    %5566 = vset.pattern.permute.xlu0 0
    %5567 = vperm.xlu0 %5566, %v5505
    %v5568 = vpop.permute.xlu0 %5567
    %5571 = vset.pattern.permute.xlu0 0
    %5572 = vperm.xlu0 %5571, %v5506
    %v5573 = vpop.permute.xlu0 %5572
    %5576 = vset.pattern.permute.xlu0 0
    %5577 = vperm.xlu0 %5576, %v5507
    %v5578 = vpop.permute.xlu0 %5577
    %5581 = vset.pattern.permute.xlu0 0
    %5582 = vperm.xlu0 %5581, %v5508
    %v5583 = vpop.permute.xlu0 %5582
    %5586 = vset.pattern.permute.xlu0 0
    %5587 = vperm.xlu0 %5586, %v5509
    %v5588 = vpop.permute.xlu0 %5587
    %5591 = vset.pattern.permute.xlu0 0
    %5592 = vperm.xlu0 %5591, %v5510
    %v5593 = vpop.permute.xlu0 %5592
    %5596 = vset.pattern.permute.xlu0 0
    %5597 = vperm.xlu0 %5596, %v5511
    %v5598 = vpop.permute.xlu0 %5597
    %5601 = vset.pattern.permute.xlu0 0
    %5602 = vperm.xlu0 %5601, %v5512
    %v5603 = vpop.permute.xlu0 %5602
    %5606 = vset.pattern.permute.xlu0 0
    %5607 = vperm.xlu0 %5606, %v5513
    %v5608 = vpop.permute.xlu0 %5607
    %5611 = vset.pattern.permute.xlu0 0
    %5612 = vperm.xlu0 %5611, %v5514
    %v5613 = vpop.permute.xlu0 %5612
    %5616 = vset.pattern.permute.xlu0 0
    %5617 = vperm.xlu0 %5616, %v5515
    %v5618 = vpop.permute.xlu0 %5617
    %5621 = vset.pattern.permute.xlu0 0
    %5622 = vperm.xlu0 %5621, %v5516
    %v5623 = vpop.permute.xlu0 %5622
    %5626 = vset.pattern.permute.xlu0 0
    %5627 = vperm.xlu0 %5626, %v5517
    %v5628 = vpop.permute.xlu0 %5627
    %5631 = vset.pattern.permute.xlu0 0
    %5632 = vperm.xlu0 %5631, %v5518
    %v5633 = vpop.permute.xlu0 %5632
    %5636 = vset.pattern.permute.xlu0 0
    %5637 = vperm.xlu0 %5636, %v5519
    %v5638 = vpop.permute.xlu0 %5637
    %5641 = vset.pattern.permute.xlu0 0
    %5642 = vperm.xlu0 %5641, %v5520
    %v5643 = vpop.permute.xlu0 %5642
    %5646 = vset.pattern.permute.xlu0 0
    %5647 = vperm.xlu0 %5646, %v5521
    %v5648 = vpop.permute.xlu0 %5647
    %5651 = vset.pattern.permute.xlu0 0
    %5652 = vperm.xlu0 %5651, %v5522
    %v5653 = vpop.permute.xlu0 %5652
    %5656 = vset.pattern.permute.xlu0 0
    %5657 = vperm.xlu0 %5656, %v5523
    %v5658 = vpop.permute.xlu0 %5657
    %5661 = vset.pattern.permute.xlu0 0
    %5662 = vperm.xlu0 %5661, %v5524
    %v5663 = vpop.permute.xlu0 %5662
    %5666 = vset.pattern.permute.xlu0 0
    %5667 = vperm.xlu0 %5666, %v5525
    %v5668 = vpop.permute.xlu0 %5667
    %5671 = vset.pattern.permute.xlu0 0
    %5672 = vperm.xlu0 %5671, %v5526
    %v5673 = vpop.permute.xlu0 %5672
    %5676 = vset.pattern.permute.xlu0 0
    %5677 = vperm.xlu0 %5676, %v5527
    %v5678 = vpop.permute.xlu0 %5677
    %5681 = vset.pattern.permute.xlu0 0
    %5682 = vperm.xlu0 %5681, %v5528
    %v5683 = vpop.permute.xlu0 %5682
    %5686 = vset.pattern.permute.xlu0 0
    %5687 = vperm.xlu0 %5686, %v5529
    %v5688 = vpop.permute.xlu0 %5687
    %v5754 = vunpack.c.l.b16 %v5434
    %v5755 = vunpack.c.h.b16 %v5434
    %v5756 = vunpack.c.l.b16 %v5435
    %v5757 = vunpack.c.h.b16 %v5435
    %v5758 = vunpack.c.l.b16 %v5436
    %v5759 = vunpack.c.h.b16 %v5436
    %v5760 = vunpack.c.l.b16 %v5437
    %v5761 = vunpack.c.h.b16 %v5437
    %v5762 = vunpack.c.l.b16 %v5438
    %v5763 = vunpack.c.h.b16 %v5438
    %v5764 = vunpack.c.l.b16 %v5439
    %v5765 = vunpack.c.h.b16 %v5439
    %v5766 = vunpack.c.l.b16 %v5440
    %v5767 = vunpack.c.h.b16 %v5440
    %v5768 = vunpack.c.l.b16 %v5441
    %v5769 = vunpack.c.h.b16 %v5441
    %v5770 = vunpack.c.l.b16 %v5442
    %v5771 = vunpack.c.h.b16 %v5442
    %v5772 = vunpack.c.l.b16 %v5443
    %v5773 = vunpack.c.h.b16 %v5443
    %v5774 = vunpack.c.l.b16 %v5444
    %v5775 = vunpack.c.h.b16 %v5444
    %v5776 = vunpack.c.l.b16 %v5445
    %v5777 = vunpack.c.h.b16 %v5445
    %v5778 = vunpack.c.l.b16 %v5446
    %v5779 = vunpack.c.h.b16 %v5446
    %v5780 = vunpack.c.l.b16 %v5447
    %v5781 = vunpack.c.h.b16 %v5447
    %v5782 = vunpack.c.l.b16 %v5448
    %v5783 = vunpack.c.h.b16 %v5448
    %v5784 = vunpack.c.l.b16 %v5449
    %v5785 = vunpack.c.h.b16 %v5449
    %v5786 = vunpack.c.l.b16 %v5450
    %v5787 = vunpack.c.h.b16 %v5450
    %v5788 = vunpack.c.l.b16 %v5451
    %v5789 = vunpack.c.h.b16 %v5451
    %v5790 = vunpack.c.l.b16 %v5452
    %v5791 = vunpack.c.h.b16 %v5452
    %v5792 = vunpack.c.l.b16 %v5453
    %v5793 = vunpack.c.h.b16 %v5453
    %v5794 = vunpack.c.l.b16 %v5454
    %v5795 = vunpack.c.h.b16 %v5454
    %v5796 = vunpack.c.l.b16 %v5455
    %v5797 = vunpack.c.h.b16 %v5455
    %v5798 = vunpack.c.l.b16 %v5456
    %v5799 = vunpack.c.h.b16 %v5456
    %v5800 = vunpack.c.l.b16 %v5457
    %v5801 = vunpack.c.h.b16 %v5457
    %v5802 = vunpack.c.l.b16 %v5458
    %v5803 = vunpack.c.h.b16 %v5458
    %v5804 = vunpack.c.l.b16 %v5459
    %v5805 = vunpack.c.h.b16 %v5459
    %v5806 = vunpack.c.l.b16 %v5460
    %v5807 = vunpack.c.h.b16 %v5460
    %v5808 = vunpack.c.l.b16 %v5461
    %v5809 = vunpack.c.h.b16 %v5461
    %v5810 = vunpack.c.l.b16 %v5462
    %v5811 = vunpack.c.h.b16 %v5462
    %v5812 = vunpack.c.l.b16 %v5463
    %v5813 = vunpack.c.h.b16 %v5463
    %v5814 = vunpack.c.l.b16 %v5464
    %v5815 = vunpack.c.h.b16 %v5464
    %v5816 = vunpack.c.l.b16 %v5465
    %v5817 = vunpack.c.h.b16 %v5465
    %v5818 = vunpack.c.l.b16 %v5466
    %v5819 = vunpack.c.h.b16 %v5466
    %v5820 = vunpack.c.l.b16 %v5467
    %v5821 = vunpack.c.h.b16 %v5467
    %v5822 = vunpack.c.l.b16 %v5468
    %v5823 = vunpack.c.h.b16 %v5468
    %v5824 = vunpack.c.l.b16 %v5469
    %v5825 = vunpack.c.h.b16 %v5469
    %v5826 = vunpack.c.l.b16 %v5470
    %v5827 = vunpack.c.h.b16 %v5470
    %v5828 = vunpack.c.l.b16 %v5471
    %v5829 = vunpack.c.h.b16 %v5471
    %v5830 = vunpack.c.l.b16 %v5472
    %v5831 = vunpack.c.h.b16 %v5472
    %v5832 = vunpack.c.l.b16 %v5473
    %v5833 = vunpack.c.h.b16 %v5473
    %v5834 = vunpack.c.l.b16 %v5474
    %v5835 = vunpack.c.h.b16 %v5474
    %v5836 = vunpack.c.l.b16 %v5475
    %v5837 = vunpack.c.h.b16 %v5475
    %v5838 = vunpack.c.l.b16 %v5476
    %v5839 = vunpack.c.h.b16 %v5476
    %v5840 = vunpack.c.l.b16 %v5477
    %v5841 = vunpack.c.h.b16 %v5477
    %v5842 = vunpack.c.l.b16 %v5478
    %v5843 = vunpack.c.h.b16 %v5478
    %v5844 = vunpack.c.l.b16 %v5479
    %v5845 = vunpack.c.h.b16 %v5479
    %v5846 = vunpack.c.l.b16 %v5480
    %v5847 = vunpack.c.h.b16 %v5480
    %v5848 = vunpack.c.l.b16 %v5481
    %v5849 = vunpack.c.h.b16 %v5481
    %v5850 = vunpack.c.l.b16 %v5482
    %v5851 = vunpack.c.h.b16 %v5482
    %v5852 = vunpack.c.l.b16 %v5483
    %v5853 = vunpack.c.h.b16 %v5483
    %v5854 = vunpack.c.l.b16 %v5484
    %v5855 = vunpack.c.h.b16 %v5484
    %v5856 = vunpack.c.l.b16 %v5485
    %v5857 = vunpack.c.h.b16 %v5485
    %v5858 = vunpack.c.l.b16 %v5486
    %v5859 = vunpack.c.h.b16 %v5486
    %v5860 = vunpack.c.l.b16 %v5487
    %v5861 = vunpack.c.h.b16 %v5487
    %v5862 = vunpack.c.l.b16 %v5488
    %v5863 = vunpack.c.h.b16 %v5488
    %v5864 = vunpack.c.l.b16 %v5489
    %v5865 = vunpack.c.h.b16 %v5489
    %v5866 = vunpack.c.l.b16 %v5490
    %v5867 = vunpack.c.h.b16 %v5490
    %v5868 = vunpack.c.l.b16 %v5491
    %v5869 = vunpack.c.h.b16 %v5491
    %v5870 = vunpack.c.l.b16 %v5492
    %v5871 = vunpack.c.h.b16 %v5492
    %v5872 = vunpack.c.l.b16 %v5493
    %v5873 = vunpack.c.h.b16 %v5493
    %v5874 = vunpack.c.l.b16 %v5494
    %v5875 = vunpack.c.h.b16 %v5494
    %v5876 = vunpack.c.l.b16 %v5495
    %v5877 = vunpack.c.h.b16 %v5495
    %v5878 = vunpack.c.l.b16 %v5496
    %v5879 = vunpack.c.h.b16 %v5496
    %v5880 = vunpack.c.l.b16 %v5497
    %v5881 = vunpack.c.h.b16 %v5497
    %v5882 = vpack.c.b16 %v5758, %v5754
    %v5883 = vpack.c.b16 %v5759, %v5755
    %v5884 = vpack.c.b16 %v5760, %v5756
    %v5885 = vpack.c.b16 %v5761, %v5757
    %v5886 = vpack.c.b16 %v5766, %v5762
    %v5887 = vpack.c.b16 %v5767, %v5763
    %v5888 = vpack.c.b16 %v5768, %v5764
    %v5889 = vpack.c.b16 %v5769, %v5765
    %v5890 = vpack.c.b16 %v5774, %v5770
    %v5891 = vpack.c.b16 %v5775, %v5771
    %v5892 = vpack.c.b16 %v5776, %v5772
    %v5893 = vpack.c.b16 %v5777, %v5773
    %v5894 = vpack.c.b16 %v5782, %v5778
    %v5895 = vpack.c.b16 %v5783, %v5779
    %v5896 = vpack.c.b16 %v5784, %v5780
    %v5897 = vpack.c.b16 %v5785, %v5781
    %v5898 = vpack.c.b16 %v5790, %v5786
    %v5899 = vpack.c.b16 %v5791, %v5787
    %v5900 = vpack.c.b16 %v5792, %v5788
    %v5901 = vpack.c.b16 %v5793, %v5789
    %v5902 = vpack.c.b16 %v5798, %v5794
    %v5903 = vpack.c.b16 %v5799, %v5795
    %v5904 = vpack.c.b16 %v5800, %v5796
    %v5905 = vpack.c.b16 %v5801, %v5797
    %v5906 = vpack.c.b16 %v5806, %v5802
    %v5907 = vpack.c.b16 %v5807, %v5803
    %v5908 = vpack.c.b16 %v5808, %v5804
    %v5909 = vpack.c.b16 %v5809, %v5805
    %v5910 = vpack.c.b16 %v5814, %v5810
    %v5911 = vpack.c.b16 %v5815, %v5811
    %v5912 = vpack.c.b16 %v5816, %v5812
    %v5913 = vpack.c.b16 %v5817, %v5813
    %v5914 = vpack.c.b16 %v5822, %v5818
    %v5915 = vpack.c.b16 %v5823, %v5819
    %v5916 = vpack.c.b16 %v5824, %v5820
    %v5917 = vpack.c.b16 %v5825, %v5821
    %v5918 = vpack.c.b16 %v5830, %v5826
    %v5919 = vpack.c.b16 %v5831, %v5827
    %v5920 = vpack.c.b16 %v5832, %v5828
    %v5921 = vpack.c.b16 %v5833, %v5829
    %v5922 = vpack.c.b16 %v5838, %v5834
    %v5923 = vpack.c.b16 %v5839, %v5835
    %v5924 = vpack.c.b16 %v5840, %v5836
    %v5925 = vpack.c.b16 %v5841, %v5837
    %v5926 = vpack.c.b16 %v5846, %v5842
    %v5927 = vpack.c.b16 %v5847, %v5843
    %v5928 = vpack.c.b16 %v5848, %v5844
    %v5929 = vpack.c.b16 %v5849, %v5845
    %v5930 = vpack.c.b16 %v5854, %v5850
    %v5931 = vpack.c.b16 %v5855, %v5851
    %v5932 = vpack.c.b16 %v5856, %v5852
    %v5933 = vpack.c.b16 %v5857, %v5853
    %v5934 = vpack.c.b16 %v5862, %v5858
    %v5935 = vpack.c.b16 %v5863, %v5859
    %v5936 = vpack.c.b16 %v5864, %v5860
    %v5937 = vpack.c.b16 %v5865, %v5861
    %v5938 = vpack.c.b16 %v5870, %v5866
    %v5939 = vpack.c.b16 %v5871, %v5867
    %v5940 = vpack.c.b16 %v5872, %v5868
    %v5941 = vpack.c.b16 %v5873, %v5869
    %v5942 = vpack.c.b16 %v5878, %v5874
    %v5943 = vpack.c.b16 %v5879, %v5875
    %v5944 = vpack.c.b16 %v5880, %v5876
    %v5945 = vpack.c.b16 %v5881, %v5877
    %6010 = vmatprep.subr.bf16.mxu0 0
    %6011 = vmatpush1.bf16.msra.mxu0 %v5409
    %6012 = vmatprep.subr.bf16.mxu0 0
    %6013 = vmatpush1.bf16.msra.mxu0 %v5408
    %6014 = vmatprep.subr.bf16.mxu0 0
    %6015 = vmatpush1.bf16.msra.mxu0 %v5407
    %6016 = vmatprep.subr.bf16.mxu0 0
    %6017 = vmatpush1.bf16.msra.mxu0 %v5406
    %6018 = vmatprep.subr.bf16.mxu0 0
    %6019 = vmatpush1.bf16.msra.mxu0 %v5405
    %6020 = vmatprep.subr.bf16.mxu0 0
    %6021 = vmatpush1.bf16.msra.mxu0 %v5404
    %6022 = vmatprep.subr.bf16.mxu0 0
    %6023 = vmatpush1.bf16.msra.mxu0 %v5403
    %6024 = vmatprep.subr.bf16.mxu0 0
    %6025 = vmatpush1.bf16.msra.mxu0 %v5402
    %6026 = vmatprep.subr.bf16.mxu0 0
    %6027 = vmatpush2.bf16.msra.mxu0 %v5417
    %6028 = vmatprep.subr.bf16.mxu0 0
    %6029 = vmatpush2.bf16.msra.mxu0 %v5416
    %6030 = vmatprep.subr.bf16.mxu0 0
    %6031 = vmatpush2.bf16.msra.mxu0 %v5415
    %6032 = vmatprep.subr.bf16.mxu0 0
    %6033 = vmatpush2.bf16.msra.mxu0 %v5414
    %6034 = vmatprep.subr.bf16.mxu0 0
    %6035 = vmatpush2.bf16.msra.mxu0 %v5413
    %6036 = vmatprep.subr.bf16.mxu0 0
    %6037 = vmatpush2.bf16.msra.mxu0 %v5412
    %6038 = vmatprep.subr.bf16.mxu0 0
    %6039 = vmatpush2.bf16.msra.mxu0 %v5411
    %6040 = vmatprep.subr.bf16.mxu0 0
    %6041 = vmatpush2.bf16.msra.mxu0 %v5410
    %6042 = vmatprep.mubr.bf16.mxu0 %v5883
    %6043 = vmatmul.mubr.bf16.gmra.mxu0 %v5882
    %v6044 = vpop.f32.mrf.mxu0
    %v6045 = vadd.f32 %v5533, %v6044
    %v6046 = vpop.f32.mrf.mxu0
    %v6047 = vpop.f32.mrf.mxu0
    %v6048 = vadd.f32 %v5538, %v6047
    %v6049 = vpop.f32.mrf.mxu0
    %6050 = vmatprep.mubr.bf16.mxu0 %v5887
    %6051 = vmatmul.mubr.bf16.gmra.mxu0 %v5886
    %v6052 = vpop.f32.mrf.mxu0
    %v6053 = vadd.f32 %v5543, %v6052
    %v6054 = vpop.f32.mrf.mxu0
    %v6055 = vpop.f32.mrf.mxu0
    %v6056 = vadd.f32 %v5548, %v6055
    %v6057 = vpop.f32.mrf.mxu0
    %6058 = vmatprep.mubr.bf16.mxu0 %v5891
    %6059 = vmatmul.mubr.bf16.gmra.mxu0 %v5890
    %v6060 = vpop.f32.mrf.mxu0
    %v6061 = vadd.f32 %v5553, %v6060
    %v6062 = vpop.f32.mrf.mxu0
    %v6063 = vpop.f32.mrf.mxu0
    %v6064 = vadd.f32 %v5558, %v6063
    %v6065 = vpop.f32.mrf.mxu0
    %6066 = vmatprep.mubr.bf16.mxu0 %v5895
    %6067 = vmatmul.mubr.bf16.gmra.mxu0 %v5894
    %v6068 = vpop.f32.mrf.mxu0
    %v6069 = vadd.f32 %v5563, %v6068
    %v6070 = vpop.f32.mrf.mxu0
    %v6071 = vpop.f32.mrf.mxu0
    %v6072 = vadd.f32 %v5568, %v6071
    %v6073 = vpop.f32.mrf.mxu0
    %6074 = vmatprep.mubr.bf16.mxu0 %v5899
    %6075 = vmatmul.mubr.bf16.gmra.mxu0 %v5898
    %v6076 = vpop.f32.mrf.mxu0
    %v6077 = vadd.f32 %v5573, %v6076
    %v6078 = vpop.f32.mrf.mxu0
    %v6079 = vpop.f32.mrf.mxu0
    %v6080 = vadd.f32 %v5578, %v6079
    %v6081 = vpop.f32.mrf.mxu0
    %6082 = vmatprep.mubr.bf16.mxu0 %v5903
    %6083 = vmatmul.mubr.bf16.gmra.mxu0 %v5902
    %v6084 = vpop.f32.mrf.mxu0
    %v6085 = vadd.f32 %v5583, %v6084
    %v6086 = vpop.f32.mrf.mxu0
    %v6087 = vpop.f32.mrf.mxu0
    %v6088 = vadd.f32 %v5588, %v6087
    %v6089 = vpop.f32.mrf.mxu0
    %6090 = vmatprep.mubr.bf16.mxu0 %v5907
    %6091 = vmatmul.mubr.bf16.gmra.mxu0 %v5906
    %v6092 = vpop.f32.mrf.mxu0
    %v6093 = vadd.f32 %v5593, %v6092
    %v6094 = vpop.f32.mrf.mxu0
    %v6095 = vpop.f32.mrf.mxu0
    %v6096 = vadd.f32 %v5598, %v6095
    %v6097 = vpop.f32.mrf.mxu0
    %6098 = vmatprep.mubr.bf16.mxu0 %v5911
    %6099 = vmatmul.mubr.bf16.gmra.mxu0 %v5910
    %v6100 = vpop.f32.mrf.mxu0
    %v6101 = vadd.f32 %v5603, %v6100
    %v6102 = vpop.f32.mrf.mxu0
    %v6103 = vpop.f32.mrf.mxu0
    %v6104 = vadd.f32 %v5608, %v6103
    %v6105 = vpop.f32.mrf.mxu0
    %6106 = vmatprep.mubr.bf16.mxu0 %v5915
    %6107 = vmatmul.mubr.bf16.gmra.mxu0 %v5914
    %v6108 = vpop.f32.mrf.mxu0
    %v6109 = vadd.f32 %v5613, %v6108
    %v6110 = vpop.f32.mrf.mxu0
    %v6111 = vpop.f32.mrf.mxu0
    %v6112 = vadd.f32 %v5618, %v6111
    %v6113 = vpop.f32.mrf.mxu0
    %6114 = vmatprep.mubr.bf16.mxu0 %v5919
    %6115 = vmatmul.mubr.bf16.gmra.mxu0 %v5918
    %v6116 = vpop.f32.mrf.mxu0
    %v6117 = vadd.f32 %v5623, %v6116
    %v6118 = vpop.f32.mrf.mxu0
    %v6119 = vpop.f32.mrf.mxu0
    %v6120 = vadd.f32 %v5628, %v6119
    %v6121 = vpop.f32.mrf.mxu0
    %6122 = vmatprep.mubr.bf16.mxu0 %v5923
    %6123 = vmatmul.mubr.bf16.gmra.mxu0 %v5922
    %v6124 = vpop.f32.mrf.mxu0
    %v6125 = vadd.f32 %v5633, %v6124
    %v6126 = vpop.f32.mrf.mxu0
    %v6127 = vpop.f32.mrf.mxu0
    %v6128 = vadd.f32 %v5638, %v6127
    %v6129 = vpop.f32.mrf.mxu0
    %6130 = vmatprep.mubr.bf16.mxu0 %v5927
    %6131 = vmatmul.mubr.bf16.gmra.mxu0 %v5926
    %v6132 = vpop.f32.mrf.mxu0
    %v6133 = vadd.f32 %v5643, %v6132
    %v6134 = vpop.f32.mrf.mxu0
    %v6135 = vpop.f32.mrf.mxu0
    %v6136 = vadd.f32 %v5648, %v6135
    %v6137 = vpop.f32.mrf.mxu0
    %6138 = vmatprep.mubr.bf16.mxu0 %v5931
    %6139 = vmatmul.mubr.bf16.gmra.mxu0 %v5930
    %v6140 = vpop.f32.mrf.mxu0
    %v6141 = vadd.f32 %v5653, %v6140
    %v6142 = vpop.f32.mrf.mxu0
    %v6143 = vpop.f32.mrf.mxu0
    %v6144 = vadd.f32 %v5658, %v6143
    %v6145 = vpop.f32.mrf.mxu0
    %6146 = vmatprep.mubr.bf16.mxu0 %v5935
    %6147 = vmatmul.mubr.bf16.gmra.mxu0 %v5934
    %v6148 = vpop.f32.mrf.mxu0
    %v6149 = vadd.f32 %v5663, %v6148
    %v6150 = vpop.f32.mrf.mxu0
    %v6151 = vpop.f32.mrf.mxu0
    %v6152 = vadd.f32 %v5668, %v6151
    %v6153 = vpop.f32.mrf.mxu0
    %6154 = vmatprep.mubr.bf16.mxu0 %v5939
    %6155 = vmatmul.mubr.bf16.gmra.mxu0 %v5938
    %v6156 = vpop.f32.mrf.mxu0
    %v6157 = vadd.f32 %v5673, %v6156
    %v6158 = vpop.f32.mrf.mxu0
    %v6159 = vpop.f32.mrf.mxu0
    %v6160 = vadd.f32 %v5678, %v6159
    %v6161 = vpop.f32.mrf.mxu0
    %6162 = vmatprep.mubr.bf16.mxu0 %v5943
    %6163 = vmatmul.mubr.bf16.gmra.mxu0 %v5942
    %v6164 = vpop.f32.mrf.mxu0
    %v6165 = vadd.f32 %v5683, %v6164
    %v6166 = vpop.f32.mrf.mxu0
    %v6167 = vpop.f32.mrf.mxu0
    %v6168 = vadd.f32 %v5688, %v6167
    %v6169 = vpop.f32.mrf.mxu0
    %6170 = vdwg.mxu0
    %6171 = vmatprep.subr.bf16.mxu0 0
    %6172 = vmatpush1.bf16.msra.mxu0 %v5425
    %6173 = vmatprep.subr.bf16.mxu0 0
    %6174 = vmatpush1.bf16.msra.mxu0 %v5424
    %6175 = vmatprep.subr.bf16.mxu0 0
    %6176 = vmatpush1.bf16.msra.mxu0 %v5423
    %6177 = vmatprep.subr.bf16.mxu0 0
    %6178 = vmatpush1.bf16.msra.mxu0 %v5422
    %6179 = vmatprep.subr.bf16.mxu0 0
    %6180 = vmatpush1.bf16.msra.mxu0 %v5421
    %6181 = vmatprep.subr.bf16.mxu0 0
    %6182 = vmatpush1.bf16.msra.mxu0 %v5420
    %6183 = vmatprep.subr.bf16.mxu0 0
    %6184 = vmatpush1.bf16.msra.mxu0 %v5419
    %6185 = vmatprep.subr.bf16.mxu0 0
    %6186 = vmatpush1.bf16.msra.mxu0 %v5418
    %6187 = vmatprep.subr.bf16.mxu0 0
    %6188 = vmatpush2.bf16.msra.mxu0 %v5433
    %6189 = vmatprep.subr.bf16.mxu0 0
    %6190 = vmatpush2.bf16.msra.mxu0 %v5432
    %6191 = vmatprep.subr.bf16.mxu0 0
    %6192 = vmatpush2.bf16.msra.mxu0 %v5431
    %6193 = vmatprep.subr.bf16.mxu0 0
    %6194 = vmatpush2.bf16.msra.mxu0 %v5430
    %6195 = vmatprep.subr.bf16.mxu0 0
    %6196 = vmatpush2.bf16.msra.mxu0 %v5429
    %6197 = vmatprep.subr.bf16.mxu0 0
    %6198 = vmatpush2.bf16.msra.mxu0 %v5428
    %6199 = vmatprep.subr.bf16.mxu0 0
    %6200 = vmatpush2.bf16.msra.mxu0 %v5427
    %6201 = vmatprep.subr.bf16.mxu0 0
    %6202 = vmatpush2.bf16.msra.mxu0 %v5426
    %6203 = vmatprep.mubr.bf16.mxu0 %v5885
    %6204 = vmatmul.mubr.bf16.gmra.mxu0 %v5884
    %v6205 = vpop.f32.mrf.mxu0
    %v6206 = vadd.f32 %v6045, %v6205
    %v6207 = vpop.f32.mrf.mxu0
    %v6208 = vpop.f32.mrf.mxu0
    %v6209 = vadd.f32 %v6048, %v6208
    %v6210 = vpop.f32.mrf.mxu0
    %6211 = vmatprep.mubr.bf16.mxu0 %v5889
    %6212 = vmatmul.mubr.bf16.gmra.mxu0 %v5888
    %v6213 = vpop.f32.mrf.mxu0
    %v6214 = vadd.f32 %v6053, %v6213
    %v6215 = vpop.f32.mrf.mxu0
    %v6216 = vpop.f32.mrf.mxu0
    %v6217 = vadd.f32 %v6056, %v6216
    %v6218 = vpop.f32.mrf.mxu0
    %6219 = vmatprep.mubr.bf16.mxu0 %v5893
    %6220 = vmatmul.mubr.bf16.gmra.mxu0 %v5892
    %v6221 = vpop.f32.mrf.mxu0
    %v6222 = vadd.f32 %v6061, %v6221
    %v6223 = vpop.f32.mrf.mxu0
    %v6224 = vpop.f32.mrf.mxu0
    %v6225 = vadd.f32 %v6064, %v6224
    %v6226 = vpop.f32.mrf.mxu0
    %6227 = vmatprep.mubr.bf16.mxu0 %v5897
    %6228 = vmatmul.mubr.bf16.gmra.mxu0 %v5896
    %v6229 = vpop.f32.mrf.mxu0
    %v6230 = vadd.f32 %v6069, %v6229
    %v6231 = vpop.f32.mrf.mxu0
    %v6232 = vpop.f32.mrf.mxu0
    %v6233 = vadd.f32 %v6072, %v6232
    %v6234 = vpop.f32.mrf.mxu0
    %6235 = vmatprep.mubr.bf16.mxu0 %v5901
    %6236 = vmatmul.mubr.bf16.gmra.mxu0 %v5900
    %v6237 = vpop.f32.mrf.mxu0
    %v6238 = vadd.f32 %v6077, %v6237
    %v6239 = vpop.f32.mrf.mxu0
    %v6240 = vpop.f32.mrf.mxu0
    %v6241 = vadd.f32 %v6080, %v6240
    %v6242 = vpop.f32.mrf.mxu0
    %6243 = vmatprep.mubr.bf16.mxu0 %v5905
    %6244 = vmatmul.mubr.bf16.gmra.mxu0 %v5904
    %v6245 = vpop.f32.mrf.mxu0
    %v6246 = vadd.f32 %v6085, %v6245
    %v6247 = vpop.f32.mrf.mxu0
    %v6248 = vpop.f32.mrf.mxu0
    %v6249 = vadd.f32 %v6088, %v6248
    %v6250 = vpop.f32.mrf.mxu0
    %6251 = vmatprep.mubr.bf16.mxu0 %v5909
    %6252 = vmatmul.mubr.bf16.gmra.mxu0 %v5908
    %v6253 = vpop.f32.mrf.mxu0
    %v6254 = vadd.f32 %v6093, %v6253
    %v6255 = vpop.f32.mrf.mxu0
    %v6256 = vpop.f32.mrf.mxu0
    %v6257 = vadd.f32 %v6096, %v6256
    %v6258 = vpop.f32.mrf.mxu0
    %6259 = vmatprep.mubr.bf16.mxu0 %v5913
    %6260 = vmatmul.mubr.bf16.gmra.mxu0 %v5912
    %v6261 = vpop.f32.mrf.mxu0
    %v6262 = vadd.f32 %v6101, %v6261
    %v6263 = vpop.f32.mrf.mxu0
    %v6264 = vpop.f32.mrf.mxu0
    %v6265 = vadd.f32 %v6104, %v6264
    %v6266 = vpop.f32.mrf.mxu0
    %6267 = vmatprep.mubr.bf16.mxu0 %v5917
    %6268 = vmatmul.mubr.bf16.gmra.mxu0 %v5916
    %v6269 = vpop.f32.mrf.mxu0
    %v6270 = vadd.f32 %v6109, %v6269
    %v6271 = vpop.f32.mrf.mxu0
    %v6272 = vpop.f32.mrf.mxu0
    %v6273 = vadd.f32 %v6112, %v6272
    %v6274 = vpop.f32.mrf.mxu0
    %6275 = vmatprep.mubr.bf16.mxu0 %v5921
    %6276 = vmatmul.mubr.bf16.gmra.mxu0 %v5920
    %v6277 = vpop.f32.mrf.mxu0
    %v6278 = vadd.f32 %v6117, %v6277
    %v6279 = vpop.f32.mrf.mxu0
    %v6280 = vpop.f32.mrf.mxu0
    %v6281 = vadd.f32 %v6120, %v6280
    %v6282 = vpop.f32.mrf.mxu0
    %6283 = vmatprep.mubr.bf16.mxu0 %v5925
    %6284 = vmatmul.mubr.bf16.gmra.mxu0 %v5924
    %v6285 = vpop.f32.mrf.mxu0
    %v6286 = vadd.f32 %v6125, %v6285
    %v6287 = vpop.f32.mrf.mxu0
    %v6288 = vpop.f32.mrf.mxu0
    %v6289 = vadd.f32 %v6128, %v6288
    %v6290 = vpop.f32.mrf.mxu0
    %6291 = vmatprep.mubr.bf16.mxu0 %v5929
    %6292 = vmatmul.mubr.bf16.gmra.mxu0 %v5928
    %v6293 = vpop.f32.mrf.mxu0
    %v6294 = vadd.f32 %v6133, %v6293
    %v6295 = vpop.f32.mrf.mxu0
    %v6296 = vpop.f32.mrf.mxu0
    %v6297 = vadd.f32 %v6136, %v6296
    %v6298 = vpop.f32.mrf.mxu0
    %6299 = vmatprep.mubr.bf16.mxu0 %v5933
    %6300 = vmatmul.mubr.bf16.gmra.mxu0 %v5932
    %v6301 = vpop.f32.mrf.mxu0
    %v6302 = vadd.f32 %v6141, %v6301
    %v6303 = vpop.f32.mrf.mxu0
    %v6304 = vpop.f32.mrf.mxu0
    %v6305 = vadd.f32 %v6144, %v6304
    %v6306 = vpop.f32.mrf.mxu0
    %6307 = vmatprep.mubr.bf16.mxu0 %v5937
    %6308 = vmatmul.mubr.bf16.gmra.mxu0 %v5936
    %v6309 = vpop.f32.mrf.mxu0
    %v6310 = vadd.f32 %v6149, %v6309
    %v6311 = vpop.f32.mrf.mxu0
    %v6312 = vpop.f32.mrf.mxu0
    %v6313 = vadd.f32 %v6152, %v6312
    %v6314 = vpop.f32.mrf.mxu0
    %6315 = vmatprep.mubr.bf16.mxu0 %v5941
    %6316 = vmatmul.mubr.bf16.gmra.mxu0 %v5940
    %v6317 = vpop.f32.mrf.mxu0
    %v6318 = vadd.f32 %v6157, %v6317
    %v6319 = vpop.f32.mrf.mxu0
    %v6320 = vpop.f32.mrf.mxu0
    %v6321 = vadd.f32 %v6160, %v6320
    %v6322 = vpop.f32.mrf.mxu0
    %6323 = vmatprep.mubr.bf16.mxu0 %v5945
    %6324 = vmatmul.mubr.bf16.gmra.mxu0 %v5944
    %v6325 = vpop.f32.mrf.mxu0
    %v6326 = vadd.f32 %v6165, %v6325
    %v6327 = vpop.f32.mrf.mxu0
    %v6328 = vpop.f32.mrf.mxu0
    %v6329 = vadd.f32 %v6168, %v6328
    %v6330 = vpop.f32.mrf.mxu0
    %6331 = vdwg.mxu0
    %v6332 = vmax.f32 %v6206, 0.0
    %v6333 = vmax.f32 %v6209, 0.0
    %v6334 = vmax.f32 %v6214, 0.0
    %v6335 = vmax.f32 %v6217, 0.0
    %v6336 = vmax.f32 %v6222, 0.0
    %v6337 = vmax.f32 %v6225, 0.0
    %v6338 = vmax.f32 %v6230, 0.0
    %v6339 = vmax.f32 %v6233, 0.0
    %v6340 = vmax.f32 %v6238, 0.0
    %v6341 = vmax.f32 %v6241, 0.0
    %v6342 = vmax.f32 %v6246, 0.0
    %v6343 = vmax.f32 %v6249, 0.0
    %v6344 = vmax.f32 %v6254, 0.0
    %v6345 = vmax.f32 %v6257, 0.0
    %v6346 = vmax.f32 %v6262, 0.0
    %v6347 = vmax.f32 %v6265, 0.0
    %v6348 = vmax.f32 %v6270, 0.0
    %v6349 = vmax.f32 %v6273, 0.0
    %v6350 = vmax.f32 %v6278, 0.0
    %v6351 = vmax.f32 %v6281, 0.0
    %v6352 = vmax.f32 %v6286, 0.0
    %v6353 = vmax.f32 %v6289, 0.0
    %v6354 = vmax.f32 %v6294, 0.0
    %v6355 = vmax.f32 %v6297, 0.0
    %v6356 = vmax.f32 %v6302, 0.0
    %v6357 = vmax.f32 %v6305, 0.0
    %v6358 = vmax.f32 %v6310, 0.0
    %v6359 = vmax.f32 %v6313, 0.0
    %v6360 = vmax.f32 %v6318, 0.0
    %v6361 = vmax.f32 %v6321, 0.0
    %v6362 = vmax.f32 %v6326, 0.0
    %v6363 = vmax.f32 %v6329, 0.0
    %v6364 = vld [vmem:[%s7] sm:$0xf]
    %v6365 = vld [vmem:[%s7 + $0x4] sm:$0xf]
    %v6366 = vld [vmem:[%s7 + $0x8] sm:$0xf]
    %v6367 = vld [vmem:[%s7 + $0xc] sm:$0xf]
    %v6368 = vld [vmem:[%s7 + $0x10] sm:$0xf]
    %v6369 = vld [vmem:[%s7 + $0x14] sm:$0xf]
    %v6370 = vld [vmem:[%s7 + $0x18] sm:$0xf]
    %v6371 = vld [vmem:[%s7 + $0x1c] sm:$0xf]
    %v6372 = vld [vmem:[%s7 + $0x20] sm:$0xf]
    %v6373 = vld [vmem:[%s7 + $0x24] sm:$0xf]
    %v6374 = vld [vmem:[%s7 + $0x28] sm:$0xf]
    %v6375 = vld [vmem:[%s7 + $0x2c] sm:$0xf]
    %v6376 = vld [vmem:[%s7 + $0x30] sm:$0xf]
    %v6377 = vld [vmem:[%s7 + $0x34] sm:$0xf]
    %v6378 = vld [vmem:[%s7 + $0x38] sm:$0xf]
    %v6379 = vld [vmem:[%s7 + $0x3c] sm:$0xf]
    %v6380 = vld [vmem:[%s7 + $0x40] sm:$0xf]
    %v6381 = vld [vmem:[%s7 + $0x44] sm:$0xf]
    %v6382 = vld [vmem:[%s7 + $0x48] sm:$0xf]
    %v6383 = vld [vmem:[%s7 + $0x4c] sm:$0xf]
    %v6384 = vld [vmem:[%s7 + $0x50] sm:$0xf]
    %v6385 = vld [vmem:[%s7 + $0x54] sm:$0xf]
    %v6386 = vld [vmem:[%s7 + $0x58] sm:$0xf]
    %v6387 = vld [vmem:[%s7 + $0x5c] sm:$0xf]
    %v6388 = vld [vmem:[%s7 + $0x60] sm:$0xf]
    %v6389 = vld [vmem:[%s7 + $0x64] sm:$0xf]
    %v6390 = vld [vmem:[%s7 + $0x68] sm:$0xf]
    %v6391 = vld [vmem:[%s7 + $0x6c] sm:$0xf]
    %v6392 = vld [vmem:[%s7 + $0x70] sm:$0xf]
    %v6393 = vld [vmem:[%s7 + $0x74] sm:$0xf]
    %v6394 = vld [vmem:[%s7 + $0x78] sm:$0xf]
    %v6395 = vld [vmem:[%s7 + $0x7c] sm:$0xf]
    %v6396 = vunpack.c.l.bf16 %v6364
    %v6397 = vunpack.c.l.bf16 %v6365
    %v6398 = vunpack.c.l.bf16 %v6366
    %v6399 = vunpack.c.l.bf16 %v6367
    %v6400 = vunpack.c.l.bf16 %v6368
    %v6401 = vunpack.c.l.bf16 %v6369
    %v6402 = vunpack.c.l.bf16 %v6370
    %v6403 = vunpack.c.l.bf16 %v6371
    %v6404 = vunpack.c.l.bf16 %v6372
    %v6405 = vunpack.c.l.bf16 %v6373
    %v6406 = vunpack.c.l.bf16 %v6374
    %v6407 = vunpack.c.l.bf16 %v6375
    %v6408 = vunpack.c.l.bf16 %v6376
    %v6409 = vunpack.c.l.bf16 %v6377
    %v6410 = vunpack.c.l.bf16 %v6378
    %v6411 = vunpack.c.l.bf16 %v6379
    %v6412 = vunpack.c.l.bf16 %v6380
    %v6413 = vunpack.c.l.bf16 %v6381
    %v6414 = vunpack.c.l.bf16 %v6382
    %v6415 = vunpack.c.l.bf16 %v6383
    %v6416 = vunpack.c.l.bf16 %v6384
    %v6417 = vunpack.c.l.bf16 %v6385
    %v6418 = vunpack.c.l.bf16 %v6386
    %v6419 = vunpack.c.l.bf16 %v6387
    %v6420 = vunpack.c.l.bf16 %v6388
    %v6421 = vunpack.c.l.bf16 %v6389
    %v6422 = vunpack.c.l.bf16 %v6390
    %v6423 = vunpack.c.l.bf16 %v6391
    %v6424 = vunpack.c.l.bf16 %v6392
    %v6425 = vunpack.c.l.bf16 %v6393
    %v6426 = vunpack.c.l.bf16 %v6394
    %v6427 = vunpack.c.l.bf16 %v6395
    %6429 = vset.pattern.permute.xlu0 0
    %6430 = vperm.xlu0 %6429, %v6396
    %v6431 = vpop.permute.xlu0 %6430
    %6434 = vset.pattern.permute.xlu0 0
    %6435 = vperm.xlu0 %6434, %v6397
    %v6436 = vpop.permute.xlu0 %6435
    %6439 = vset.pattern.permute.xlu0 0
    %6440 = vperm.xlu0 %6439, %v6398
    %v6441 = vpop.permute.xlu0 %6440
    %6444 = vset.pattern.permute.xlu0 0
    %6445 = vperm.xlu0 %6444, %v6399
    %v6446 = vpop.permute.xlu0 %6445
    %6449 = vset.pattern.permute.xlu0 0
    %6450 = vperm.xlu0 %6449, %v6400
    %v6451 = vpop.permute.xlu0 %6450
    %6454 = vset.pattern.permute.xlu0 0
    %6455 = vperm.xlu0 %6454, %v6401
    %v6456 = vpop.permute.xlu0 %6455
    %6459 = vset.pattern.permute.xlu0 0
    %6460 = vperm.xlu0 %6459, %v6402
    %v6461 = vpop.permute.xlu0 %6460
    %6464 = vset.pattern.permute.xlu0 0
    %6465 = vperm.xlu0 %6464, %v6403
    %v6466 = vpop.permute.xlu0 %6465
    %6469 = vset.pattern.permute.xlu0 0
    %6470 = vperm.xlu0 %6469, %v6404
    %v6471 = vpop.permute.xlu0 %6470
    %6474 = vset.pattern.permute.xlu0 0
    %6475 = vperm.xlu0 %6474, %v6405
    %v6476 = vpop.permute.xlu0 %6475
    %6479 = vset.pattern.permute.xlu0 0
    %6480 = vperm.xlu0 %6479, %v6406
    %v6481 = vpop.permute.xlu0 %6480
    %6484 = vset.pattern.permute.xlu0 0
    %6485 = vperm.xlu0 %6484, %v6407
    %v6486 = vpop.permute.xlu0 %6485
    %6489 = vset.pattern.permute.xlu0 0
    %6490 = vperm.xlu0 %6489, %v6408
    %v6491 = vpop.permute.xlu0 %6490
    %6494 = vset.pattern.permute.xlu0 0
    %6495 = vperm.xlu0 %6494, %v6409
    %v6496 = vpop.permute.xlu0 %6495
    %6499 = vset.pattern.permute.xlu0 0
    %6500 = vperm.xlu0 %6499, %v6410
    %v6501 = vpop.permute.xlu0 %6500
    %6504 = vset.pattern.permute.xlu0 0
    %6505 = vperm.xlu0 %6504, %v6411
    %v6506 = vpop.permute.xlu0 %6505
    %6509 = vset.pattern.permute.xlu0 0
    %6510 = vperm.xlu0 %6509, %v6412
    %v6511 = vpop.permute.xlu0 %6510
    %6514 = vset.pattern.permute.xlu0 0
    %6515 = vperm.xlu0 %6514, %v6413
    %v6516 = vpop.permute.xlu0 %6515
    %6519 = vset.pattern.permute.xlu0 0
    %6520 = vperm.xlu0 %6519, %v6414
    %v6521 = vpop.permute.xlu0 %6520
    %6524 = vset.pattern.permute.xlu0 0
    %6525 = vperm.xlu0 %6524, %v6415
    %v6526 = vpop.permute.xlu0 %6525
    %6529 = vset.pattern.permute.xlu0 0
    %6530 = vperm.xlu0 %6529, %v6416
    %v6531 = vpop.permute.xlu0 %6530
    %6534 = vset.pattern.permute.xlu0 0
    %6535 = vperm.xlu0 %6534, %v6417
    %v6536 = vpop.permute.xlu0 %6535
    %6539 = vset.pattern.permute.xlu0 0
    %6540 = vperm.xlu0 %6539, %v6418
    %v6541 = vpop.permute.xlu0 %6540
    %6544 = vset.pattern.permute.xlu0 0
    %6545 = vperm.xlu0 %6544, %v6419
    %v6546 = vpop.permute.xlu0 %6545
    %6549 = vset.pattern.permute.xlu0 0
    %6550 = vperm.xlu0 %6549, %v6420
    %v6551 = vpop.permute.xlu0 %6550
    %6554 = vset.pattern.permute.xlu0 0
    %6555 = vperm.xlu0 %6554, %v6421
    %v6556 = vpop.permute.xlu0 %6555
    %6559 = vset.pattern.permute.xlu0 0
    %6560 = vperm.xlu0 %6559, %v6422
    %v6561 = vpop.permute.xlu0 %6560
    %6564 = vset.pattern.permute.xlu0 0
    %6565 = vperm.xlu0 %6564, %v6423
    %v6566 = vpop.permute.xlu0 %6565
    %6569 = vset.pattern.permute.xlu0 0
    %6570 = vperm.xlu0 %6569, %v6424
    %v6571 = vpop.permute.xlu0 %6570
    %6574 = vset.pattern.permute.xlu0 0
    %6575 = vperm.xlu0 %6574, %v6425
    %v6576 = vpop.permute.xlu0 %6575
    %6579 = vset.pattern.permute.xlu0 0
    %6580 = vperm.xlu0 %6579, %v6426
    %v6581 = vpop.permute.xlu0 %6580
    %6584 = vset.pattern.permute.xlu0 0
    %6585 = vperm.xlu0 %6584, %v6427
    %v6586 = vpop.permute.xlu0 %6585
    %v6588 = vmul.f32 %v6332, %v6431
    %v6589 = vmul.f32 %v6333, %v6436
    %v6590 = vmul.f32 %v6334, %v6441
    %v6591 = vmul.f32 %v6335, %v6446
    %v6592 = vmul.f32 %v6336, %v6451
    %v6593 = vmul.f32 %v6337, %v6456
    %v6594 = vmul.f32 %v6338, %v6461
    %v6595 = vmul.f32 %v6339, %v6466
    %v6596 = vmul.f32 %v6340, %v6471
    %v6597 = vmul.f32 %v6341, %v6476
    %v6598 = vmul.f32 %v6342, %v6481
    %v6599 = vmul.f32 %v6343, %v6486
    %v6600 = vmul.f32 %v6344, %v6491
    %v6601 = vmul.f32 %v6345, %v6496
    %v6602 = vmul.f32 %v6346, %v6501
    %v6603 = vmul.f32 %v6347, %v6506
    %v6604 = vmul.f32 %v6348, %v6511
    %v6605 = vmul.f32 %v6349, %v6516
    %v6606 = vmul.f32 %v6350, %v6521
    %v6607 = vmul.f32 %v6351, %v6526
    %v6608 = vmul.f32 %v6352, %v6531
    %v6609 = vmul.f32 %v6353, %v6536
    %v6610 = vmul.f32 %v6354, %v6541
    %v6611 = vmul.f32 %v6355, %v6546
    %v6612 = vmul.f32 %v6356, %v6551
    %v6613 = vmul.f32 %v6357, %v6556
    %v6614 = vmul.f32 %v6358, %v6561
    %v6615 = vmul.f32 %v6359, %v6566
    %v6616 = vmul.f32 %v6360, %v6571
    %v6617 = vmul.f32 %v6361, %v6576
    %v6618 = vmul.f32 %v6362, %v6581
    %v6619 = vmul.f32 %v6363, %v6586
    %v6620 = vadd.f32 %v6588, %v6589
    %v6621 = vadd.f32 %v6620, %v6590
    %v6622 = vadd.f32 %v6621, %v6591
    %v6623 = vadd.f32 %v6622, %v6592
    %v6624 = vadd.f32 %v6623, %v6593
    %v6625 = vadd.f32 %v6624, %v6594
    %v6626 = vadd.f32 %v6625, %v6595
    %v6627 = vadd.f32 %v6626, %v6596
    %v6628 = vadd.f32 %v6627, %v6597
    %v6629 = vadd.f32 %v6628, %v6598
    %v6630 = vadd.f32 %v6629, %v6599
    %v6631 = vadd.f32 %v6630, %v6600
    %v6632 = vadd.f32 %v6631, %v6601
    %v6633 = vadd.f32 %v6632, %v6602
    %v6634 = vadd.f32 %v6633, %v6603
    %v6635 = vadd.f32 %v6634, %v6604
    %v6636 = vadd.f32 %v6635, %v6605
    %v6637 = vadd.f32 %v6636, %v6606
    %v6638 = vadd.f32 %v6637, %v6607
    %v6639 = vadd.f32 %v6638, %v6608
    %v6640 = vadd.f32 %v6639, %v6609
    %v6641 = vadd.f32 %v6640, %v6610
    %v6642 = vadd.f32 %v6641, %v6611
    %v6643 = vadd.f32 %v6642, %v6612
    %v6644 = vadd.f32 %v6643, %v6613
    %v6645 = vadd.f32 %v6644, %v6614
    %v6646 = vadd.f32 %v6645, %v6615
    %v6647 = vadd.f32 %v6646, %v6616
    %v6648 = vadd.f32 %v6647, %v6617
    %v6649 = vadd.f32 %v6648, %v6618
    %v6650 = vadd.f32 %v6649, %v6619
    %v6651 = vrot.slane %v6650, 4
    %v6652 = vadd.f32 %v6650, %v6651
    %v6653 = vrot.slane %v6652, 2
    %v6654 = vadd.f32 %v6652, %v6653
    %v6655 = vrot.slane %v6654, 1
    %v6656 = vadd.f32 %v6654, %v6655
    %v6657 = vld [vmem:[#allocation2] sm:$0x1]
    %6659 = vset.pattern.permute.xlu0 0
    %6660 = vperm.xlu0 %6659, %v6657
    %v6661 = vpop.permute.xlu0 %6660
    %v6663 = vlaneseq
    %v6664 = vshrl.u32 %v6663, 7
    %v6665 = vsub.s32 0, %v6664
    %v6666 = vrot.slane %v6661, %v6665
    %v6667 = vadd.f32 %v6656, %v6666
    %6668 = vst [vmem:[#allocation3] sm:$0x1] %v6667
    // Predicated region
    $region38: #{tpu_custom_call.1} parent=1 // pred_check
      _
    $region39: #{tpu_custom_call.1} parent=1 // pred_check_branch
      %6670 = sbr.rel (0) target = $region41
    $region40: #{tpu_custom_call.1} parent=1 // pred_region
      %s6672 = ssub.s32 16, 16
      %6673 = vsyncadd [#allocation4], %s6672
      %s6675 = sshll.u32 [#allocation3], 4
      %s6676 = int_to_ptr.vmem [resolvable:$true] %s6675
      %6678 = dma.vmem_to_hbm [thread:$0]  %s6676, 16, %s9, [#allocation4]
    $region41: #{tpu_custom_call.1} parent=1 // pred_fallthru
      _
    // Predicated region
    $region42: #{tpu_custom_call.1} parent=1 // pred_check
      _
    $region43: #{tpu_custom_call.1} parent=1 // pred_check_branch
      %6680 = sbr.rel (0) target = $region45
    $region44: #{tpu_custom_call.1} parent=1 // pred_region
      %6681 = dma.done [#allocation4], 16
    $region45: #{tpu_custom_call.1} parent=1 // pred_fallthru
      _
    %6682 = vsyncpa [#allocation4], 1

</llo_original>
